<compile_context>
chip_gen: v7x
topology: tpu7x:2x2x1
jax: 0.10.0
libtpu: 0.0.40
codegen_flags: <defaults>
</compile_context>

<pallas_src>
import functools

import jax
import jax.numpy as jnp
from jax.experimental import pallas as pl
from jax.experimental.pallas import tpu as pltpu

GRU_DIM = 100          # real hidden width (PyTorch gru_dim)
HP = 128               # lane-padded hidden width
EPS = 1e-5


def _predictor_kernel(x_ref,
                      e_wih, e_whh, e_lw, e_lb,
                      d_wih, d_whh, d_lw, d_lb,
                      out_ref, hseq_ref, *, T, B):
    """Whole forward pass in one kernel (tiny shapes -> everything resident in VMEM)."""
    lane = jax.lax.broadcasted_iota(jnp.int32, (1, HP), 1)
    feat_mask = (lane < GRU_DIM).astype(jnp.float32)      # 1 for the 100 real features
    inv_h = jnp.float32(1.0 / GRU_DIM)

    def run_gru(in_slab, w_ih, w_hh):
        # in_slab: (T*B, Din) time-major rows (row = t*B + b)
        # Hoisted input projection: one big matmul, off the serial chain.
        gi = jnp.dot(in_slab, w_ih, preferred_element_type=jnp.float32)   # (T*B, 3*HP)
        h = jnp.zeros((B, HP), jnp.float32)                               # carried in regs
        for t in range(T):                                                # static unroll
            gi_t = gi[t * B:(t + 1) * B, :]                               # (B, 3*HP)
            gh = jnp.dot(h, w_hh, preferred_element_type=jnp.float32)     # (B, 3*HP)
            r = jax.nn.sigmoid(gi_t[:, 0:HP] + gh[:, 0:HP])
            z = jax.nn.sigmoid(gi_t[:, HP:2 * HP] + gh[:, HP:2 * HP])
            n = jnp.tanh(gi_t[:, 2 * HP:3 * HP] + r * gh[:, 2 * HP:3 * HP])
            h = (1.0 - z) * n + z * h
            # Padded lanes stay exactly 0: zero weight cols -> pre-act 0 -> z=0.5, n=0.
            hseq_ref[pl.ds(t * B, B), :] = h
        return hseq_ref[...]                                              # (T*B, HP)

    def instance_norm(hslab):
        # Normalize over the 100 real features per row; padded lanes masked out.
        mu = jnp.sum(hslab, axis=-1, keepdims=True) * inv_h               # pads are 0
        c = (hslab - mu) * feat_mask
        var = jnp.sum(c * c, axis=-1, keepdims=True) * inv_h
        return c * jax.lax.rsqrt(var + EPS)

    # ---- encoder: GRU -> InstanceNorm -> Linear ----
    h_e = run_gru(x_ref[...], e_wih[...], e_whh[...])
    z_slab = jnp.dot(instance_norm(h_e), e_lw[...],
                     preferred_element_type=jnp.float32) + e_lb[...]      # (T*B, z_dim)

    # ---- decoder: GRU -> InstanceNorm -> Linear ----
    h_d = run_gru(z_slab, d_wih[...], d_whh[...])
    out_ref[...] = (jnp.dot(instance_norm(h_d), d_lw[...],
                            preferred_element_type=jnp.float32)
                    + d_lb[...]).astype(out_ref.dtype)                    # (T*B, xp)


def _fuse_pad_gru(w_ih, w_hh, hidden=GRU_DIM, hp=HP):
    """Split PyTorch stacked GRU weights [r;z;n], transpose to (in, out), fuse the three
    gates along the output axis, and zero-pad the hidden width to `hp`."""
    pad = hp - hidden
    ih_blocks = [jnp.pad(w_ih[i * hidden:(i + 1) * hidden].T, ((0, 0), (0, pad)))
                 for i in range(3)]                                   # each (Din, hp)
    hh_blocks = [jnp.pad(w_hh[i * hidden:(i + 1) * hidden].T, ((0, pad), (0, pad)))
                 for i in range(3)]                                   # each (hp, hp)
    return jnp.concatenate(ih_blocks, axis=1), jnp.concatenate(hh_blocks, axis=1)


@jax.jit
def predictor_forward(x, params):
    """x: (B, T, x_dim) float32 -> (B, T, x_dim) float32 (same as the PyTorch module)."""
    B, T, x_dim = x.shape
    z_dim = params["enc_lin_w"].shape[0]
    xp = ((x_dim + 127) // 128) * 128          # lane-dense output width

    # ---- glue: fuse/pad weights, flatten the sequence to a time-major slab ----
    e_wih, e_whh = _fuse_pad_gru(params["enc_w_ih"], params["enc_w_hh"])
    d_wih, d_whh = _fuse_pad_gru(params["dec_w_ih"], params["dec_w_hh"])
    e_lw = jnp.pad(params["enc_lin_w"].T, ((0, HP - GRU_DIM), (0, 0)))            # (HP, z_dim)
    e_lb = params["enc_lin_b"].reshape(1, z_dim)
    d_lw = jnp.pad(params["dec_lin_w"].T, ((0, HP - GRU_DIM), (0, xp - x_dim)))   # (HP, xp)
    d_lb = jnp.pad(params["dec_lin_b"], ((0, xp - x_dim),)).reshape(1, xp)

    x_slab = jnp.swapaxes(x, 0, 1).reshape(T * B, x_dim)   # row = t*B + b

    vmem = pl.BlockSpec(memory_space=pltpu.MemorySpace.VMEM)
    kernel = functools.partial(_predictor_kernel, T=T, B=B)
    out_slab = pl.pallas_call(
        kernel,
        out_shape=jax.ShapeDtypeStruct((T * B, xp), jnp.float32),
        in_specs=[vmem] * 9,
        out_specs=vmem,
        scratch_shapes=[pltpu.VMEM((T * B, HP), jnp.float32)],   # GRU output slab (reused)
    )(x_slab, e_wih, e_whh, e_lw, e_lb, d_wih, d_whh, d_lw, d_lb)

    out_tm = out_slab[:, :x_dim].reshape(T, B, x_dim)
    return jnp.swapaxes(out_tm, 0, 1)                      # back to (B, T, x_dim)


# ---------------- deterministic parameter init (PyTorch-style shapes) ----------------
def init_params(key, x_dim, z_dim, hidden=GRU_DIM):
    ks = jax.random.split(key, 8)
    kg = 1.0 / jnp.sqrt(jnp.float32(hidden))

    def u(kk, shape, bound):
        return jax.random.uniform(kk, shape, jnp.float32, -bound, bound)

    return {
        "enc_w_ih": u(ks[0], (3 * hidden, x_dim), kg),
        "enc_w_hh": u(ks[1], (3 * hidden, hidden), kg),
        "enc_lin_w": u(ks[2], (z_dim, hidden), kg),
        "enc_lin_b": u(ks[3], (z_dim,), kg),
        "dec_w_ih": u(ks[4], (3 * hidden, z_dim), kg),
        "dec_w_hh": u(ks[5], (3 * hidden, hidden), kg),
        "dec_lin_w": u(ks[6], (x_dim, hidden), kg),
        "dec_lin_b": u(ks[7], (x_dim,), kg),
    }


# ---------------- pure-JAX reference (mirrors PyTorch semantics) ----------------
def _gru_ref(x, w_ih, w_hh, hidden):
    def step(h, x_t):
        gi = x_t @ w_ih.T
        gh = h @ w_hh.T
        r = jax.nn.sigmoid(gi[:, :hidden] + gh[:, :hidden])
        z = jax.nn.sigmoid(gi[:, hidden:2 * hidden] + gh[:, hidden:2 * hidden])
        n = jnp.tanh(gi[:, 2 * hidden:] + r * gh[:, 2 * hidden:])
        h_new = (1.0 - z) * n + z * h
        return h_new, h_new

    h0 = jnp.zeros((x.shape[0], hidden), x.dtype)
    _, hs = jax.lax.scan(step, h0, jnp.swapaxes(x, 0, 1))
    return jnp.swapaxes(hs, 0, 1)


def _inorm_ref(h):
    mu = jnp.mean(h, axis=-1, keepdims=True)
    var = jnp.mean(jnp.square(h - mu), axis=-1, keepdims=True)
    return (h - mu) / jnp.sqrt(var + EPS)


def predictor_ref(x, p):
    h = _gru_ref(x, p["enc_w_ih"], p["enc_w_hh"], GRU_DIM)
    z = _inorm_ref(h) @ p["enc_lin_w"].T + p["enc_lin_b"]
    h = _gru_ref(z, p["dec_w_ih"], p["dec_w_hh"], GRU_DIM)
    return _inorm_ref(h) @ p["dec_lin_w"].T + p["dec_lin_b"]


if __name__ == "__main__":
    key = jax.random.PRNGKey(0)
    k_x, k_p = jax.random.split(key)

    B, T, X_DIM, Z_DIM = 2, 8, 16, 8
    x = jax.random.normal(k_x, (B, T, X_DIM), jnp.float32)
    params = init_params(k_p, X_DIM, Z_DIM)

    out = predictor_forward(x, params)
    out = jax.block_until_ready(out)

    ref = predictor_ref(x, params)
    assert out.shape == (B, T, X_DIM), out.shape
    max_err = float(jnp.max(jnp.abs(out - ref)))
    assert max_err < 3e-2, f"mismatch vs reference: {max_err}"

    print("KERNEL_OK")
</pallas_src>

<mosaic_0001>
module attributes {stable_mosaic.version = 11 : i64} {
  func.func @_predictor_kernel(%arg0: memref<16x16xf32, #tpu.memory_space<vmem>>, %arg1: memref<16x384xf32, #tpu.memory_space<vmem>>, %arg2: memref<128x384xf32, #tpu.memory_space<vmem>>, %arg3: memref<128x8xf32, #tpu.memory_space<vmem>>, %arg4: memref<1x8xf32, #tpu.memory_space<vmem>>, %arg5: memref<8x384xf32, #tpu.memory_space<vmem>>, %arg6: memref<128x384xf32, #tpu.memory_space<vmem>>, %arg7: memref<128x128xf32, #tpu.memory_space<vmem>>, %arg8: memref<1x128xf32, #tpu.memory_space<vmem>>, %arg9: memref<16x128xf32, #tpu.memory_space<vmem>>, %arg10: memref<16x128xf32, #tpu.memory_space<vmem>>) attributes {dimension_semantics = [], scalar_prefetch = 0 : i64, scratch_operands = 1 : i64, tpu.core_type = #tpu.core_type<tc>} {
    %0 = tpu.iota {dimensions = array<i32: 1>} : vector<1x128xi32>
    %c100_i32 = arith.constant 100 : i32
    %1 = vector.broadcast %c100_i32 : i32 to vector<1x128xi32>
    %2 = arith.cmpi slt, %0, %1 : vector<1x128xi32>
    %3 = arith.extui %2 : vector<1x128xi1> to vector<1x128xi32>
    %4 = arith.sitofp %3 : vector<1x128xi32> to vector<1x128xf32>
    %c0 = arith.constant 0 : index
    %c0_0 = arith.constant 0 : index
    %5 = vector.load %arg0[%c0, %c0_0] : memref<16x16xf32, #tpu.memory_space<vmem>>, vector<16x16xf32>
    %c0_1 = arith.constant 0 : index
    %c0_2 = arith.constant 0 : index
    %6 = vector.load %arg1[%c0_1, %c0_2] : memref<16x384xf32, #tpu.memory_space<vmem>>, vector<16x384xf32>
    %c0_3 = arith.constant 0 : index
    %c0_4 = arith.constant 0 : index
    %7 = vector.load %arg2[%c0_3, %c0_4] : memref<128x384xf32, #tpu.memory_space<vmem>>, vector<128x384xf32>
    %cst = arith.constant dense<0.000000e+00> : vector<16x384xf32>
    %8 = tpu.matmul %5, %6, %cst {dimension_numbers = #tpu.dot_dimension_numbers<[1], [0], [0], [1], [0, 0, 1, 1], [], []>} : vector<16x16xf32>, vector<16x384xf32>, vector<16x384xf32> -> vector<16x384xf32>
    %cst_5 = arith.constant 0.000000e+00 : f32
    %9 = vector.broadcast %cst_5 : f32 to vector<2x128xf32>
    %10 = vector.extract_strided_slice %8 {offsets = [0, 0], sizes = [2, 384], strides = [1, 1]} : vector<16x384xf32> to vector<2x384xf32>
    %cst_6 = arith.constant dense<0.000000e+00> : vector<2x384xf32>
    %11 = tpu.matmul %9, %7, %cst_6 {dimension_numbers = #tpu.dot_dimension_numbers<[1], [0], [0], [1], [0, 0, 1, 1], [], []>} : vector<2x128xf32>, vector<128x384xf32>, vector<2x384xf32> -> vector<2x384xf32>
    %12 = vector.extract_strided_slice %10 {offsets = [0, 0], sizes = [2, 128], strides = [1, 1]} : vector<2x384xf32> to vector<2x128xf32>
    %13 = vector.extract_strided_slice %11 {offsets = [0, 0], sizes = [2, 128], strides = [1, 1]} : vector<2x384xf32> to vector<2x128xf32>
    %14 = arith.addf %12, %13 : vector<2x128xf32>
    %15 = arith.negf %14 : vector<2x128xf32>
    %16 = math.exp %15 : vector<2x128xf32>
    %cst_7 = arith.constant 1.000000e+00 : f32
    %17 = vector.broadcast %cst_7 : f32 to vector<2x128xf32>
    %18 = arith.addf %17, %16 : vector<2x128xf32>
    %19 = arith.divf %17, %18 : vector<2x128xf32>
    %20 = vector.extract_strided_slice %10 {offsets = [0, 128], sizes = [2, 128], strides = [1, 1]} : vector<2x384xf32> to vector<2x128xf32>
    %21 = vector.extract_strided_slice %11 {offsets = [0, 128], sizes = [2, 128], strides = [1, 1]} : vector<2x384xf32> to vector<2x128xf32>
    %22 = arith.addf %20, %21 : vector<2x128xf32>
    %23 = arith.negf %22 : vector<2x128xf32>
    %24 = math.exp %23 : vector<2x128xf32>
    %cst_8 = arith.constant 1.000000e+00 : f32
    %25 = vector.broadcast %cst_8 : f32 to vector<2x128xf32>
    %26 = arith.addf %25, %24 : vector<2x128xf32>
    %27 = arith.divf %25, %26 : vector<2x128xf32>
    %28 = vector.extract_strided_slice %10 {offsets = [0, 256], sizes = [2, 128], strides = [1, 1]} : vector<2x384xf32> to vector<2x128xf32>
    %29 = vector.extract_strided_slice %11 {offsets = [0, 256], sizes = [2, 128], strides = [1, 1]} : vector<2x384xf32> to vector<2x128xf32>
    %30 = arith.mulf %19, %29 : vector<2x128xf32>
    %31 = arith.addf %28, %30 : vector<2x128xf32>
    %32 = math.tanh %31 : vector<2x128xf32>
    %cst_9 = arith.constant 1.000000e+00 : f32
    %33 = vector.broadcast %cst_9 : f32 to vector<2x128xf32>
    %34 = arith.subf %33, %27 : vector<2x128xf32>
    %35 = arith.mulf %34, %32 : vector<2x128xf32>
    %36 = arith.mulf %27, %9 : vector<2x128xf32>
    %37 = arith.addf %35, %36 : vector<2x128xf32>
    %c0_10 = arith.constant 0 : index
    %c0_11 = arith.constant 0 : index
    %38 = vector.load %arg10[%c0_10, %c0_11] : memref<16x128xf32, #tpu.memory_space<vmem>>, vector<2x128xf32>
    tpu.vector_store %arg10[%c0_10, %c0_11], %37 {strides = array<i32>} : memref<16x128xf32, #tpu.memory_space<vmem>>, vector<2x128xf32>,
    %39 = vector.extract_strided_slice %8 {offsets = [2, 0], sizes = [2, 384], strides = [1, 1]} : vector<16x384xf32> to vector<2x384xf32>
    %cst_12 = arith.constant dense<0.000000e+00> : vector<2x384xf32>
    %40 = tpu.matmul %37, %7, %cst_12 {dimension_numbers = #tpu.dot_dimension_numbers<[1], [0], [0], [1], [0, 0, 1, 1], [], []>} : vector<2x128xf32>, vector<128x384xf32>, vector<2x384xf32> -> vector<2x384xf32>
    %41 = vector.extract_strided_slice %39 {offsets = [0, 0], sizes = [2, 128], strides = [1, 1]} : vector<2x384xf32> to vector<2x128xf32>
    %42 = vector.extract_strided_slice %40 {offsets = [0, 0], sizes = [2, 128], strides = [1, 1]} : vector<2x384xf32> to vector<2x128xf32>
    %43 = arith.addf %41, %42 : vector<2x128xf32>
    %44 = arith.negf %43 : vector<2x128xf32>
    %45 = math.exp %44 : vector<2x128xf32>
    %cst_13 = arith.constant 1.000000e+00 : f32
    %46 = vector.broadcast %cst_13 : f32 to vector<2x128xf32>
    %47 = arith.addf %46, %45 : vector<2x128xf32>
    %48 = arith.divf %46, %47 : vector<2x128xf32>
    %49 = vector.extract_strided_slice %39 {offsets = [0, 128], sizes = [2, 128], strides = [1, 1]} : vector<2x384xf32> to vector<2x128xf32>
    %50 = vector.extract_strided_slice %40 {offsets = [0, 128], sizes = [2, 128], strides = [1, 1]} : vector<2x384xf32> to vector<2x128xf32>
    %51 = arith.addf %49, %50 : vector<2x128xf32>
    %52 = arith.negf %51 : vector<2x128xf32>
    %53 = math.exp %52 : vector<2x128xf32>
    %cst_14 = arith.constant 1.000000e+00 : f32
    %54 = vector.broadcast %cst_14 : f32 to vector<2x128xf32>
    %55 = arith.addf %54, %53 : vector<2x128xf32>
    %56 = arith.divf %54, %55 : vector<2x128xf32>
    %57 = vector.extract_strided_slice %39 {offsets = [0, 256], sizes = [2, 128], strides = [1, 1]} : vector<2x384xf32> to vector<2x128xf32>
    %58 = vector.extract_strided_slice %40 {offsets = [0, 256], sizes = [2, 128], strides = [1, 1]} : vector<2x384xf32> to vector<2x128xf32>
    %59 = arith.mulf %48, %58 : vector<2x128xf32>
    %60 = arith.addf %57, %59 : vector<2x128xf32>
    %61 = math.tanh %60 : vector<2x128xf32>
    %cst_15 = arith.constant 1.000000e+00 : f32
    %62 = vector.broadcast %cst_15 : f32 to vector<2x128xf32>
    %63 = arith.subf %62, %56 : vector<2x128xf32>
    %64 = arith.mulf %63, %61 : vector<2x128xf32>
    %65 = arith.mulf %56, %37 : vector<2x128xf32>
    %66 = arith.addf %64, %65 : vector<2x128xf32>
    %c2 = arith.constant 2 : index
    %c0_16 = arith.constant 0 : index
    %67 = vector.load %arg10[%c2, %c0_16] : memref<16x128xf32, #tpu.memory_space<vmem>>, vector<2x128xf32>
    tpu.vector_store %arg10[%c2, %c0_16], %66 {strides = array<i32>} : memref<16x128xf32, #tpu.memory_space<vmem>>, vector<2x128xf32>,
    %68 = vector.extract_strided_slice %8 {offsets = [4, 0], sizes = [2, 384], strides = [1, 1]} : vector<16x384xf32> to vector<2x384xf32>
    %cst_17 = arith.constant dense<0.000000e+00> : vector<2x384xf32>
    %69 = tpu.matmul %66, %7, %cst_17 {dimension_numbers = #tpu.dot_dimension_numbers<[1], [0], [0], [1], [0, 0, 1, 1], [], []>} : vector<2x128xf32>, vector<128x384xf32>, vector<2x384xf32> -> vector<2x384xf32>
    %70 = vector.extract_strided_slice %68 {offsets = [0, 0], sizes = [2, 128], strides = [1, 1]} : vector<2x384xf32> to vector<2x128xf32>
    %71 = vector.extract_strided_slice %69 {offsets = [0, 0], sizes = [2, 128], strides = [1, 1]} : vector<2x384xf32> to vector<2x128xf32>
    %72 = arith.addf %70, %71 : vector<2x128xf32>
    %73 = arith.negf %72 : vector<2x128xf32>
    %74 = math.exp %73 : vector<2x128xf32>
    %cst_18 = arith.constant 1.000000e+00 : f32
    %75 = vector.broadcast %cst_18 : f32 to vector<2x128xf32>
    %76 = arith.addf %75, %74 : vector<2x128xf32>
    %77 = arith.divf %75, %76 : vector<2x128xf32>
    %78 = vector.extract_strided_slice %68 {offsets = [0, 128], sizes = [2, 128], strides = [1, 1]} : vector<2x384xf32> to vector<2x128xf32>
    %79 = vector.extract_strided_slice %69 {offsets = [0, 128], sizes = [2, 128], strides = [1, 1]} : vector<2x384xf32> to vector<2x128xf32>
    %80 = arith.addf %78, %79 : vector<2x128xf32>
    %81 = arith.negf %80 : vector<2x128xf32>
    %82 = math.exp %81 : vector<2x128xf32>
    %cst_19 = arith.constant 1.000000e+00 : f32
    %83 = vector.broadcast %cst_19 : f32 to vector<2x128xf32>
    %84 = arith.addf %83, %82 : vector<2x128xf32>
    %85 = arith.divf %83, %84 : vector<2x128xf32>
    %86 = vector.extract_strided_slice %68 {offsets = [0, 256], sizes = [2, 128], strides = [1, 1]} : vector<2x384xf32> to vector<2x128xf32>
    %87 = vector.extract_strided_slice %69 {offsets = [0, 256], sizes = [2, 128], strides = [1, 1]} : vector<2x384xf32> to vector<2x128xf32>
    %88 = arith.mulf %77, %87 : vector<2x128xf32>
    %89 = arith.addf %86, %88 : vector<2x128xf32>
    %90 = math.tanh %89 : vector<2x128xf32>
    %cst_20 = arith.constant 1.000000e+00 : f32
    %91 = vector.broadcast %cst_20 : f32 to vector<2x128xf32>
    %92 = arith.subf %91, %85 : vector<2x128xf32>
    %93 = arith.mulf %92, %90 : vector<2x128xf32>
    %94 = arith.mulf %85, %66 : vector<2x128xf32>
    %95 = arith.addf %93, %94 : vector<2x128xf32>
    %c4 = arith.constant 4 : index
    %c0_21 = arith.constant 0 : index
    %96 = vector.load %arg10[%c4, %c0_21] : memref<16x128xf32, #tpu.memory_space<vmem>>, vector<2x128xf32>
    tpu.vector_store %arg10[%c4, %c0_21], %95 {strides = array<i32>} : memref<16x128xf32, #tpu.memory_space<vmem>>, vector<2x128xf32>,
    %97 = vector.extract_strided_slice %8 {offsets = [6, 0], sizes = [2, 384], strides = [1, 1]} : vector<16x384xf32> to vector<2x384xf32>
    %cst_22 = arith.constant dense<0.000000e+00> : vector<2x384xf32>
    %98 = tpu.matmul %95, %7, %cst_22 {dimension_numbers = #tpu.dot_dimension_numbers<[1], [0], [0], [1], [0, 0, 1, 1], [], []>} : vector<2x128xf32>, vector<128x384xf32>, vector<2x384xf32> -> vector<2x384xf32>
    %99 = vector.extract_strided_slice %97 {offsets = [0, 0], sizes = [2, 128], strides = [1, 1]} : vector<2x384xf32> to vector<2x128xf32>
    %100 = vector.extract_strided_slice %98 {offsets = [0, 0], sizes = [2, 128], strides = [1, 1]} : vector<2x384xf32> to vector<2x128xf32>
    %101 = arith.addf %99, %100 : vector<2x128xf32>
    %102 = arith.negf %101 : vector<2x128xf32>
    %103 = math.exp %102 : vector<2x128xf32>
    %cst_23 = arith.constant 1.000000e+00 : f32
    %104 = vector.broadcast %cst_23 : f32 to vector<2x128xf32>
    %105 = arith.addf %104, %103 : vector<2x128xf32>
    %106 = arith.divf %104, %105 : vector<2x128xf32>
    %107 = vector.extract_strided_slice %97 {offsets = [0, 128], sizes = [2, 128], strides = [1, 1]} : vector<2x384xf32> to vector<2x128xf32>
    %108 = vector.extract_strided_slice %98 {offsets = [0, 128], sizes = [2, 128], strides = [1, 1]} : vector<2x384xf32> to vector<2x128xf32>
    %109 = arith.addf %107, %108 : vector<2x128xf32>
    %110 = arith.negf %109 : vector<2x128xf32>
    %111 = math.exp %110 : vector<2x128xf32>
    %cst_24 = arith.constant 1.000000e+00 : f32
    %112 = vector.broadcast %cst_24 : f32 to vector<2x128xf32>
    %113 = arith.addf %112, %111 : vector<2x128xf32>
    %114 = arith.divf %112, %113 : vector<2x128xf32>
    %115 = vector.extract_strided_slice %97 {offsets = [0, 256], sizes = [2, 128], strides = [1, 1]} : vector<2x384xf32> to vector<2x128xf32>
    %116 = vector.extract_strided_slice %98 {offsets = [0, 256], sizes = [2, 128], strides = [1, 1]} : vector<2x384xf32> to vector<2x128xf32>
    %117 = arith.mulf %106, %116 : vector<2x128xf32>
    %118 = arith.addf %115, %117 : vector<2x128xf32>
    %119 = math.tanh %118 : vector<2x128xf32>
    %cst_25 = arith.constant 1.000000e+00 : f32
    %120 = vector.broadcast %cst_25 : f32 to vector<2x128xf32>
    %121 = arith.subf %120, %114 : vector<2x128xf32>
    %122 = arith.mulf %121, %119 : vector<2x128xf32>
    %123 = arith.mulf %114, %95 : vector<2x128xf32>
    %124 = arith.addf %122, %123 : vector<2x128xf32>
    %c6 = arith.constant 6 : index
    %c0_26 = arith.constant 0 : index
    %125 = vector.load %arg10[%c6, %c0_26] : memref<16x128xf32, #tpu.memory_space<vmem>>, vector<2x128xf32>
    tpu.vector_store %arg10[%c6, %c0_26], %124 {strides = array<i32>} : memref<16x128xf32, #tpu.memory_space<vmem>>, vector<2x128xf32>,
    %126 = vector.extract_strided_slice %8 {offsets = [8, 0], sizes = [2, 384], strides = [1, 1]} : vector<16x384xf32> to vector<2x384xf32>
    %cst_27 = arith.constant dense<0.000000e+00> : vector<2x384xf32>
    %127 = tpu.matmul %124, %7, %cst_27 {dimension_numbers = #tpu.dot_dimension_numbers<[1], [0], [0], [1], [0, 0, 1, 1], [], []>} : vector<2x128xf32>, vector<128x384xf32>, vector<2x384xf32> -> vector<2x384xf32>
    %128 = vector.extract_strided_slice %126 {offsets = [0, 0], sizes = [2, 128], strides = [1, 1]} : vector<2x384xf32> to vector<2x128xf32>
    %129 = vector.extract_strided_slice %127 {offsets = [0, 0], sizes = [2, 128], strides = [1, 1]} : vector<2x384xf32> to vector<2x128xf32>
    %130 = arith.addf %128, %129 : vector<2x128xf32>
    %131 = arith.negf %130 : vector<2x128xf32>
    %132 = math.exp %131 : vector<2x128xf32>
    %cst_28 = arith.constant 1.000000e+00 : f32
    %133 = vector.broadcast %cst_28 : f32 to vector<2x128xf32>
    %134 = arith.addf %133, %132 : vector<2x128xf32>
    %135 = arith.divf %133, %134 : vector<2x128xf32>
    %136 = vector.extract_strided_slice %126 {offsets = [0, 128], sizes = [2, 128], strides = [1, 1]} : vector<2x384xf32> to vector<2x128xf32>
    %137 = vector.extract_strided_slice %127 {offsets = [0, 128], sizes = [2, 128], strides = [1, 1]} : vector<2x384xf32> to vector<2x128xf32>
    %138 = arith.addf %136, %137 : vector<2x128xf32>
    %139 = arith.negf %138 : vector<2x128xf32>
    %140 = math.exp %139 : vector<2x128xf32>
    %cst_29 = arith.constant 1.000000e+00 : f32
    %141 = vector.broadcast %cst_29 : f32 to vector<2x128xf32>
    %142 = arith.addf %141, %140 : vector<2x128xf32>
    %143 = arith.divf %141, %142 : vector<2x128xf32>
    %144 = vector.extract_strided_slice %126 {offsets = [0, 256], sizes = [2, 128], strides = [1, 1]} : vector<2x384xf32> to vector<2x128xf32>
    %145 = vector.extract_strided_slice %127 {offsets = [0, 256], sizes = [2, 128], strides = [1, 1]} : vector<2x384xf32> to vector<2x128xf32>
    %146 = arith.mulf %135, %145 : vector<2x128xf32>
    %147 = arith.addf %144, %146 : vector<2x128xf32>
    %148 = math.tanh %147 : vector<2x128xf32>
    %cst_30 = arith.constant 1.000000e+00 : f32
    %149 = vector.broadcast %cst_30 : f32 to vector<2x128xf32>
    %150 = arith.subf %149, %143 : vector<2x128xf32>
    %151 = arith.mulf %150, %148 : vector<2x128xf32>
    %152 = arith.mulf %143, %124 : vector<2x128xf32>
    %153 = arith.addf %151, %152 : vector<2x128xf32>
    %c8 = arith.constant 8 : index
    %c0_31 = arith.constant 0 : index
    %154 = vector.load %arg10[%c8, %c0_31] : memref<16x128xf32, #tpu.memory_space<vmem>>, vector<2x128xf32>
    tpu.vector_store %arg10[%c8, %c0_31], %153 {strides = array<i32>} : memref<16x128xf32, #tpu.memory_space<vmem>>, vector<2x128xf32>,
    %155 = vector.extract_strided_slice %8 {offsets = [10, 0], sizes = [2, 384], strides = [1, 1]} : vector<16x384xf32> to vector<2x384xf32>
    %cst_32 = arith.constant dense<0.000000e+00> : vector<2x384xf32>
    %156 = tpu.matmul %153, %7, %cst_32 {dimension_numbers = #tpu.dot_dimension_numbers<[1], [0], [0], [1], [0, 0, 1, 1], [], []>} : vector<2x128xf32>, vector<128x384xf32>, vector<2x384xf32> -> vector<2x384xf32>
    %157 = vector.extract_strided_slice %155 {offsets = [0, 0], sizes = [2, 128], strides = [1, 1]} : vector<2x384xf32> to vector<2x128xf32>
    %158 = vector.extract_strided_slice %156 {offsets = [0, 0], sizes = [2, 128], strides = [1, 1]} : vector<2x384xf32> to vector<2x128xf32>
    %159 = arith.addf %157, %158 : vector<2x128xf32>
    %160 = arith.negf %159 : vector<2x128xf32>
    %161 = math.exp %160 : vector<2x128xf32>
    %cst_33 = arith.constant 1.000000e+00 : f32
    %162 = vector.broadcast %cst_33 : f32 to vector<2x128xf32>
    %163 = arith.addf %162, %161 : vector<2x128xf32>
    %164 = arith.divf %162, %163 : vector<2x128xf32>
    %165 = vector.extract_strided_slice %155 {offsets = [0, 128], sizes = [2, 128], strides = [1, 1]} : vector<2x384xf32> to vector<2x128xf32>
    %166 = vector.extract_strided_slice %156 {offsets = [0, 128], sizes = [2, 128], strides = [1, 1]} : vector<2x384xf32> to vector<2x128xf32>
    %167 = arith.addf %165, %166 : vector<2x128xf32>
    %168 = arith.negf %167 : vector<2x128xf32>
    %169 = math.exp %168 : vector<2x128xf32>
    %cst_34 = arith.constant 1.000000e+00 : f32
    %170 = vector.broadcast %cst_34 : f32 to vector<2x128xf32>
    %171 = arith.addf %170, %169 : vector<2x128xf32>
    %172 = arith.divf %170, %171 : vector<2x128xf32>
    %173 = vector.extract_strided_slice %155 {offsets = [0, 256], sizes = [2, 128], strides = [1, 1]} : vector<2x384xf32> to vector<2x128xf32>
    %174 = vector.extract_strided_slice %156 {offsets = [0, 256], sizes = [2, 128], strides = [1, 1]} : vector<2x384xf32> to vector<2x128xf32>
    %175 = arith.mulf %164, %174 : vector<2x128xf32>
    %176 = arith.addf %173, %175 : vector<2x128xf32>
    %177 = math.tanh %176 : vector<2x128xf32>
    %cst_35 = arith.constant 1.000000e+00 : f32
    %178 = vector.broadcast %cst_35 : f32 to vector<2x128xf32>
    %179 = arith.subf %178, %172 : vector<2x128xf32>
    %180 = arith.mulf %179, %177 : vector<2x128xf32>
    %181 = arith.mulf %172, %153 : vector<2x128xf32>
    %182 = arith.addf %180, %181 : vector<2x128xf32>
    %c10 = arith.constant 10 : index
    %c0_36 = arith.constant 0 : index
    %183 = vector.load %arg10[%c10, %c0_36] : memref<16x128xf32, #tpu.memory_space<vmem>>, vector<2x128xf32>
    tpu.vector_store %arg10[%c10, %c0_36], %182 {strides = array<i32>} : memref<16x128xf32, #tpu.memory_space<vmem>>, vector<2x128xf32>,
    %184 = vector.extract_strided_slice %8 {offsets = [12, 0], sizes = [2, 384], strides = [1, 1]} : vector<16x384xf32> to vector<2x384xf32>
    %cst_37 = arith.constant dense<0.000000e+00> : vector<2x384xf32>
    %185 = tpu.matmul %182, %7, %cst_37 {dimension_numbers = #tpu.dot_dimension_numbers<[1], [0], [0], [1], [0, 0, 1, 1], [], []>} : vector<2x128xf32>, vector<128x384xf32>, vector<2x384xf32> -> vector<2x384xf32>
    %186 = vector.extract_strided_slice %184 {offsets = [0, 0], sizes = [2, 128], strides = [1, 1]} : vector<2x384xf32> to vector<2x128xf32>
    %187 = vector.extract_strided_slice %185 {offsets = [0, 0], sizes = [2, 128], strides = [1, 1]} : vector<2x384xf32> to vector<2x128xf32>
    %188 = arith.addf %186, %187 : vector<2x128xf32>
    %189 = arith.negf %188 : vector<2x128xf32>
    %190 = math.exp %189 : vector<2x128xf32>
    %cst_38 = arith.constant 1.000000e+00 : f32
    %191 = vector.broadcast %cst_38 : f32 to vector<2x128xf32>
    %192 = arith.addf %191, %190 : vector<2x128xf32>
    %193 = arith.divf %191, %192 : vector<2x128xf32>
    %194 = vector.extract_strided_slice %184 {offsets = [0, 128], sizes = [2, 128], strides = [1, 1]} : vector<2x384xf32> to vector<2x128xf32>
    %195 = vector.extract_strided_slice %185 {offsets = [0, 128], sizes = [2, 128], strides = [1, 1]} : vector<2x384xf32> to vector<2x128xf32>
    %196 = arith.addf %194, %195 : vector<2x128xf32>
    %197 = arith.negf %196 : vector<2x128xf32>
    %198 = math.exp %197 : vector<2x128xf32>
    %cst_39 = arith.constant 1.000000e+00 : f32
    %199 = vector.broadcast %cst_39 : f32 to vector<2x128xf32>
    %200 = arith.addf %199, %198 : vector<2x128xf32>
    %201 = arith.divf %199, %200 : vector<2x128xf32>
    %202 = vector.extract_strided_slice %184 {offsets = [0, 256], sizes = [2, 128], strides = [1, 1]} : vector<2x384xf32> to vector<2x128xf32>
    %203 = vector.extract_strided_slice %185 {offsets = [0, 256], sizes = [2, 128], strides = [1, 1]} : vector<2x384xf32> to vector<2x128xf32>
    %204 = arith.mulf %193, %203 : vector<2x128xf32>
    %205 = arith.addf %202, %204 : vector<2x128xf32>
    %206 = math.tanh %205 : vector<2x128xf32>
    %cst_40 = arith.constant 1.000000e+00 : f32
    %207 = vector.broadcast %cst_40 : f32 to vector<2x128xf32>
    %208 = arith.subf %207, %201 : vector<2x128xf32>
    %209 = arith.mulf %208, %206 : vector<2x128xf32>
    %210 = arith.mulf %201, %182 : vector<2x128xf32>
    %211 = arith.addf %209, %210 : vector<2x128xf32>
    %c12 = arith.constant 12 : index
    %c0_41 = arith.constant 0 : index
    %212 = vector.load %arg10[%c12, %c0_41] : memref<16x128xf32, #tpu.memory_space<vmem>>, vector<2x128xf32>
    tpu.vector_store %arg10[%c12, %c0_41], %211 {strides = array<i32>} : memref<16x128xf32, #tpu.memory_space<vmem>>, vector<2x128xf32>,
    %213 = vector.extract_strided_slice %8 {offsets = [14, 0], sizes = [2, 384], strides = [1, 1]} : vector<16x384xf32> to vector<2x384xf32>
    %cst_42 = arith.constant dense<0.000000e+00> : vector<2x384xf32>
    %214 = tpu.matmul %211, %7, %cst_42 {dimension_numbers = #tpu.dot_dimension_numbers<[1], [0], [0], [1], [0, 0, 1, 1], [], []>} : vector<2x128xf32>, vector<128x384xf32>, vector<2x384xf32> -> vector<2x384xf32>
    %215 = vector.extract_strided_slice %213 {offsets = [0, 0], sizes = [2, 128], strides = [1, 1]} : vector<2x384xf32> to vector<2x128xf32>
    %216 = vector.extract_strided_slice %214 {offsets = [0, 0], sizes = [2, 128], strides = [1, 1]} : vector<2x384xf32> to vector<2x128xf32>
    %217 = arith.addf %215, %216 : vector<2x128xf32>
    %218 = arith.negf %217 : vector<2x128xf32>
    %219 = math.exp %218 : vector<2x128xf32>
    %cst_43 = arith.constant 1.000000e+00 : f32
    %220 = vector.broadcast %cst_43 : f32 to vector<2x128xf32>
    %221 = arith.addf %220, %219 : vector<2x128xf32>
    %222 = arith.divf %220, %221 : vector<2x128xf32>
    %223 = vector.extract_strided_slice %213 {offsets = [0, 128], sizes = [2, 128], strides = [1, 1]} : vector<2x384xf32> to vector<2x128xf32>
    %224 = vector.extract_strided_slice %214 {offsets = [0, 128], sizes = [2, 128], strides = [1, 1]} : vector<2x384xf32> to vector<2x128xf32>
    %225 = arith.addf %223, %224 : vector<2x128xf32>
    %226 = arith.negf %225 : vector<2x128xf32>
    %227 = math.exp %226 : vector<2x128xf32>
    %cst_44 = arith.constant 1.000000e+00 : f32
    %228 = vector.broadcast %cst_44 : f32 to vector<2x128xf32>
    %229 = arith.addf %228, %227 : vector<2x128xf32>
    %230 = arith.divf %228, %229 : vector<2x128xf32>
    %231 = vector.extract_strided_slice %213 {offsets = [0, 256], sizes = [2, 128], strides = [1, 1]} : vector<2x384xf32> to vector<2x128xf32>
    %232 = vector.extract_strided_slice %214 {offsets = [0, 256], sizes = [2, 128], strides = [1, 1]} : vector<2x384xf32> to vector<2x128xf32>
    %233 = arith.mulf %222, %232 : vector<2x128xf32>
    %234 = arith.addf %231, %233 : vector<2x128xf32>
    %235 = math.tanh %234 : vector<2x128xf32>
    %cst_45 = arith.constant 1.000000e+00 : f32
    %236 = vector.broadcast %cst_45 : f32 to vector<2x128xf32>
    %237 = arith.subf %236, %230 : vector<2x128xf32>
    %238 = arith.mulf %237, %235 : vector<2x128xf32>
    %239 = arith.mulf %230, %211 : vector<2x128xf32>
    %240 = arith.addf %238, %239 : vector<2x128xf32>
    %c14 = arith.constant 14 : index
    %c0_46 = arith.constant 0 : index
    %241 = vector.load %arg10[%c14, %c0_46] : memref<16x128xf32, #tpu.memory_space<vmem>>, vector<2x128xf32>
    tpu.vector_store %arg10[%c14, %c0_46], %240 {strides = array<i32>} : memref<16x128xf32, #tpu.memory_space<vmem>>, vector<2x128xf32>,
    %c0_47 = arith.constant 0 : index
    %c0_48 = arith.constant 0 : index
    %242 = vector.load %arg10[%c0_47, %c0_48] : memref<16x128xf32, #tpu.memory_space<vmem>>, vector<16x128xf32>
    %cst_49 = arith.constant dense<0.000000e+00> : vector<16xf32>
    %243 = vector.multi_reduction <add>, %242, %cst_49 [1] : vector<16x128xf32> to vector<16xf32>
    %244 = vector.shape_cast %243 : vector<16xf32> to vector<16x1xf32>
    %cst_50 = arith.constant 0.00999999977 : f32
    %245 = vector.broadcast %cst_50 : f32 to vector<16x1xf32>
    %246 = arith.mulf %244, %245 : vector<16x1xf32>
    %247 = vector.broadcast %246 : vector<16x1xf32> to vector<16x128xf32>
    %248 = arith.subf %242, %247 : vector<16x128xf32>
    %249 = vector.broadcast %4 : vector<1x128xf32> to vector<16x128xf32>
    %250 = arith.mulf %248, %249 : vector<16x128xf32>
    %251 = arith.mulf %250, %250 : vector<16x128xf32>
    %cst_51 = arith.constant dense<0.000000e+00> : vector<16xf32>
    %252 = vector.multi_reduction <add>, %251, %cst_51 [1] : vector<16x128xf32> to vector<16xf32>
    %253 = vector.shape_cast %252 : vector<16xf32> to vector<16x1xf32>
    %cst_52 = arith.constant 0.00999999977 : f32
    %254 = vector.broadcast %cst_52 : f32 to vector<16x1xf32>
    %255 = arith.mulf %253, %254 : vector<16x1xf32>
    %cst_53 = arith.constant 9.99999974E-6 : f32
    %256 = vector.broadcast %cst_53 : f32 to vector<16x1xf32>
    %257 = arith.addf %255, %256 : vector<16x1xf32>
    %258 = math.rsqrt %257 : vector<16x1xf32>
    %259 = vector.broadcast %258 : vector<16x1xf32> to vector<16x128xf32>
    %260 = arith.mulf %250, %259 : vector<16x128xf32>
    %c0_54 = arith.constant 0 : index
    %c0_55 = arith.constant 0 : index
    %261 = vector.load %arg3[%c0_54, %c0_55] : memref<128x8xf32, #tpu.memory_space<vmem>>, vector<128x8xf32>
    %cst_56 = arith.constant dense<0.000000e+00> : vector<16x8xf32>
    %262 = tpu.matmul %260, %261, %cst_56 {dimension_numbers = #tpu.dot_dimension_numbers<[1], [0], [0], [1], [0, 0, 1, 1], [], []>} : vector<16x128xf32>, vector<128x8xf32>, vector<16x8xf32> -> vector<16x8xf32>
    %c0_57 = arith.constant 0 : index
    %c0_58 = arith.constant 0 : index
    %263 = vector.load %arg4[%c0_57, %c0_58] : memref<1x8xf32, #tpu.memory_space<vmem>>, vector<1x8xf32>
    %264 = vector.broadcast %263 : vector<1x8xf32> to vector<16x8xf32>
    %265 = arith.addf %262, %264 : vector<16x8xf32>
    %c0_59 = arith.constant 0 : index
    %c0_60 = arith.constant 0 : index
    %266 = vector.load %arg5[%c0_59, %c0_60] : memref<8x384xf32, #tpu.memory_space<vmem>>, vector<8x384xf32>
    %c0_61 = arith.constant 0 : index
    %c0_62 = arith.constant 0 : index
    %267 = vector.load %arg6[%c0_61, %c0_62] : memref<128x384xf32, #tpu.memory_space<vmem>>, vector<128x384xf32>
    %cst_63 = arith.constant dense<0.000000e+00> : vector<16x384xf32>
    %268 = tpu.matmul %265, %266, %cst_63 {dimension_numbers = #tpu.dot_dimension_numbers<[1], [0], [0], [1], [0, 0, 1, 1], [], []>} : vector<16x8xf32>, vector<8x384xf32>, vector<16x384xf32> -> vector<16x384xf32>
    %cst_64 = arith.constant 0.000000e+00 : f32
    %269 = vector.broadcast %cst_64 : f32 to vector<2x128xf32>
    %270 = vector.extract_strided_slice %268 {offsets = [0, 0], sizes = [2, 384], strides = [1, 1]} : vector<16x384xf32> to vector<2x384xf32>
    %cst_65 = arith.constant dense<0.000000e+00> : vector<2x384xf32>
    %271 = tpu.matmul %269, %267, %cst_65 {dimension_numbers = #tpu.dot_dimension_numbers<[1], [0], [0], [1], [0, 0, 1, 1], [], []>} : vector<2x128xf32>, vector<128x384xf32>, vector<2x384xf32> -> vector<2x384xf32>
    %272 = vector.extract_strided_slice %270 {offsets = [0, 0], sizes = [2, 128], strides = [1, 1]} : vector<2x384xf32> to vector<2x128xf32>
    %273 = vector.extract_strided_slice %271 {offsets = [0, 0], sizes = [2, 128], strides = [1, 1]} : vector<2x384xf32> to vector<2x128xf32>
    %274 = arith.addf %272, %273 : vector<2x128xf32>
    %275 = arith.negf %274 : vector<2x128xf32>
    %276 = math.exp %275 : vector<2x128xf32>
    %cst_66 = arith.constant 1.000000e+00 : f32
    %277 = vector.broadcast %cst_66 : f32 to vector<2x128xf32>
    %278 = arith.addf %277, %276 : vector<2x128xf32>
    %279 = arith.divf %277, %278 : vector<2x128xf32>
    %280 = vector.extract_strided_slice %270 {offsets = [0, 128], sizes = [2, 128], strides = [1, 1]} : vector<2x384xf32> to vector<2x128xf32>
    %281 = vector.extract_strided_slice %271 {offsets = [0, 128], sizes = [2, 128], strides = [1, 1]} : vector<2x384xf32> to vector<2x128xf32>
    %282 = arith.addf %280, %281 : vector<2x128xf32>
    %283 = arith.negf %282 : vector<2x128xf32>
    %284 = math.exp %283 : vector<2x128xf32>
    %cst_67 = arith.constant 1.000000e+00 : f32
    %285 = vector.broadcast %cst_67 : f32 to vector<2x128xf32>
    %286 = arith.addf %285, %284 : vector<2x128xf32>
    %287 = arith.divf %285, %286 : vector<2x128xf32>
    %288 = vector.extract_strided_slice %270 {offsets = [0, 256], sizes = [2, 128], strides = [1, 1]} : vector<2x384xf32> to vector<2x128xf32>
    %289 = vector.extract_strided_slice %271 {offsets = [0, 256], sizes = [2, 128], strides = [1, 1]} : vector<2x384xf32> to vector<2x128xf32>
    %290 = arith.mulf %279, %289 : vector<2x128xf32>
    %291 = arith.addf %288, %290 : vector<2x128xf32>
    %292 = math.tanh %291 : vector<2x128xf32>
    %cst_68 = arith.constant 1.000000e+00 : f32
    %293 = vector.broadcast %cst_68 : f32 to vector<2x128xf32>
    %294 = arith.subf %293, %287 : vector<2x128xf32>
    %295 = arith.mulf %294, %292 : vector<2x128xf32>
    %296 = arith.mulf %287, %269 : vector<2x128xf32>
    %297 = arith.addf %295, %296 : vector<2x128xf32>
    %c0_69 = arith.constant 0 : index
    %c0_70 = arith.constant 0 : index
    %298 = vector.load %arg10[%c0_69, %c0_70] : memref<16x128xf32, #tpu.memory_space<vmem>>, vector<2x128xf32>
    tpu.vector_store %arg10[%c0_69, %c0_70], %297 {strides = array<i32>} : memref<16x128xf32, #tpu.memory_space<vmem>>, vector<2x128xf32>,
    %299 = vector.extract_strided_slice %268 {offsets = [2, 0], sizes = [2, 384], strides = [1, 1]} : vector<16x384xf32> to vector<2x384xf32>
    %cst_71 = arith.constant dense<0.000000e+00> : vector<2x384xf32>
    %300 = tpu.matmul %297, %267, %cst_71 {dimension_numbers = #tpu.dot_dimension_numbers<[1], [0], [0], [1], [0, 0, 1, 1], [], []>} : vector<2x128xf32>, vector<128x384xf32>, vector<2x384xf32> -> vector<2x384xf32>
    %301 = vector.extract_strided_slice %299 {offsets = [0, 0], sizes = [2, 128], strides = [1, 1]} : vector<2x384xf32> to vector<2x128xf32>
    %302 = vector.extract_strided_slice %300 {offsets = [0, 0], sizes = [2, 128], strides = [1, 1]} : vector<2x384xf32> to vector<2x128xf32>
    %303 = arith.addf %301, %302 : vector<2x128xf32>
    %304 = arith.negf %303 : vector<2x128xf32>
    %305 = math.exp %304 : vector<2x128xf32>
    %cst_72 = arith.constant 1.000000e+00 : f32
    %306 = vector.broadcast %cst_72 : f32 to vector<2x128xf32>
    %307 = arith.addf %306, %305 : vector<2x128xf32>
    %308 = arith.divf %306, %307 : vector<2x128xf32>
    %309 = vector.extract_strided_slice %299 {offsets = [0, 128], sizes = [2, 128], strides = [1, 1]} : vector<2x384xf32> to vector<2x128xf32>
    %310 = vector.extract_strided_slice %300 {offsets = [0, 128], sizes = [2, 128], strides = [1, 1]} : vector<2x384xf32> to vector<2x128xf32>
    %311 = arith.addf %309, %310 : vector<2x128xf32>
    %312 = arith.negf %311 : vector<2x128xf32>
    %313 = math.exp %312 : vector<2x128xf32>
    %cst_73 = arith.constant 1.000000e+00 : f32
    %314 = vector.broadcast %cst_73 : f32 to vector<2x128xf32>
    %315 = arith.addf %314, %313 : vector<2x128xf32>
    %316 = arith.divf %314, %315 : vector<2x128xf32>
    %317 = vector.extract_strided_slice %299 {offsets = [0, 256], sizes = [2, 128], strides = [1, 1]} : vector<2x384xf32> to vector<2x128xf32>
    %318 = vector.extract_strided_slice %300 {offsets = [0, 256], sizes = [2, 128], strides = [1, 1]} : vector<2x384xf32> to vector<2x128xf32>
    %319 = arith.mulf %308, %318 : vector<2x128xf32>
    %320 = arith.addf %317, %319 : vector<2x128xf32>
    %321 = math.tanh %320 : vector<2x128xf32>
    %cst_74 = arith.constant 1.000000e+00 : f32
    %322 = vector.broadcast %cst_74 : f32 to vector<2x128xf32>
    %323 = arith.subf %322, %316 : vector<2x128xf32>
    %324 = arith.mulf %323, %321 : vector<2x128xf32>
    %325 = arith.mulf %316, %297 : vector<2x128xf32>
    %326 = arith.addf %324, %325 : vector<2x128xf32>
    %c2_75 = arith.constant 2 : index
    %c0_76 = arith.constant 0 : index
    %327 = vector.load %arg10[%c2_75, %c0_76] : memref<16x128xf32, #tpu.memory_space<vmem>>, vector<2x128xf32>
    tpu.vector_store %arg10[%c2_75, %c0_76], %326 {strides = array<i32>} : memref<16x128xf32, #tpu.memory_space<vmem>>, vector<2x128xf32>,
    %328 = vector.extract_strided_slice %268 {offsets = [4, 0], sizes = [2, 384], strides = [1, 1]} : vector<16x384xf32> to vector<2x384xf32>
    %cst_77 = arith.constant dense<0.000000e+00> : vector<2x384xf32>
    %329 = tpu.matmul %326, %267, %cst_77 {dimension_numbers = #tpu.dot_dimension_numbers<[1], [0], [0], [1], [0, 0, 1, 1], [], []>} : vector<2x128xf32>, vector<128x384xf32>, vector<2x384xf32> -> vector<2x384xf32>
    %330 = vector.extract_strided_slice %328 {offsets = [0, 0], sizes = [2, 128], strides = [1, 1]} : vector<2x384xf32> to vector<2x128xf32>
    %331 = vector.extract_strided_slice %329 {offsets = [0, 0], sizes = [2, 128], strides = [1, 1]} : vector<2x384xf32> to vector<2x128xf32>
    %332 = arith.addf %330, %331 : vector<2x128xf32>
    %333 = arith.negf %332 : vector<2x128xf32>
    %334 = math.exp %333 : vector<2x128xf32>
    %cst_78 = arith.constant 1.000000e+00 : f32
    %335 = vector.broadcast %cst_78 : f32 to vector<2x128xf32>
    %336 = arith.addf %335, %334 : vector<2x128xf32>
    %337 = arith.divf %335, %336 : vector<2x128xf32>
    %338 = vector.extract_strided_slice %328 {offsets = [0, 128], sizes = [2, 128], strides = [1, 1]} : vector<2x384xf32> to vector<2x128xf32>
    %339 = vector.extract_strided_slice %329 {offsets = [0, 128], sizes = [2, 128], strides = [1, 1]} : vector<2x384xf32> to vector<2x128xf32>
    %340 = arith.addf %338, %339 : vector<2x128xf32>
    %341 = arith.negf %340 : vector<2x128xf32>
    %342 = math.exp %341 : vector<2x128xf32>
    %cst_79 = arith.constant 1.000000e+00 : f32
    %343 = vector.broadcast %cst_79 : f32 to vector<2x128xf32>
    %344 = arith.addf %343, %342 : vector<2x128xf32>
    %345 = arith.divf %343, %344 : vector<2x128xf32>
    %346 = vector.extract_strided_slice %328 {offsets = [0, 256], sizes = [2, 128], strides = [1, 1]} : vector<2x384xf32> to vector<2x128xf32>
    %347 = vector.extract_strided_slice %329 {offsets = [0, 256], sizes = [2, 128], strides = [1, 1]} : vector<2x384xf32> to vector<2x128xf32>
    %348 = arith.mulf %337, %347 : vector<2x128xf32>
    %349 = arith.addf %346, %348 : vector<2x128xf32>
    %350 = math.tanh %349 : vector<2x128xf32>
    %cst_80 = arith.constant 1.000000e+00 : f32
    %351 = vector.broadcast %cst_80 : f32 to vector<2x128xf32>
    %352 = arith.subf %351, %345 : vector<2x128xf32>
    %353 = arith.mulf %352, %350 : vector<2x128xf32>
    %354 = arith.mulf %345, %326 : vector<2x128xf32>
    %355 = arith.addf %353, %354 : vector<2x128xf32>
    %c4_81 = arith.constant 4 : index
    %c0_82 = arith.constant 0 : index
    %356 = vector.load %arg10[%c4_81, %c0_82] : memref<16x128xf32, #tpu.memory_space<vmem>>, vector<2x128xf32>
    tpu.vector_store %arg10[%c4_81, %c0_82], %355 {strides = array<i32>} : memref<16x128xf32, #tpu.memory_space<vmem>>, vector<2x128xf32>,
    %357 = vector.extract_strided_slice %268 {offsets = [6, 0], sizes = [2, 384], strides = [1, 1]} : vector<16x384xf32> to vector<2x384xf32>
    %cst_83 = arith.constant dense<0.000000e+00> : vector<2x384xf32>
    %358 = tpu.matmul %355, %267, %cst_83 {dimension_numbers = #tpu.dot_dimension_numbers<[1], [0], [0], [1], [0, 0, 1, 1], [], []>} : vector<2x128xf32>, vector<128x384xf32>, vector<2x384xf32> -> vector<2x384xf32>
    %359 = vector.extract_strided_slice %357 {offsets = [0, 0], sizes = [2, 128], strides = [1, 1]} : vector<2x384xf32> to vector<2x128xf32>
    %360 = vector.extract_strided_slice %358 {offsets = [0, 0], sizes = [2, 128], strides = [1, 1]} : vector<2x384xf32> to vector<2x128xf32>
    %361 = arith.addf %359, %360 : vector<2x128xf32>
    %362 = arith.negf %361 : vector<2x128xf32>
    %363 = math.exp %362 : vector<2x128xf32>
    %cst_84 = arith.constant 1.000000e+00 : f32
    %364 = vector.broadcast %cst_84 : f32 to vector<2x128xf32>
    %365 = arith.addf %364, %363 : vector<2x128xf32>
    %366 = arith.divf %364, %365 : vector<2x128xf32>
    %367 = vector.extract_strided_slice %357 {offsets = [0, 128], sizes = [2, 128], strides = [1, 1]} : vector<2x384xf32> to vector<2x128xf32>
    %368 = vector.extract_strided_slice %358 {offsets = [0, 128], sizes = [2, 128], strides = [1, 1]} : vector<2x384xf32> to vector<2x128xf32>
    %369 = arith.addf %367, %368 : vector<2x128xf32>
    %370 = arith.negf %369 : vector<2x128xf32>
    %371 = math.exp %370 : vector<2x128xf32>
    %cst_85 = arith.constant 1.000000e+00 : f32
    %372 = vector.broadcast %cst_85 : f32 to vector<2x128xf32>
    %373 = arith.addf %372, %371 : vector<2x128xf32>
    %374 = arith.divf %372, %373 : vector<2x128xf32>
    %375 = vector.extract_strided_slice %357 {offsets = [0, 256], sizes = [2, 128], strides = [1, 1]} : vector<2x384xf32> to vector<2x128xf32>
    %376 = vector.extract_strided_slice %358 {offsets = [0, 256], sizes = [2, 128], strides = [1, 1]} : vector<2x384xf32> to vector<2x128xf32>
    %377 = arith.mulf %366, %376 : vector<2x128xf32>
    %378 = arith.addf %375, %377 : vector<2x128xf32>
    %379 = math.tanh %378 : vector<2x128xf32>
    %cst_86 = arith.constant 1.000000e+00 : f32
    %380 = vector.broadcast %cst_86 : f32 to vector<2x128xf32>
    %381 = arith.subf %380, %374 : vector<2x128xf32>
    %382 = arith.mulf %381, %379 : vector<2x128xf32>
    %383 = arith.mulf %374, %355 : vector<2x128xf32>
    %384 = arith.addf %382, %383 : vector<2x128xf32>
    %c6_87 = arith.constant 6 : index
    %c0_88 = arith.constant 0 : index
    %385 = vector.load %arg10[%c6_87, %c0_88] : memref<16x128xf32, #tpu.memory_space<vmem>>, vector<2x128xf32>
    tpu.vector_store %arg10[%c6_87, %c0_88], %384 {strides = array<i32>} : memref<16x128xf32, #tpu.memory_space<vmem>>, vector<2x128xf32>,
    %386 = vector.extract_strided_slice %268 {offsets = [8, 0], sizes = [2, 384], strides = [1, 1]} : vector<16x384xf32> to vector<2x384xf32>
    %cst_89 = arith.constant dense<0.000000e+00> : vector<2x384xf32>
    %387 = tpu.matmul %384, %267, %cst_89 {dimension_numbers = #tpu.dot_dimension_numbers<[1], [0], [0], [1], [0, 0, 1, 1], [], []>} : vector<2x128xf32>, vector<128x384xf32>, vector<2x384xf32> -> vector<2x384xf32>
    %388 = vector.extract_strided_slice %386 {offsets = [0, 0], sizes = [2, 128], strides = [1, 1]} : vector<2x384xf32> to vector<2x128xf32>
    %389 = vector.extract_strided_slice %387 {offsets = [0, 0], sizes = [2, 128], strides = [1, 1]} : vector<2x384xf32> to vector<2x128xf32>
    %390 = arith.addf %388, %389 : vector<2x128xf32>
    %391 = arith.negf %390 : vector<2x128xf32>
    %392 = math.exp %391 : vector<2x128xf32>
    %cst_90 = arith.constant 1.000000e+00 : f32
    %393 = vector.broadcast %cst_90 : f32 to vector<2x128xf32>
    %394 = arith.addf %393, %392 : vector<2x128xf32>
    %395 = arith.divf %393, %394 : vector<2x128xf32>
    %396 = vector.extract_strided_slice %386 {offsets = [0, 128], sizes = [2, 128], strides = [1, 1]} : vector<2x384xf32> to vector<2x128xf32>
    %397 = vector.extract_strided_slice %387 {offsets = [0, 128], sizes = [2, 128], strides = [1, 1]} : vector<2x384xf32> to vector<2x128xf32>
    %398 = arith.addf %396, %397 : vector<2x128xf32>
    %399 = arith.negf %398 : vector<2x128xf32>
    %400 = math.exp %399 : vector<2x128xf32>
    %cst_91 = arith.constant 1.000000e+00 : f32
    %401 = vector.broadcast %cst_91 : f32 to vector<2x128xf32>
    %402 = arith.addf %401, %400 : vector<2x128xf32>
    %403 = arith.divf %401, %402 : vector<2x128xf32>
    %404 = vector.extract_strided_slice %386 {offsets = [0, 256], sizes = [2, 128], strides = [1, 1]} : vector<2x384xf32> to vector<2x128xf32>
    %405 = vector.extract_strided_slice %387 {offsets = [0, 256], sizes = [2, 128], strides = [1, 1]} : vector<2x384xf32> to vector<2x128xf32>
    %406 = arith.mulf %395, %405 : vector<2x128xf32>
    %407 = arith.addf %404, %406 : vector<2x128xf32>
    %408 = math.tanh %407 : vector<2x128xf32>
    %cst_92 = arith.constant 1.000000e+00 : f32
    %409 = vector.broadcast %cst_92 : f32 to vector<2x128xf32>
    %410 = arith.subf %409, %403 : vector<2x128xf32>
    %411 = arith.mulf %410, %408 : vector<2x128xf32>
    %412 = arith.mulf %403, %384 : vector<2x128xf32>
    %413 = arith.addf %411, %412 : vector<2x128xf32>
    %c8_93 = arith.constant 8 : index
    %c0_94 = arith.constant 0 : index
    %414 = vector.load %arg10[%c8_93, %c0_94] : memref<16x128xf32, #tpu.memory_space<vmem>>, vector<2x128xf32>
    tpu.vector_store %arg10[%c8_93, %c0_94], %413 {strides = array<i32>} : memref<16x128xf32, #tpu.memory_space<vmem>>, vector<2x128xf32>,
    %415 = vector.extract_strided_slice %268 {offsets = [10, 0], sizes = [2, 384], strides = [1, 1]} : vector<16x384xf32> to vector<2x384xf32>
    %cst_95 = arith.constant dense<0.000000e+00> : vector<2x384xf32>
    %416 = tpu.matmul %413, %267, %cst_95 {dimension_numbers = #tpu.dot_dimension_numbers<[1], [0], [0], [1], [0, 0, 1, 1], [], []>} : vector<2x128xf32>, vector<128x384xf32>, vector<2x384xf32> -> vector<2x384xf32>
    %417 = vector.extract_strided_slice %415 {offsets = [0, 0], sizes = [2, 128], strides = [1, 1]} : vector<2x384xf32> to vector<2x128xf32>
    %418 = vector.extract_strided_slice %416 {offsets = [0, 0], sizes = [2, 128], strides = [1, 1]} : vector<2x384xf32> to vector<2x128xf32>
    %419 = arith.addf %417, %418 : vector<2x128xf32>
    %420 = arith.negf %419 : vector<2x128xf32>
    %421 = math.exp %420 : vector<2x128xf32>
    %cst_96 = arith.constant 1.000000e+00 : f32
    %422 = vector.broadcast %cst_96 : f32 to vector<2x128xf32>
    %423 = arith.addf %422, %421 : vector<2x128xf32>
    %424 = arith.divf %422, %423 : vector<2x128xf32>
    %425 = vector.extract_strided_slice %415 {offsets = [0, 128], sizes = [2, 128], strides = [1, 1]} : vector<2x384xf32> to vector<2x128xf32>
    %426 = vector.extract_strided_slice %416 {offsets = [0, 128], sizes = [2, 128], strides = [1, 1]} : vector<2x384xf32> to vector<2x128xf32>
    %427 = arith.addf %425, %426 : vector<2x128xf32>
    %428 = arith.negf %427 : vector<2x128xf32>
    %429 = math.exp %428 : vector<2x128xf32>
    %cst_97 = arith.constant 1.000000e+00 : f32
    %430 = vector.broadcast %cst_97 : f32 to vector<2x128xf32>
    %431 = arith.addf %430, %429 : vector<2x128xf32>
    %432 = arith.divf %430, %431 : vector<2x128xf32>
    %433 = vector.extract_strided_slice %415 {offsets = [0, 256], sizes = [2, 128], strides = [1, 1]} : vector<2x384xf32> to vector<2x128xf32>
    %434 = vector.extract_strided_slice %416 {offsets = [0, 256], sizes = [2, 128], strides = [1, 1]} : vector<2x384xf32> to vector<2x128xf32>
    %435 = arith.mulf %424, %434 : vector<2x128xf32>
    %436 = arith.addf %433, %435 : vector<2x128xf32>
    %437 = math.tanh %436 : vector<2x128xf32>
    %cst_98 = arith.constant 1.000000e+00 : f32
    %438 = vector.broadcast %cst_98 : f32 to vector<2x128xf32>
    %439 = arith.subf %438, %432 : vector<2x128xf32>
    %440 = arith.mulf %439, %437 : vector<2x128xf32>
    %441 = arith.mulf %432, %413 : vector<2x128xf32>
    %442 = arith.addf %440, %441 : vector<2x128xf32>
    %c10_99 = arith.constant 10 : index
    %c0_100 = arith.constant 0 : index
    %443 = vector.load %arg10[%c10_99, %c0_100] : memref<16x128xf32, #tpu.memory_space<vmem>>, vector<2x128xf32>
    tpu.vector_store %arg10[%c10_99, %c0_100], %442 {strides = array<i32>} : memref<16x128xf32, #tpu.memory_space<vmem>>, vector<2x128xf32>,
    %444 = vector.extract_strided_slice %268 {offsets = [12, 0], sizes = [2, 384], strides = [1, 1]} : vector<16x384xf32> to vector<2x384xf32>
    %cst_101 = arith.constant dense<0.000000e+00> : vector<2x384xf32>
    %445 = tpu.matmul %442, %267, %cst_101 {dimension_numbers = #tpu.dot_dimension_numbers<[1], [0], [0], [1], [0, 0, 1, 1], [], []>} : vector<2x128xf32>, vector<128x384xf32>, vector<2x384xf32> -> vector<2x384xf32>
    %446 = vector.extract_strided_slice %444 {offsets = [0, 0], sizes = [2, 128], strides = [1, 1]} : vector<2x384xf32> to vector<2x128xf32>
    %447 = vector.extract_strided_slice %445 {offsets = [0, 0], sizes = [2, 128], strides = [1, 1]} : vector<2x384xf32> to vector<2x128xf32>
    %448 = arith.addf %446, %447 : vector<2x128xf32>
    %449 = arith.negf %448 : vector<2x128xf32>
    %450 = math.exp %449 : vector<2x128xf32>
    %cst_102 = arith.constant 1.000000e+00 : f32
    %451 = vector.broadcast %cst_102 : f32 to vector<2x128xf32>
    %452 = arith.addf %451, %450 : vector<2x128xf32>
    %453 = arith.divf %451, %452 : vector<2x128xf32>
    %454 = vector.extract_strided_slice %444 {offsets = [0, 128], sizes = [2, 128], strides = [1, 1]} : vector<2x384xf32> to vector<2x128xf32>
    %455 = vector.extract_strided_slice %445 {offsets = [0, 128], sizes = [2, 128], strides = [1, 1]} : vector<2x384xf32> to vector<2x128xf32>
    %456 = arith.addf %454, %455 : vector<2x128xf32>
    %457 = arith.negf %456 : vector<2x128xf32>
    %458 = math.exp %457 : vector<2x128xf32>
    %cst_103 = arith.constant 1.000000e+00 : f32
    %459 = vector.broadcast %cst_103 : f32 to vector<2x128xf32>
    %460 = arith.addf %459, %458 : vector<2x128xf32>
    %461 = arith.divf %459, %460 : vector<2x128xf32>
    %462 = vector.extract_strided_slice %444 {offsets = [0, 256], sizes = [2, 128], strides = [1, 1]} : vector<2x384xf32> to vector<2x128xf32>
    %463 = vector.extract_strided_slice %445 {offsets = [0, 256], sizes = [2, 128], strides = [1, 1]} : vector<2x384xf32> to vector<2x128xf32>
    %464 = arith.mulf %453, %463 : vector<2x128xf32>
    %465 = arith.addf %462, %464 : vector<2x128xf32>
    %466 = math.tanh %465 : vector<2x128xf32>
    %cst_104 = arith.constant 1.000000e+00 : f32
    %467 = vector.broadcast %cst_104 : f32 to vector<2x128xf32>
    %468 = arith.subf %467, %461 : vector<2x128xf32>
    %469 = arith.mulf %468, %466 : vector<2x128xf32>
    %470 = arith.mulf %461, %442 : vector<2x128xf32>
    %471 = arith.addf %469, %470 : vector<2x128xf32>
    %c12_105 = arith.constant 12 : index
    %c0_106 = arith.constant 0 : index
    %472 = vector.load %arg10[%c12_105, %c0_106] : memref<16x128xf32, #tpu.memory_space<vmem>>, vector<2x128xf32>
    tpu.vector_store %arg10[%c12_105, %c0_106], %471 {strides = array<i32>} : memref<16x128xf32, #tpu.memory_space<vmem>>, vector<2x128xf32>,
    %473 = vector.extract_strided_slice %268 {offsets = [14, 0], sizes = [2, 384], strides = [1, 1]} : vector<16x384xf32> to vector<2x384xf32>
    %cst_107 = arith.constant dense<0.000000e+00> : vector<2x384xf32>
    %474 = tpu.matmul %471, %267, %cst_107 {dimension_numbers = #tpu.dot_dimension_numbers<[1], [0], [0], [1], [0, 0, 1, 1], [], []>} : vector<2x128xf32>, vector<128x384xf32>, vector<2x384xf32> -> vector<2x384xf32>
    %475 = vector.extract_strided_slice %473 {offsets = [0, 0], sizes = [2, 128], strides = [1, 1]} : vector<2x384xf32> to vector<2x128xf32>
    %476 = vector.extract_strided_slice %474 {offsets = [0, 0], sizes = [2, 128], strides = [1, 1]} : vector<2x384xf32> to vector<2x128xf32>
    %477 = arith.addf %475, %476 : vector<2x128xf32>
    %478 = arith.negf %477 : vector<2x128xf32>
    %479 = math.exp %478 : vector<2x128xf32>
    %cst_108 = arith.constant 1.000000e+00 : f32
    %480 = vector.broadcast %cst_108 : f32 to vector<2x128xf32>
    %481 = arith.addf %480, %479 : vector<2x128xf32>
    %482 = arith.divf %480, %481 : vector<2x128xf32>
    %483 = vector.extract_strided_slice %473 {offsets = [0, 128], sizes = [2, 128], strides = [1, 1]} : vector<2x384xf32> to vector<2x128xf32>
    %484 = vector.extract_strided_slice %474 {offsets = [0, 128], sizes = [2, 128], strides = [1, 1]} : vector<2x384xf32> to vector<2x128xf32>
    %485 = arith.addf %483, %484 : vector<2x128xf32>
    %486 = arith.negf %485 : vector<2x128xf32>
    %487 = math.exp %486 : vector<2x128xf32>
    %cst_109 = arith.constant 1.000000e+00 : f32
    %488 = vector.broadcast %cst_109 : f32 to vector<2x128xf32>
    %489 = arith.addf %488, %487 : vector<2x128xf32>
    %490 = arith.divf %488, %489 : vector<2x128xf32>
    %491 = vector.extract_strided_slice %473 {offsets = [0, 256], sizes = [2, 128], strides = [1, 1]} : vector<2x384xf32> to vector<2x128xf32>
    %492 = vector.extract_strided_slice %474 {offsets = [0, 256], sizes = [2, 128], strides = [1, 1]} : vector<2x384xf32> to vector<2x128xf32>
    %493 = arith.mulf %482, %492 : vector<2x128xf32>
    %494 = arith.addf %491, %493 : vector<2x128xf32>
    %495 = math.tanh %494 : vector<2x128xf32>
    %cst_110 = arith.constant 1.000000e+00 : f32
    %496 = vector.broadcast %cst_110 : f32 to vector<2x128xf32>
    %497 = arith.subf %496, %490 : vector<2x128xf32>
    %498 = arith.mulf %497, %495 : vector<2x128xf32>
    %499 = arith.mulf %490, %471 : vector<2x128xf32>
    %500 = arith.addf %498, %499 : vector<2x128xf32>
    %c14_111 = arith.constant 14 : index
    %c0_112 = arith.constant 0 : index
    %501 = vector.load %arg10[%c14_111, %c0_112] : memref<16x128xf32, #tpu.memory_space<vmem>>, vector<2x128xf32>
    tpu.vector_store %arg10[%c14_111, %c0_112], %500 {strides = array<i32>} : memref<16x128xf32, #tpu.memory_space<vmem>>, vector<2x128xf32>,
    %c0_113 = arith.constant 0 : index
    %c0_114 = arith.constant 0 : index
    %502 = vector.load %arg10[%c0_113, %c0_114] : memref<16x128xf32, #tpu.memory_space<vmem>>, vector<16x128xf32>
    %cst_115 = arith.constant dense<0.000000e+00> : vector<16xf32>
    %503 = vector.multi_reduction <add>, %502, %cst_115 [1] : vector<16x128xf32> to vector<16xf32>
    %504 = vector.shape_cast %503 : vector<16xf32> to vector<16x1xf32>
    %cst_116 = arith.constant 0.00999999977 : f32
    %505 = vector.broadcast %cst_116 : f32 to vector<16x1xf32>
    %506 = arith.mulf %504, %505 : vector<16x1xf32>
    %507 = vector.broadcast %506 : vector<16x1xf32> to vector<16x128xf32>
    %508 = arith.subf %502, %507 : vector<16x128xf32>
    %509 = vector.broadcast %4 : vector<1x128xf32> to vector<16x128xf32>
    %510 = arith.mulf %508, %509 : vector<16x128xf32>
    %511 = arith.mulf %510, %510 : vector<16x128xf32>
    %cst_117 = arith.constant dense<0.000000e+00> : vector<16xf32>
    %512 = vector.multi_reduction <add>, %511, %cst_117 [1] : vector<16x128xf32> to vector<16xf32>
    %513 = vector.shape_cast %512 : vector<16xf32> to vector<16x1xf32>
    %cst_118 = arith.constant 0.00999999977 : f32
    %514 = vector.broadcast %cst_118 : f32 to vector<16x1xf32>
    %515 = arith.mulf %513, %514 : vector<16x1xf32>
    %cst_119 = arith.constant 9.99999974E-6 : f32
    %516 = vector.broadcast %cst_119 : f32 to vector<16x1xf32>
    %517 = arith.addf %515, %516 : vector<16x1xf32>
    %518 = math.rsqrt %517 : vector<16x1xf32>
    %519 = vector.broadcast %518 : vector<16x1xf32> to vector<16x128xf32>
    %520 = arith.mulf %510, %519 : vector<16x128xf32>
    %c0_120 = arith.constant 0 : index
    %c0_121 = arith.constant 0 : index
    %521 = vector.load %arg7[%c0_120, %c0_121] : memref<128x128xf32, #tpu.memory_space<vmem>>, vector<128x128xf32>
    %cst_122 = arith.constant dense<0.000000e+00> : vector<16x128xf32>
    %522 = tpu.matmul %520, %521, %cst_122 {dimension_numbers = #tpu.dot_dimension_numbers<[1], [0], [0], [1], [0, 0, 1, 1], [], []>} : vector<16x128xf32>, vector<128x128xf32>, vector<16x128xf32> -> vector<16x128xf32>
    %c0_123 = arith.constant 0 : index
    %c0_124 = arith.constant 0 : index
    %523 = vector.load %arg8[%c0_123, %c0_124] : memref<1x128xf32, #tpu.memory_space<vmem>>, vector<1x128xf32>
    %524 = vector.broadcast %523 : vector<1x128xf32> to vector<16x128xf32>
    %525 = arith.addf %522, %524 : vector<16x128xf32>
    %c0_125 = arith.constant 0 : index
    %c0_126 = arith.constant 0 : index
    %526 = vector.load %arg9[%c0_125, %c0_126] : memref<16x128xf32, #tpu.memory_space<vmem>>, vector<16x128xf32>
    tpu.vector_store %arg9[%c0_125, %c0_126], %525 {strides = array<i32>} : memref<16x128xf32, #tpu.memory_space<vmem>>, vector<16x128xf32>,
    return
  }
}

</mosaic_0001>

<llo_original>
// kernel: predictor_forward.1
$region0: #{predictor_forward.1}
  #allocation0 [shape = 'u32[]', space=smem, size = 0x4, offset = 0x4, fixed_abs, tag = 'smem constant byte address 0x4 - core index']
  #allocation1 [shape = 'u32[144,128]{1,0:T(1,128)}', space=vmem, size = 0x12000, scoped, tag = 'internal scratch']
  #allocation2 [shape = 'f32[16,128]{1,0:T(8,128)}', space=vmem, size = 0x2000, scoped, tag = 'scratch operand']
  %s0 = inlined_call_operand.vmem [shape: f32[16,16], index: 0, kind: input, shape index: {}]
  %s1 = inlined_call_operand.vmem [shape: f32[16,384], index: 1, kind: input, shape index: {}]
  %s2 = inlined_call_operand.vmem [shape: f32[128,384], index: 2, kind: input, shape index: {}]
  %s3 = inlined_call_operand.vmem [shape: f32[128,8], index: 3, kind: input, shape index: {}]
  %s4 = inlined_call_operand.vmem [shape: f32[1,8], index: 4, kind: input, shape index: {}]
  %s5 = inlined_call_operand.vmem [shape: f32[8,384], index: 5, kind: input, shape index: {}]
  %s6 = inlined_call_operand.vmem [shape: f32[128,384], index: 6, kind: input, shape index: {}]
  %s7 = inlined_call_operand.vmem [shape: f32[128,128], index: 7, kind: input, shape index: {}]
  %s8 = inlined_call_operand.vmem [shape: f32[1,128], index: 8, kind: input, shape index: {}]
  %s9 = inlined_call_operand.vmem [shape: f32[16,128], index: 9, kind: output, shape index: {}]
  %s10 = sld [smem:[#allocation0]]
  $region46: #{predictor_forward.1} parent=0
    _
  %s12 = ssub.s32 1, %s10
  %s13 = scalar_select 0, %s12, %s10
  // Predicated region
  $region2: #{predictor_forward.1} parent=0 // pred_check
    _
  $region3: #{predictor_forward.1} parent=0 // pred_check_branch
    %15 = sbr.rel (0) target = $region5
  $region4: #{predictor_forward.1} parent=0 // pred_region
    _
  $region5: #{predictor_forward.1} parent=0 // pred_fallthru
    _
  // Predicated region
  $region6: #{predictor_forward.1} parent=0 // pred_check
    _
  $region7: #{predictor_forward.1} parent=0 // pred_check_branch
    %17 = sbr.rel (0) target = $region9
  $region8: #{predictor_forward.1} parent=0 // pred_region
    _
  $region9: #{predictor_forward.1} parent=0 // pred_fallthru
    _
  // Predicated region
  $region10: #{predictor_forward.1} parent=0 // pred_check
    _
  $region11: #{predictor_forward.1} parent=0 // pred_check_branch
    %19 = sbr.rel (0) target = $region13
  $region12: #{predictor_forward.1} parent=0 // pred_region
    _
  $region13: #{predictor_forward.1} parent=0 // pred_fallthru
    _
  // Predicated region
  $region14: #{predictor_forward.1} parent=0 // pred_check
    _
  $region15: #{predictor_forward.1} parent=0 // pred_check_branch
    %21 = sbr.rel (0) target = $region17
  $region16: #{predictor_forward.1} parent=0 // pred_region
    _
  $region17: #{predictor_forward.1} parent=0 // pred_fallthru
    _
  // Predicated region
  $region18: #{predictor_forward.1} parent=0 // pred_check
    _
  $region19: #{predictor_forward.1} parent=0 // pred_check_branch
    %23 = sbr.rel (0) target = $region21
  $region20: #{predictor_forward.1} parent=0 // pred_region
    _
  $region21: #{predictor_forward.1} parent=0 // pred_fallthru
    _
  // Predicated region
  $region22: #{predictor_forward.1} parent=0 // pred_check
    _
  $region23: #{predictor_forward.1} parent=0 // pred_check_branch
    %25 = sbr.rel (0) target = $region25
  $region24: #{predictor_forward.1} parent=0 // pred_region
    _
  $region25: #{predictor_forward.1} parent=0 // pred_fallthru
    _
  // Predicated region
  $region26: #{predictor_forward.1} parent=0 // pred_check
    _
  $region27: #{predictor_forward.1} parent=0 // pred_check_branch
    %27 = sbr.rel (0) target = $region29
  $region28: #{predictor_forward.1} parent=0 // pred_region
    _
  $region29: #{predictor_forward.1} parent=0 // pred_fallthru
    _
  // Predicated region
  $region30: #{predictor_forward.1} parent=0 // pred_check
    _
  $region31: #{predictor_forward.1} parent=0 // pred_check_branch
    %29 = sbr.rel (0) target = $region33
  $region32: #{predictor_forward.1} parent=0 // pred_region
    _
  $region33: #{predictor_forward.1} parent=0 // pred_fallthru
    _
  // Predicated region
  $region34: #{predictor_forward.1} parent=0 // pred_check
    _
  $region35: #{predictor_forward.1} parent=0 // pred_check_branch
    %31 = sbr.rel (0) target = $region37
  $region36: #{predictor_forward.1} parent=0 // pred_region
    _
  $region37: #{predictor_forward.1} parent=0 // pred_fallthru
    _
  %v32 = vlaneseq
  %v33 = vand.u32 %v32, 127
  %vm34 = vcmp.lt.s32.totalorder %v33, 100
  %v35 = vsel %vm34, 1, 0
  %v36 = vcvt.s32.f32 %v35
  %v37 = vld [vmem:[%s0] sm:$0xff]
  %v38 = vld [vmem:[%s0 + $0x8] sm:$0xff]
  %v39 = vld [vmem:[%s1] sm:$0xff]
  %v40 = vld [vmem:[%s1 + $0x8] sm:$0xff]
  %v41 = vld [vmem:[%s1 + $0x10] sm:$0xff]
  %v42 = vld [vmem:[%s1 + $0x18] sm:$0xff]
  %v43 = vld [vmem:[%s1 + $0x20] sm:$0xff]
  %v44 = vld [vmem:[%s1 + $0x28] sm:$0xff]
  %v45 = vld [vmem:[%s2] sm:$0xff]
  %v46 = vld [vmem:[%s2 + $0x8] sm:$0xff]
  %v47 = vld [vmem:[%s2 + $0x10] sm:$0xff]
  %v48 = vld [vmem:[%s2 + $0x18] sm:$0xff]
  %v49 = vld [vmem:[%s2 + $0x20] sm:$0xff]
  %v50 = vld [vmem:[%s2 + $0x28] sm:$0xff]
  %v51 = vld [vmem:[%s2 + $0x30] sm:$0xff]
  %v52 = vld [vmem:[%s2 + $0x38] sm:$0xff]
  %v53 = vld [vmem:[%s2 + $0x40] sm:$0xff]
  %v54 = vld [vmem:[%s2 + $0x48] sm:$0xff]
  %v55 = vld [vmem:[%s2 + $0x50] sm:$0xff]
  %v56 = vld [vmem:[%s2 + $0x58] sm:$0xff]
  %v57 = vld [vmem:[%s2 + $0x60] sm:$0xff]
  %v58 = vld [vmem:[%s2 + $0x68] sm:$0xff]
  %v59 = vld [vmem:[%s2 + $0x70] sm:$0xff]
  %v60 = vld [vmem:[%s2 + $0x78] sm:$0xff]
  %v61 = vld [vmem:[%s2 + $0x80] sm:$0xff]
  %v62 = vld [vmem:[%s2 + $0x88] sm:$0xff]
  %v63 = vld [vmem:[%s2 + $0x90] sm:$0xff]
  %v64 = vld [vmem:[%s2 + $0x98] sm:$0xff]
  %v65 = vld [vmem:[%s2 + $0xa0] sm:$0xff]
  %v66 = vld [vmem:[%s2 + $0xa8] sm:$0xff]
  %v67 = vld [vmem:[%s2 + $0xb0] sm:$0xff]
  %v68 = vld [vmem:[%s2 + $0xb8] sm:$0xff]
  %v69 = vld [vmem:[%s2 + $0xc0] sm:$0xff]
  %v70 = vld [vmem:[%s2 + $0xc8] sm:$0xff]
  %v71 = vld [vmem:[%s2 + $0xd0] sm:$0xff]
  %v72 = vld [vmem:[%s2 + $0xd8] sm:$0xff]
  %v73 = vld [vmem:[%s2 + $0xe0] sm:$0xff]
  %v74 = vld [vmem:[%s2 + $0xe8] sm:$0xff]
  %v75 = vld [vmem:[%s2 + $0xf0] sm:$0xff]
  %v76 = vld [vmem:[%s2 + $0xf8] sm:$0xff]
  %v77 = vld [vmem:[%s2 + $0x100] sm:$0xff]
  %v78 = vld [vmem:[%s2 + $0x108] sm:$0xff]
  %v79 = vld [vmem:[%s2 + $0x110] sm:$0xff]
  %v80 = vld [vmem:[%s2 + $0x118] sm:$0xff]
  %v81 = vld [vmem:[%s2 + $0x120] sm:$0xff]
  %v82 = vld [vmem:[%s2 + $0x128] sm:$0xff]
  %v83 = vld [vmem:[%s2 + $0x130] sm:$0xff]
  %v84 = vld [vmem:[%s2 + $0x138] sm:$0xff]
  %v85 = vld [vmem:[%s2 + $0x140] sm:$0xff]
  %v86 = vld [vmem:[%s2 + $0x148] sm:$0xff]
  %v87 = vld [vmem:[%s2 + $0x150] sm:$0xff]
  %v88 = vld [vmem:[%s2 + $0x158] sm:$0xff]
  %v89 = vld [vmem:[%s2 + $0x160] sm:$0xff]
  %v90 = vld [vmem:[%s2 + $0x168] sm:$0xff]
  %v91 = vld [vmem:[%s2 + $0x170] sm:$0xff]
  %v92 = vld [vmem:[%s2 + $0x178] sm:$0xff]
  %vm93 = vcmask 130048
  %v95 = vsel %vm93, %v37, 0
  %v98 = vsel %vm93, %v38, 0
  %100 = vmatprep.subr.mxu0 %v40
  %101 = vmatpush1.msra.mxu0 %v39
  %102 = vmatprep.subr.mxu0 %v43
  %103 = vmatpush1.msra.mxu0 %v42
  %104 = vmatprep.subr.mxu0 0.0
  %105 = vmatpush1.msra.mxu0 0.0
  %106 = vmatprep.subr.mxu0 0.0
  %107 = vmatpush1.msra.mxu0 0.0
  %108 = vmatprep.subr.mxu0 0.0
  %109 = vmatpush1.msra.mxu0 0.0
  %110 = vmatprep.subr.mxu0 0.0
  %111 = vmatpush1.msra.mxu0 0.0
  %112 = vmatprep.subr.mxu0 0.0
  %113 = vmatpush1.msra.mxu0 0.0
  %114 = vmatprep.subr.mxu0 0.0
  %115 = vmatpush1.msra.mxu0 0.0
  %116 = vmatprep.subr.mxu0 0.0
  %117 = vmatpush1.msra.mxu0 0.0
  %118 = vmatprep.subr.mxu0 0.0
  %119 = vmatpush1.msra.mxu0 0.0
  %120 = vmatprep.subr.mxu0 0.0
  %121 = vmatpush1.msra.mxu0 0.0
  %122 = vmatprep.subr.mxu0 0.0
  %123 = vmatpush1.msra.mxu0 0.0
  %124 = vmatprep.subr.mxu0 0.0
  %125 = vmatpush1.msra.mxu0 0.0
  %126 = vmatprep.subr.mxu0 0.0
  %127 = vmatpush1.msra.mxu0 0.0
  %128 = vmatprep.subr.mxu0 0.0
  %129 = vmatpush1.msra.mxu0 0.0
  %130 = vmatprep.subr.mxu0 0.0
  %131 = vmatpush1.msra.mxu0 0.0
  %132 = vmatprep.subr.mxu0 0.0
  %133 = vmatpush1.msra.mxu0 0.0
  %134 = vmatprep.subr.mxu0 0.0
  %135 = vmatpush1.msra.mxu0 0.0
  %136 = vmatprep.subr.mxu0 0.0
  %137 = vmatpush1.msra.mxu0 0.0
  %138 = vmatprep.subr.mxu0 0.0
  %139 = vmatpush1.msra.mxu0 0.0
  %140 = vmatprep.subr.mxu0 0.0
  %141 = vmatpush1.msra.mxu0 0.0
  %142 = vmatprep.subr.mxu0 0.0
  %143 = vmatpush1.msra.mxu0 0.0
  %144 = vmatprep.subr.mxu0 0.0
  %145 = vmatpush1.msra.mxu0 0.0
  %146 = vmatprep.subr.mxu0 0.0
  %147 = vmatpush1.msra.mxu0 0.0
  %148 = vmatprep.subr.mxu0 0.0
  %149 = vmatpush1.msra.mxu0 0.0
  %150 = vmatprep.subr.mxu0 0.0
  %151 = vmatpush1.msra.mxu0 0.0
  %152 = vmatprep.subr.mxu0 0.0
  %153 = vmatpush1.msra.mxu0 0.0
  %154 = vmatprep.subr.mxu0 0.0
  %155 = vmatpush1.msra.mxu0 0.0
  %156 = vmatprep.subr.mxu0 0.0
  %157 = vmatpush1.msra.mxu0 0.0
  %158 = vmatprep.subr.mxu0 0.0
  %159 = vmatpush1.msra.mxu0 0.0
  %160 = vmatprep.subr.mxu0 0.0
  %161 = vmatpush1.msra.mxu0 0.0
  %162 = vmatprep.subr.mxu0 0.0
  %163 = vmatpush1.msra.mxu0 0.0
  %164 = vmatprep.mubr.f32.mxu0 0.0
  %165 = vmatmul.mubr.f32.gmra.mrb[0].mxu0 %v95
  %v166 = vpop.f32.mrb[0].mxu0
  %v167 = vadd.f32 0.0, %v166
  %v168 = vpop.f32.mrb[0].mxu0
  %v169 = vadd.f32 0.0, %v168
  %170 = vmatprep.mubr.f32.mxu0 0.0
  %171 = vmatmul.mubr.f32.gmra.mrb[0].mxu0 %v98
  %v172 = vpop.f32.mrb[0].mxu0
  %v173 = vadd.f32 0.0, %v172
  %v174 = vpop.f32.mrb[0].mxu0
  %v175 = vadd.f32 0.0, %v174
  %176 = vdwg.mxu0
  %177 = vmatprep.subr.mxu0 0.0
  %178 = vmatpush1.msra.mxu0 %v41
  %179 = vmatprep.subr.mxu0 0.0
  %180 = vmatpush1.msra.mxu0 %v44
  %181 = vmatprep.subr.mxu0 0.0
  %182 = vmatpush1.msra.mxu0 0.0
  %183 = vmatprep.subr.mxu0 0.0
  %184 = vmatpush1.msra.mxu0 0.0
  %185 = vmatprep.subr.mxu0 0.0
  %186 = vmatpush1.msra.mxu0 0.0
  %187 = vmatprep.subr.mxu0 0.0
  %188 = vmatpush1.msra.mxu0 0.0
  %189 = vmatprep.subr.mxu0 0.0
  %190 = vmatpush1.msra.mxu0 0.0
  %191 = vmatprep.subr.mxu0 0.0
  %192 = vmatpush1.msra.mxu0 0.0
  %193 = vmatprep.subr.mxu0 0.0
  %194 = vmatpush1.msra.mxu0 0.0
  %195 = vmatprep.subr.mxu0 0.0
  %196 = vmatpush1.msra.mxu0 0.0
  %197 = vmatprep.subr.mxu0 0.0
  %198 = vmatpush1.msra.mxu0 0.0
  %199 = vmatprep.subr.mxu0 0.0
  %200 = vmatpush1.msra.mxu0 0.0
  %201 = vmatprep.subr.mxu0 0.0
  %202 = vmatpush1.msra.mxu0 0.0
  %203 = vmatprep.subr.mxu0 0.0
  %204 = vmatpush1.msra.mxu0 0.0
  %205 = vmatprep.subr.mxu0 0.0
  %206 = vmatpush1.msra.mxu0 0.0
  %207 = vmatprep.subr.mxu0 0.0
  %208 = vmatpush1.msra.mxu0 0.0
  %209 = vmatprep.subr.mxu0 0.0
  %210 = vmatpush1.msra.mxu0 0.0
  %211 = vmatprep.subr.mxu0 0.0
  %212 = vmatpush1.msra.mxu0 0.0
  %213 = vmatprep.subr.mxu0 0.0
  %214 = vmatpush1.msra.mxu0 0.0
  %215 = vmatprep.subr.mxu0 0.0
  %216 = vmatpush1.msra.mxu0 0.0
  %217 = vmatprep.subr.mxu0 0.0
  %218 = vmatpush1.msra.mxu0 0.0
  %219 = vmatprep.subr.mxu0 0.0
  %220 = vmatpush1.msra.mxu0 0.0
  %221 = vmatprep.subr.mxu0 0.0
  %222 = vmatpush1.msra.mxu0 0.0
  %223 = vmatprep.subr.mxu0 0.0
  %224 = vmatpush1.msra.mxu0 0.0
  %225 = vmatprep.subr.mxu0 0.0
  %226 = vmatpush1.msra.mxu0 0.0
  %227 = vmatprep.subr.mxu0 0.0
  %228 = vmatpush1.msra.mxu0 0.0
  %229 = vmatprep.subr.mxu0 0.0
  %230 = vmatpush1.msra.mxu0 0.0
  %231 = vmatprep.subr.mxu0 0.0
  %232 = vmatpush1.msra.mxu0 0.0
  %233 = vmatprep.subr.mxu0 0.0
  %234 = vmatpush1.msra.mxu0 0.0
  %235 = vmatprep.subr.mxu0 0.0
  %236 = vmatpush1.msra.mxu0 0.0
  %237 = vmatprep.subr.mxu0 0.0
  %238 = vmatpush1.msra.mxu0 0.0
  %239 = vmatprep.subr.mxu0 0.0
  %240 = vmatpush1.msra.mxu0 0.0
  %241 = vmatprep.mubr.f32.mxu0 0.0
  %242 = vmatmul.mubr.f32.gmra.mrb[0].mxu0 %v95
  %v243 = vpop.f32.mrb[0].mxu0
  %v244 = vadd.f32 0.0, %v243
  %v245 = vpop.f32.mrb[0].mxu0
  %246 = vmatprep.mubr.f32.mxu0 0.0
  %247 = vmatmul.mubr.f32.gmra.mrb[0].mxu0 %v98
  %v248 = vpop.f32.mrb[0].mxu0
  %v249 = vadd.f32 0.0, %v248
  %v250 = vpop.f32.mrb[0].mxu0
  %251 = vdwg.mxu0
  %252 = vmatprep.subr.mxu0 %v46
  %253 = vmatpush1.msra.mxu0 %v45
  %254 = vmatprep.subr.mxu0 %v49
  %255 = vmatpush1.msra.mxu0 %v48
  %256 = vmatprep.subr.mxu0 %v52
  %257 = vmatpush1.msra.mxu0 %v51
  %258 = vmatprep.subr.mxu0 %v55
  %259 = vmatpush1.msra.mxu0 %v54
  %260 = vmatprep.subr.mxu0 %v58
  %261 = vmatpush1.msra.mxu0 %v57
  %262 = vmatprep.subr.mxu0 %v61
  %263 = vmatpush1.msra.mxu0 %v60
  %264 = vmatprep.subr.mxu0 %v64
  %265 = vmatpush1.msra.mxu0 %v63
  %266 = vmatprep.subr.mxu0 %v67
  %267 = vmatpush1.msra.mxu0 %v66
  %268 = vmatprep.subr.mxu0 %v70
  %269 = vmatpush1.msra.mxu0 %v69
  %270 = vmatprep.subr.mxu0 %v73
  %271 = vmatpush1.msra.mxu0 %v72
  %272 = vmatprep.subr.mxu0 %v76
  %273 = vmatpush1.msra.mxu0 %v75
  %274 = vmatprep.subr.mxu0 %v79
  %275 = vmatpush1.msra.mxu0 %v78
  %276 = vmatprep.subr.mxu0 %v82
  %277 = vmatpush1.msra.mxu0 %v81
  %278 = vmatprep.subr.mxu0 %v85
  %279 = vmatpush1.msra.mxu0 %v84
  %280 = vmatprep.subr.mxu0 %v88
  %281 = vmatpush1.msra.mxu0 %v87
  %282 = vmatprep.subr.mxu0 %v91
  %283 = vmatpush1.msra.mxu0 %v90
  %284 = vmatprep.subr.mxu0 0.0
  %285 = vmatpush1.msra.mxu0 0.0
  %286 = vmatprep.subr.mxu0 0.0
  %287 = vmatpush1.msra.mxu0 0.0
  %288 = vmatprep.subr.mxu0 0.0
  %289 = vmatpush1.msra.mxu0 0.0
  %290 = vmatprep.subr.mxu0 0.0
  %291 = vmatpush1.msra.mxu0 0.0
  %292 = vmatprep.subr.mxu0 0.0
  %293 = vmatpush1.msra.mxu0 0.0
  %294 = vmatprep.subr.mxu0 0.0
  %295 = vmatpush1.msra.mxu0 0.0
  %296 = vmatprep.subr.mxu0 0.0
  %297 = vmatpush1.msra.mxu0 0.0
  %298 = vmatprep.subr.mxu0 0.0
  %299 = vmatpush1.msra.mxu0 0.0
  %300 = vmatprep.subr.mxu0 0.0
  %301 = vmatpush1.msra.mxu0 0.0
  %302 = vmatprep.subr.mxu0 0.0
  %303 = vmatpush1.msra.mxu0 0.0
  %304 = vmatprep.subr.mxu0 0.0
  %305 = vmatpush1.msra.mxu0 0.0
  %306 = vmatprep.subr.mxu0 0.0
  %307 = vmatpush1.msra.mxu0 0.0
  %308 = vmatprep.subr.mxu0 0.0
  %309 = vmatpush1.msra.mxu0 0.0
  %310 = vmatprep.subr.mxu0 0.0
  %311 = vmatpush1.msra.mxu0 0.0
  %312 = vmatprep.subr.mxu0 0.0
  %313 = vmatpush1.msra.mxu0 0.0
  %314 = vmatprep.subr.mxu0 0.0
  %315 = vmatpush1.msra.mxu0 0.0
  %316 = vmatprep.mubr.f32.mxu0 0.0
  %317 = vmatmul.mubr.f32.gmra.mrb[0].mxu0 0.0
  %v318 = vpop.f32.mrb[0].mxu0
  %v319 = vadd.f32 0.0, %v318
  %v320 = vpop.f32.mrb[0].mxu0
  %v321 = vadd.f32 0.0, %v320
  %322 = vdwg.mxu0
  %323 = vmatprep.subr.mxu0 0.0
  %324 = vmatpush1.msra.mxu0 %v47
  %325 = vmatprep.subr.mxu0 0.0
  %326 = vmatpush1.msra.mxu0 %v50
  %327 = vmatprep.subr.mxu0 0.0
  %328 = vmatpush1.msra.mxu0 %v53
  %329 = vmatprep.subr.mxu0 0.0
  %330 = vmatpush1.msra.mxu0 %v56
  %331 = vmatprep.subr.mxu0 0.0
  %332 = vmatpush1.msra.mxu0 %v59
  %333 = vmatprep.subr.mxu0 0.0
  %334 = vmatpush1.msra.mxu0 %v62
  %335 = vmatprep.subr.mxu0 0.0
  %336 = vmatpush1.msra.mxu0 %v65
  %337 = vmatprep.subr.mxu0 0.0
  %338 = vmatpush1.msra.mxu0 %v68
  %339 = vmatprep.subr.mxu0 0.0
  %340 = vmatpush1.msra.mxu0 %v71
  %341 = vmatprep.subr.mxu0 0.0
  %342 = vmatpush1.msra.mxu0 %v74
  %343 = vmatprep.subr.mxu0 0.0
  %344 = vmatpush1.msra.mxu0 %v77
  %345 = vmatprep.subr.mxu0 0.0
  %346 = vmatpush1.msra.mxu0 %v80
  %347 = vmatprep.subr.mxu0 0.0
  %348 = vmatpush1.msra.mxu0 %v83
  %349 = vmatprep.subr.mxu0 0.0
  %350 = vmatpush1.msra.mxu0 %v86
  %351 = vmatprep.subr.mxu0 0.0
  %352 = vmatpush1.msra.mxu0 %v89
  %353 = vmatprep.subr.mxu0 0.0
  %354 = vmatpush1.msra.mxu0 %v92
  %355 = vmatprep.subr.mxu0 0.0
  %356 = vmatpush1.msra.mxu0 0.0
  %357 = vmatprep.subr.mxu0 0.0
  %358 = vmatpush1.msra.mxu0 0.0
  %359 = vmatprep.subr.mxu0 0.0
  %360 = vmatpush1.msra.mxu0 0.0
  %361 = vmatprep.subr.mxu0 0.0
  %362 = vmatpush1.msra.mxu0 0.0
  %363 = vmatprep.subr.mxu0 0.0
  %364 = vmatpush1.msra.mxu0 0.0
  %365 = vmatprep.subr.mxu0 0.0
  %366 = vmatpush1.msra.mxu0 0.0
  %367 = vmatprep.subr.mxu0 0.0
  %368 = vmatpush1.msra.mxu0 0.0
  %369 = vmatprep.subr.mxu0 0.0
  %370 = vmatpush1.msra.mxu0 0.0
  %371 = vmatprep.subr.mxu0 0.0
  %372 = vmatpush1.msra.mxu0 0.0
  %373 = vmatprep.subr.mxu0 0.0
  %374 = vmatpush1.msra.mxu0 0.0
  %375 = vmatprep.subr.mxu0 0.0
  %376 = vmatpush1.msra.mxu0 0.0
  %377 = vmatprep.subr.mxu0 0.0
  %378 = vmatpush1.msra.mxu0 0.0
  %379 = vmatprep.subr.mxu0 0.0
  %380 = vmatpush1.msra.mxu0 0.0
  %381 = vmatprep.subr.mxu0 0.0
  %382 = vmatpush1.msra.mxu0 0.0
  %383 = vmatprep.subr.mxu0 0.0
  %384 = vmatpush1.msra.mxu0 0.0
  %385 = vmatprep.subr.mxu0 0.0
  %386 = vmatpush1.msra.mxu0 0.0
  %387 = vmatprep.mubr.f32.mxu0 0.0
  %388 = vmatmul.mubr.f32.gmra.mrb[0].mxu0 0.0
  %v389 = vpop.f32.mrb[0].mxu0
  %v390 = vadd.f32 0.0, %v389
  %v391 = vpop.f32.mrb[0].mxu0
  %392 = vdwg.mxu0
  %v393 = vadd.f32 %v167, %v319
  %v394 = vxor.u32 %v393, 2147483648
  %v395 = vmul.f32 %v394, 1.442695
  %v396 = vpow.pop %v395
  %v397 = vadd.f32 %v396, 1.0
  %v398 = vrcp.pop %v397
  %v399 = vmul.f32 1.0, %v398
  %v400 = vadd.f32 %v169, %v321
  %v401 = vxor.u32 %v400, 2147483648
  %v402 = vmul.f32 %v401, 1.442695
  %v403 = vpow.pop %v402
  %v404 = vadd.f32 %v403, 1.0
  %v405 = vrcp.pop %v404
  %v406 = vmul.f32 1.0, %v405
  %v407 = vmul.f32 %v399, %v390
  %v408 = vadd.f32 %v244, %v407
  %v409 = vtanh.pop %v408
  %v410 = vsub.f32 1.0, %v406
  %v411 = vmul.f32 %v410, %v409
  %v412 = vmul.f32 %v406, 0.0
  %v413 = vadd.f32 %v411, %v412
  %414 = vst [vmem:[#allocation2] sm:$0x3] %v413
  %415 = vmatprep.subr.mxu0 %v46
  %416 = vmatpush1.msra.mxu0 %v45
  %417 = vmatprep.subr.mxu0 %v49
  %418 = vmatpush1.msra.mxu0 %v48
  %419 = vmatprep.subr.mxu0 %v52
  %420 = vmatpush1.msra.mxu0 %v51
  %421 = vmatprep.subr.mxu0 %v55
  %422 = vmatpush1.msra.mxu0 %v54
  %423 = vmatprep.subr.mxu0 %v58
  %424 = vmatpush1.msra.mxu0 %v57
  %425 = vmatprep.subr.mxu0 %v61
  %426 = vmatpush1.msra.mxu0 %v60
  %427 = vmatprep.subr.mxu0 %v64
  %428 = vmatpush1.msra.mxu0 %v63
  %429 = vmatprep.subr.mxu0 %v67
  %430 = vmatpush1.msra.mxu0 %v66
  %431 = vmatprep.subr.mxu0 %v70
  %432 = vmatpush1.msra.mxu0 %v69
  %433 = vmatprep.subr.mxu0 %v73
  %434 = vmatpush1.msra.mxu0 %v72
  %435 = vmatprep.subr.mxu0 %v76
  %436 = vmatpush1.msra.mxu0 %v75
  %437 = vmatprep.subr.mxu0 %v79
  %438 = vmatpush1.msra.mxu0 %v78
  %439 = vmatprep.subr.mxu0 %v82
  %440 = vmatpush1.msra.mxu0 %v81
  %441 = vmatprep.subr.mxu0 %v85
  %442 = vmatpush1.msra.mxu0 %v84
  %443 = vmatprep.subr.mxu0 %v88
  %444 = vmatpush1.msra.mxu0 %v87
  %445 = vmatprep.subr.mxu0 %v91
  %446 = vmatpush1.msra.mxu0 %v90
  %447 = vmatprep.subr.mxu0 0.0
  %448 = vmatpush1.msra.mxu0 0.0
  %449 = vmatprep.subr.mxu0 0.0
  %450 = vmatpush1.msra.mxu0 0.0
  %451 = vmatprep.subr.mxu0 0.0
  %452 = vmatpush1.msra.mxu0 0.0
  %453 = vmatprep.subr.mxu0 0.0
  %454 = vmatpush1.msra.mxu0 0.0
  %455 = vmatprep.subr.mxu0 0.0
  %456 = vmatpush1.msra.mxu0 0.0
  %457 = vmatprep.subr.mxu0 0.0
  %458 = vmatpush1.msra.mxu0 0.0
  %459 = vmatprep.subr.mxu0 0.0
  %460 = vmatpush1.msra.mxu0 0.0
  %461 = vmatprep.subr.mxu0 0.0
  %462 = vmatpush1.msra.mxu0 0.0
  %463 = vmatprep.subr.mxu0 0.0
  %464 = vmatpush1.msra.mxu0 0.0
  %465 = vmatprep.subr.mxu0 0.0
  %466 = vmatpush1.msra.mxu0 0.0
  %467 = vmatprep.subr.mxu0 0.0
  %468 = vmatpush1.msra.mxu0 0.0
  %469 = vmatprep.subr.mxu0 0.0
  %470 = vmatpush1.msra.mxu0 0.0
  %471 = vmatprep.subr.mxu0 0.0
  %472 = vmatpush1.msra.mxu0 0.0
  %473 = vmatprep.subr.mxu0 0.0
  %474 = vmatpush1.msra.mxu0 0.0
  %475 = vmatprep.subr.mxu0 0.0
  %476 = vmatpush1.msra.mxu0 0.0
  %477 = vmatprep.subr.mxu0 0.0
  %478 = vmatpush1.msra.mxu0 0.0
  %479 = vmatprep.mubr.f32.mxu0 0.0
  %480 = vmatmul.mubr.f32.gmra.mrb[0].mxu0 %v413
  %v481 = vpop.f32.mrb[0].mxu0
  %v482 = vadd.f32 0.0, %v481
  %v483 = vpop.f32.mrb[0].mxu0
  %v484 = vadd.f32 0.0, %v483
  %485 = vdwg.mxu0
  %486 = vmatprep.subr.mxu0 0.0
  %487 = vmatpush1.msra.mxu0 %v47
  %488 = vmatprep.subr.mxu0 0.0
  %489 = vmatpush1.msra.mxu0 %v50
  %490 = vmatprep.subr.mxu0 0.0
  %491 = vmatpush1.msra.mxu0 %v53
  %492 = vmatprep.subr.mxu0 0.0
  %493 = vmatpush1.msra.mxu0 %v56
  %494 = vmatprep.subr.mxu0 0.0
  %495 = vmatpush1.msra.mxu0 %v59
  %496 = vmatprep.subr.mxu0 0.0
  %497 = vmatpush1.msra.mxu0 %v62
  %498 = vmatprep.subr.mxu0 0.0
  %499 = vmatpush1.msra.mxu0 %v65
  %500 = vmatprep.subr.mxu0 0.0
  %501 = vmatpush1.msra.mxu0 %v68
  %502 = vmatprep.subr.mxu0 0.0
  %503 = vmatpush1.msra.mxu0 %v71
  %504 = vmatprep.subr.mxu0 0.0
  %505 = vmatpush1.msra.mxu0 %v74
  %506 = vmatprep.subr.mxu0 0.0
  %507 = vmatpush1.msra.mxu0 %v77
  %508 = vmatprep.subr.mxu0 0.0
  %509 = vmatpush1.msra.mxu0 %v80
  %510 = vmatprep.subr.mxu0 0.0
  %511 = vmatpush1.msra.mxu0 %v83
  %512 = vmatprep.subr.mxu0 0.0
  %513 = vmatpush1.msra.mxu0 %v86
  %514 = vmatprep.subr.mxu0 0.0
  %515 = vmatpush1.msra.mxu0 %v89
  %516 = vmatprep.subr.mxu0 0.0
  %517 = vmatpush1.msra.mxu0 %v92
  %518 = vmatprep.subr.mxu0 0.0
  %519 = vmatpush1.msra.mxu0 0.0
  %520 = vmatprep.subr.mxu0 0.0
  %521 = vmatpush1.msra.mxu0 0.0
  %522 = vmatprep.subr.mxu0 0.0
  %523 = vmatpush1.msra.mxu0 0.0
  %524 = vmatprep.subr.mxu0 0.0
  %525 = vmatpush1.msra.mxu0 0.0
  %526 = vmatprep.subr.mxu0 0.0
  %527 = vmatpush1.msra.mxu0 0.0
  %528 = vmatprep.subr.mxu0 0.0
  %529 = vmatpush1.msra.mxu0 0.0
  %530 = vmatprep.subr.mxu0 0.0
  %531 = vmatpush1.msra.mxu0 0.0
  %532 = vmatprep.subr.mxu0 0.0
  %533 = vmatpush1.msra.mxu0 0.0
  %534 = vmatprep.subr.mxu0 0.0
  %535 = vmatpush1.msra.mxu0 0.0
  %536 = vmatprep.subr.mxu0 0.0
  %537 = vmatpush1.msra.mxu0 0.0
  %538 = vmatprep.subr.mxu0 0.0
  %539 = vmatpush1.msra.mxu0 0.0
  %540 = vmatprep.subr.mxu0 0.0
  %541 = vmatpush1.msra.mxu0 0.0
  %542 = vmatprep.subr.mxu0 0.0
  %543 = vmatpush1.msra.mxu0 0.0
  %544 = vmatprep.subr.mxu0 0.0
  %545 = vmatpush1.msra.mxu0 0.0
  %546 = vmatprep.subr.mxu0 0.0
  %547 = vmatpush1.msra.mxu0 0.0
  %548 = vmatprep.subr.mxu0 0.0
  %549 = vmatpush1.msra.mxu0 0.0
  %550 = vmatprep.mubr.f32.mxu0 0.0
  %551 = vmatmul.mubr.f32.gmra.mrb[0].mxu0 %v413
  %v552 = vpop.f32.mrb[0].mxu0
  %v553 = vadd.f32 0.0, %v552
  %v554 = vpop.f32.mrb[0].mxu0
  %555 = vdwg.mxu0
  %v557 = vrot.slane %v482, 6
  %v559 = vadd.f32 %v167, %v557
  %v560 = vxor.u32 %v559, 2147483648
  %v561 = vmul.f32 %v560, 1.442695
  %v562 = vpow.pop %v561
  %v563 = vadd.f32 %v562, 1.0
  %v564 = vrcp.pop %v563
  %v565 = vmul.f32 1.0, %v564
  %v567 = vrot.slane %v484, 6
  %v569 = vadd.f32 %v169, %v567
  %v570 = vxor.u32 %v569, 2147483648
  %v571 = vmul.f32 %v570, 1.442695
  %v572 = vpow.pop %v571
  %v573 = vadd.f32 %v572, 1.0
  %v574 = vrcp.pop %v573
  %v575 = vmul.f32 1.0, %v574
  %v577 = vrot.slane %v553, 6
  %v579 = vmul.f32 %v565, %v577
  %v580 = vadd.f32 %v244, %v579
  %v581 = vtanh.pop %v580
  %v582 = vsub.f32 1.0, %v575
  %v583 = vmul.f32 %v582, %v581
  %v585 = vrot.slane %v413, 6
  %v587 = vmul.f32 %v575, %v585
  %v588 = vadd.f32 %v583, %v587
  %589 = vst [vmem:[#allocation2] sm:$0xc] %v588
  %v591 = vrot.slane %v588, 2
  %593 = vmatprep.subr.mxu0 %v46
  %594 = vmatpush1.msra.mxu0 %v45
  %595 = vmatprep.subr.mxu0 %v49
  %596 = vmatpush1.msra.mxu0 %v48
  %597 = vmatprep.subr.mxu0 %v52
  %598 = vmatpush1.msra.mxu0 %v51
  %599 = vmatprep.subr.mxu0 %v55
  %600 = vmatpush1.msra.mxu0 %v54
  %601 = vmatprep.subr.mxu0 %v58
  %602 = vmatpush1.msra.mxu0 %v57
  %603 = vmatprep.subr.mxu0 %v61
  %604 = vmatpush1.msra.mxu0 %v60
  %605 = vmatprep.subr.mxu0 %v64
  %606 = vmatpush1.msra.mxu0 %v63
  %607 = vmatprep.subr.mxu0 %v67
  %608 = vmatpush1.msra.mxu0 %v66
  %609 = vmatprep.subr.mxu0 %v70
  %610 = vmatpush1.msra.mxu0 %v69
  %611 = vmatprep.subr.mxu0 %v73
  %612 = vmatpush1.msra.mxu0 %v72
  %613 = vmatprep.subr.mxu0 %v76
  %614 = vmatpush1.msra.mxu0 %v75
  %615 = vmatprep.subr.mxu0 %v79
  %616 = vmatpush1.msra.mxu0 %v78
  %617 = vmatprep.subr.mxu0 %v82
  %618 = vmatpush1.msra.mxu0 %v81
  %619 = vmatprep.subr.mxu0 %v85
  %620 = vmatpush1.msra.mxu0 %v84
  %621 = vmatprep.subr.mxu0 %v88
  %622 = vmatpush1.msra.mxu0 %v87
  %623 = vmatprep.subr.mxu0 %v91
  %624 = vmatpush1.msra.mxu0 %v90
  %625 = vmatprep.subr.mxu0 0.0
  %626 = vmatpush1.msra.mxu0 0.0
  %627 = vmatprep.subr.mxu0 0.0
  %628 = vmatpush1.msra.mxu0 0.0
  %629 = vmatprep.subr.mxu0 0.0
  %630 = vmatpush1.msra.mxu0 0.0
  %631 = vmatprep.subr.mxu0 0.0
  %632 = vmatpush1.msra.mxu0 0.0
  %633 = vmatprep.subr.mxu0 0.0
  %634 = vmatpush1.msra.mxu0 0.0
  %635 = vmatprep.subr.mxu0 0.0
  %636 = vmatpush1.msra.mxu0 0.0
  %637 = vmatprep.subr.mxu0 0.0
  %638 = vmatpush1.msra.mxu0 0.0
  %639 = vmatprep.subr.mxu0 0.0
  %640 = vmatpush1.msra.mxu0 0.0
  %641 = vmatprep.subr.mxu0 0.0
  %642 = vmatpush1.msra.mxu0 0.0
  %643 = vmatprep.subr.mxu0 0.0
  %644 = vmatpush1.msra.mxu0 0.0
  %645 = vmatprep.subr.mxu0 0.0
  %646 = vmatpush1.msra.mxu0 0.0
  %647 = vmatprep.subr.mxu0 0.0
  %648 = vmatpush1.msra.mxu0 0.0
  %649 = vmatprep.subr.mxu0 0.0
  %650 = vmatpush1.msra.mxu0 0.0
  %651 = vmatprep.subr.mxu0 0.0
  %652 = vmatpush1.msra.mxu0 0.0
  %653 = vmatprep.subr.mxu0 0.0
  %654 = vmatpush1.msra.mxu0 0.0
  %655 = vmatprep.subr.mxu0 0.0
  %656 = vmatpush1.msra.mxu0 0.0
  %657 = vmatprep.mubr.f32.mxu0 0.0
  %658 = vmatmul.mubr.f32.gmra.mrb[0].mxu0 %v591
  %v659 = vpop.f32.mrb[0].mxu0
  %v660 = vadd.f32 0.0, %v659
  %v661 = vpop.f32.mrb[0].mxu0
  %v662 = vadd.f32 0.0, %v661
  %663 = vdwg.mxu0
  %664 = vmatprep.subr.mxu0 0.0
  %665 = vmatpush1.msra.mxu0 %v47
  %666 = vmatprep.subr.mxu0 0.0
  %667 = vmatpush1.msra.mxu0 %v50
  %668 = vmatprep.subr.mxu0 0.0
  %669 = vmatpush1.msra.mxu0 %v53
  %670 = vmatprep.subr.mxu0 0.0
  %671 = vmatpush1.msra.mxu0 %v56
  %672 = vmatprep.subr.mxu0 0.0
  %673 = vmatpush1.msra.mxu0 %v59
  %674 = vmatprep.subr.mxu0 0.0
  %675 = vmatpush1.msra.mxu0 %v62
  %676 = vmatprep.subr.mxu0 0.0
  %677 = vmatpush1.msra.mxu0 %v65
  %678 = vmatprep.subr.mxu0 0.0
  %679 = vmatpush1.msra.mxu0 %v68
  %680 = vmatprep.subr.mxu0 0.0
  %681 = vmatpush1.msra.mxu0 %v71
  %682 = vmatprep.subr.mxu0 0.0
  %683 = vmatpush1.msra.mxu0 %v74
  %684 = vmatprep.subr.mxu0 0.0
  %685 = vmatpush1.msra.mxu0 %v77
  %686 = vmatprep.subr.mxu0 0.0
  %687 = vmatpush1.msra.mxu0 %v80
  %688 = vmatprep.subr.mxu0 0.0
  %689 = vmatpush1.msra.mxu0 %v83
  %690 = vmatprep.subr.mxu0 0.0
  %691 = vmatpush1.msra.mxu0 %v86
  %692 = vmatprep.subr.mxu0 0.0
  %693 = vmatpush1.msra.mxu0 %v89
  %694 = vmatprep.subr.mxu0 0.0
  %695 = vmatpush1.msra.mxu0 %v92
  %696 = vmatprep.subr.mxu0 0.0
  %697 = vmatpush1.msra.mxu0 0.0
  %698 = vmatprep.subr.mxu0 0.0
  %699 = vmatpush1.msra.mxu0 0.0
  %700 = vmatprep.subr.mxu0 0.0
  %701 = vmatpush1.msra.mxu0 0.0
  %702 = vmatprep.subr.mxu0 0.0
  %703 = vmatpush1.msra.mxu0 0.0
  %704 = vmatprep.subr.mxu0 0.0
  %705 = vmatpush1.msra.mxu0 0.0
  %706 = vmatprep.subr.mxu0 0.0
  %707 = vmatpush1.msra.mxu0 0.0
  %708 = vmatprep.subr.mxu0 0.0
  %709 = vmatpush1.msra.mxu0 0.0
  %710 = vmatprep.subr.mxu0 0.0
  %711 = vmatpush1.msra.mxu0 0.0
  %712 = vmatprep.subr.mxu0 0.0
  %713 = vmatpush1.msra.mxu0 0.0
  %714 = vmatprep.subr.mxu0 0.0
  %715 = vmatpush1.msra.mxu0 0.0
  %716 = vmatprep.subr.mxu0 0.0
  %717 = vmatpush1.msra.mxu0 0.0
  %718 = vmatprep.subr.mxu0 0.0
  %719 = vmatpush1.msra.mxu0 0.0
  %720 = vmatprep.subr.mxu0 0.0
  %721 = vmatpush1.msra.mxu0 0.0
  %722 = vmatprep.subr.mxu0 0.0
  %723 = vmatpush1.msra.mxu0 0.0
  %724 = vmatprep.subr.mxu0 0.0
  %725 = vmatpush1.msra.mxu0 0.0
  %726 = vmatprep.subr.mxu0 0.0
  %727 = vmatpush1.msra.mxu0 0.0
  %728 = vmatprep.mubr.f32.mxu0 0.0
  %729 = vmatmul.mubr.f32.gmra.mrb[0].mxu0 %v591
  %v730 = vpop.f32.mrb[0].mxu0
  %v731 = vadd.f32 0.0, %v730
  %v732 = vpop.f32.mrb[0].mxu0
  %733 = vdwg.mxu0
  %v735 = vrot.slane %v660, 4
  %v737 = vadd.f32 %v167, %v735
  %v738 = vxor.u32 %v737, 2147483648
  %v739 = vmul.f32 %v738, 1.442695
  %v740 = vpow.pop %v739
  %v741 = vadd.f32 %v740, 1.0
  %v742 = vrcp.pop %v741
  %v743 = vmul.f32 1.0, %v742
  %v745 = vrot.slane %v662, 4
  %v747 = vadd.f32 %v169, %v745
  %v748 = vxor.u32 %v747, 2147483648
  %v749 = vmul.f32 %v748, 1.442695
  %v750 = vpow.pop %v749
  %v751 = vadd.f32 %v750, 1.0
  %v752 = vrcp.pop %v751
  %v753 = vmul.f32 1.0, %v752
  %v755 = vrot.slane %v731, 4
  %v757 = vmul.f32 %v743, %v755
  %v758 = vadd.f32 %v244, %v757
  %v759 = vtanh.pop %v758
  %v760 = vsub.f32 1.0, %v753
  %v761 = vmul.f32 %v760, %v759
  %v762 = vrot.slane %v588, 6
  %v764 = vmul.f32 %v753, %v762
  %v765 = vadd.f32 %v761, %v764
  %766 = vst [vmem:[#allocation2] sm:$0x30] %v765
  %v768 = vrot.slane %v765, 4
  %770 = vmatprep.subr.mxu0 %v46
  %771 = vmatpush1.msra.mxu0 %v45
  %772 = vmatprep.subr.mxu0 %v49
  %773 = vmatpush1.msra.mxu0 %v48
  %774 = vmatprep.subr.mxu0 %v52
  %775 = vmatpush1.msra.mxu0 %v51
  %776 = vmatprep.subr.mxu0 %v55
  %777 = vmatpush1.msra.mxu0 %v54
  %778 = vmatprep.subr.mxu0 %v58
  %779 = vmatpush1.msra.mxu0 %v57
  %780 = vmatprep.subr.mxu0 %v61
  %781 = vmatpush1.msra.mxu0 %v60
  %782 = vmatprep.subr.mxu0 %v64
  %783 = vmatpush1.msra.mxu0 %v63
  %784 = vmatprep.subr.mxu0 %v67
  %785 = vmatpush1.msra.mxu0 %v66
  %786 = vmatprep.subr.mxu0 %v70
  %787 = vmatpush1.msra.mxu0 %v69
  %788 = vmatprep.subr.mxu0 %v73
  %789 = vmatpush1.msra.mxu0 %v72
  %790 = vmatprep.subr.mxu0 %v76
  %791 = vmatpush1.msra.mxu0 %v75
  %792 = vmatprep.subr.mxu0 %v79
  %793 = vmatpush1.msra.mxu0 %v78
  %794 = vmatprep.subr.mxu0 %v82
  %795 = vmatpush1.msra.mxu0 %v81
  %796 = vmatprep.subr.mxu0 %v85
  %797 = vmatpush1.msra.mxu0 %v84
  %798 = vmatprep.subr.mxu0 %v88
  %799 = vmatpush1.msra.mxu0 %v87
  %800 = vmatprep.subr.mxu0 %v91
  %801 = vmatpush1.msra.mxu0 %v90
  %802 = vmatprep.subr.mxu0 0.0
  %803 = vmatpush1.msra.mxu0 0.0
  %804 = vmatprep.subr.mxu0 0.0
  %805 = vmatpush1.msra.mxu0 0.0
  %806 = vmatprep.subr.mxu0 0.0
  %807 = vmatpush1.msra.mxu0 0.0
  %808 = vmatprep.subr.mxu0 0.0
  %809 = vmatpush1.msra.mxu0 0.0
  %810 = vmatprep.subr.mxu0 0.0
  %811 = vmatpush1.msra.mxu0 0.0
  %812 = vmatprep.subr.mxu0 0.0
  %813 = vmatpush1.msra.mxu0 0.0
  %814 = vmatprep.subr.mxu0 0.0
  %815 = vmatpush1.msra.mxu0 0.0
  %816 = vmatprep.subr.mxu0 0.0
  %817 = vmatpush1.msra.mxu0 0.0
  %818 = vmatprep.subr.mxu0 0.0
  %819 = vmatpush1.msra.mxu0 0.0
  %820 = vmatprep.subr.mxu0 0.0
  %821 = vmatpush1.msra.mxu0 0.0
  %822 = vmatprep.subr.mxu0 0.0
  %823 = vmatpush1.msra.mxu0 0.0
  %824 = vmatprep.subr.mxu0 0.0
  %825 = vmatpush1.msra.mxu0 0.0
  %826 = vmatprep.subr.mxu0 0.0
  %827 = vmatpush1.msra.mxu0 0.0
  %828 = vmatprep.subr.mxu0 0.0
  %829 = vmatpush1.msra.mxu0 0.0
  %830 = vmatprep.subr.mxu0 0.0
  %831 = vmatpush1.msra.mxu0 0.0
  %832 = vmatprep.subr.mxu0 0.0
  %833 = vmatpush1.msra.mxu0 0.0
  %834 = vmatprep.mubr.f32.mxu0 0.0
  %835 = vmatmul.mubr.f32.gmra.mrb[0].mxu0 %v768
  %v836 = vpop.f32.mrb[0].mxu0
  %v837 = vadd.f32 0.0, %v836
  %v838 = vpop.f32.mrb[0].mxu0
  %v839 = vadd.f32 0.0, %v838
  %840 = vdwg.mxu0
  %841 = vmatprep.subr.mxu0 0.0
  %842 = vmatpush1.msra.mxu0 %v47
  %843 = vmatprep.subr.mxu0 0.0
  %844 = vmatpush1.msra.mxu0 %v50
  %845 = vmatprep.subr.mxu0 0.0
  %846 = vmatpush1.msra.mxu0 %v53
  %847 = vmatprep.subr.mxu0 0.0
  %848 = vmatpush1.msra.mxu0 %v56
  %849 = vmatprep.subr.mxu0 0.0
  %850 = vmatpush1.msra.mxu0 %v59
  %851 = vmatprep.subr.mxu0 0.0
  %852 = vmatpush1.msra.mxu0 %v62
  %853 = vmatprep.subr.mxu0 0.0
  %854 = vmatpush1.msra.mxu0 %v65
  %855 = vmatprep.subr.mxu0 0.0
  %856 = vmatpush1.msra.mxu0 %v68
  %857 = vmatprep.subr.mxu0 0.0
  %858 = vmatpush1.msra.mxu0 %v71
  %859 = vmatprep.subr.mxu0 0.0
  %860 = vmatpush1.msra.mxu0 %v74
  %861 = vmatprep.subr.mxu0 0.0
  %862 = vmatpush1.msra.mxu0 %v77
  %863 = vmatprep.subr.mxu0 0.0
  %864 = vmatpush1.msra.mxu0 %v80
  %865 = vmatprep.subr.mxu0 0.0
  %866 = vmatpush1.msra.mxu0 %v83
  %867 = vmatprep.subr.mxu0 0.0
  %868 = vmatpush1.msra.mxu0 %v86
  %869 = vmatprep.subr.mxu0 0.0
  %870 = vmatpush1.msra.mxu0 %v89
  %871 = vmatprep.subr.mxu0 0.0
  %872 = vmatpush1.msra.mxu0 %v92
  %873 = vmatprep.subr.mxu0 0.0
  %874 = vmatpush1.msra.mxu0 0.0
  %875 = vmatprep.subr.mxu0 0.0
  %876 = vmatpush1.msra.mxu0 0.0
  %877 = vmatprep.subr.mxu0 0.0
  %878 = vmatpush1.msra.mxu0 0.0
  %879 = vmatprep.subr.mxu0 0.0
  %880 = vmatpush1.msra.mxu0 0.0
  %881 = vmatprep.subr.mxu0 0.0
  %882 = vmatpush1.msra.mxu0 0.0
  %883 = vmatprep.subr.mxu0 0.0
  %884 = vmatpush1.msra.mxu0 0.0
  %885 = vmatprep.subr.mxu0 0.0
  %886 = vmatpush1.msra.mxu0 0.0
  %887 = vmatprep.subr.mxu0 0.0
  %888 = vmatpush1.msra.mxu0 0.0
  %889 = vmatprep.subr.mxu0 0.0
  %890 = vmatpush1.msra.mxu0 0.0
  %891 = vmatprep.subr.mxu0 0.0
  %892 = vmatpush1.msra.mxu0 0.0
  %893 = vmatprep.subr.mxu0 0.0
  %894 = vmatpush1.msra.mxu0 0.0
  %895 = vmatprep.subr.mxu0 0.0
  %896 = vmatpush1.msra.mxu0 0.0
  %897 = vmatprep.subr.mxu0 0.0
  %898 = vmatpush1.msra.mxu0 0.0
  %899 = vmatprep.subr.mxu0 0.0
  %900 = vmatpush1.msra.mxu0 0.0
  %901 = vmatprep.subr.mxu0 0.0
  %902 = vmatpush1.msra.mxu0 0.0
  %903 = vmatprep.subr.mxu0 0.0
  %904 = vmatpush1.msra.mxu0 0.0
  %905 = vmatprep.mubr.f32.mxu0 0.0
  %906 = vmatmul.mubr.f32.gmra.mrb[0].mxu0 %v768
  %v907 = vpop.f32.mrb[0].mxu0
  %v908 = vadd.f32 0.0, %v907
  %v909 = vpop.f32.mrb[0].mxu0
  %910 = vdwg.mxu0
  %v912 = vrot.slane %v837, 2
  %v914 = vadd.f32 %v167, %v912
  %v915 = vxor.u32 %v914, 2147483648
  %v916 = vmul.f32 %v915, 1.442695
  %v917 = vpow.pop %v916
  %v918 = vadd.f32 %v917, 1.0
  %v919 = vrcp.pop %v918
  %v920 = vmul.f32 1.0, %v919
  %v922 = vrot.slane %v839, 2
  %v924 = vadd.f32 %v169, %v922
  %v925 = vxor.u32 %v924, 2147483648
  %v926 = vmul.f32 %v925, 1.442695
  %v927 = vpow.pop %v926
  %v928 = vadd.f32 %v927, 1.0
  %v929 = vrcp.pop %v928
  %v930 = vmul.f32 1.0, %v929
  %v932 = vrot.slane %v908, 2
  %v934 = vmul.f32 %v920, %v932
  %v935 = vadd.f32 %v244, %v934
  %v936 = vtanh.pop %v935
  %v937 = vsub.f32 1.0, %v930
  %v938 = vmul.f32 %v937, %v936
  %v939 = vrot.slane %v765, 6
  %v941 = vmul.f32 %v930, %v939
  %v942 = vadd.f32 %v938, %v941
  %943 = vst [vmem:[#allocation2] sm:$0xc0] %v942
  %v945 = vrot.slane %v942, 6
  %947 = vmatprep.subr.mxu0 %v46
  %948 = vmatpush1.msra.mxu0 %v45
  %949 = vmatprep.subr.mxu0 %v49
  %950 = vmatpush1.msra.mxu0 %v48
  %951 = vmatprep.subr.mxu0 %v52
  %952 = vmatpush1.msra.mxu0 %v51
  %953 = vmatprep.subr.mxu0 %v55
  %954 = vmatpush1.msra.mxu0 %v54
  %955 = vmatprep.subr.mxu0 %v58
  %956 = vmatpush1.msra.mxu0 %v57
  %957 = vmatprep.subr.mxu0 %v61
  %958 = vmatpush1.msra.mxu0 %v60
  %959 = vmatprep.subr.mxu0 %v64
  %960 = vmatpush1.msra.mxu0 %v63
  %961 = vmatprep.subr.mxu0 %v67
  %962 = vmatpush1.msra.mxu0 %v66
  %963 = vmatprep.subr.mxu0 %v70
  %964 = vmatpush1.msra.mxu0 %v69
  %965 = vmatprep.subr.mxu0 %v73
  %966 = vmatpush1.msra.mxu0 %v72
  %967 = vmatprep.subr.mxu0 %v76
  %968 = vmatpush1.msra.mxu0 %v75
  %969 = vmatprep.subr.mxu0 %v79
  %970 = vmatpush1.msra.mxu0 %v78
  %971 = vmatprep.subr.mxu0 %v82
  %972 = vmatpush1.msra.mxu0 %v81
  %973 = vmatprep.subr.mxu0 %v85
  %974 = vmatpush1.msra.mxu0 %v84
  %975 = vmatprep.subr.mxu0 %v88
  %976 = vmatpush1.msra.mxu0 %v87
  %977 = vmatprep.subr.mxu0 %v91
  %978 = vmatpush1.msra.mxu0 %v90
  %979 = vmatprep.subr.mxu0 0.0
  %980 = vmatpush1.msra.mxu0 0.0
  %981 = vmatprep.subr.mxu0 0.0
  %982 = vmatpush1.msra.mxu0 0.0
  %983 = vmatprep.subr.mxu0 0.0
  %984 = vmatpush1.msra.mxu0 0.0
  %985 = vmatprep.subr.mxu0 0.0
  %986 = vmatpush1.msra.mxu0 0.0
  %987 = vmatprep.subr.mxu0 0.0
  %988 = vmatpush1.msra.mxu0 0.0
  %989 = vmatprep.subr.mxu0 0.0
  %990 = vmatpush1.msra.mxu0 0.0
  %991 = vmatprep.subr.mxu0 0.0
  %992 = vmatpush1.msra.mxu0 0.0
  %993 = vmatprep.subr.mxu0 0.0
  %994 = vmatpush1.msra.mxu0 0.0
  %995 = vmatprep.subr.mxu0 0.0
  %996 = vmatpush1.msra.mxu0 0.0
  %997 = vmatprep.subr.mxu0 0.0
  %998 = vmatpush1.msra.mxu0 0.0
  %999 = vmatprep.subr.mxu0 0.0
  %1000 = vmatpush1.msra.mxu0 0.0
  %1001 = vmatprep.subr.mxu0 0.0
  %1002 = vmatpush1.msra.mxu0 0.0
  %1003 = vmatprep.subr.mxu0 0.0
  %1004 = vmatpush1.msra.mxu0 0.0
  %1005 = vmatprep.subr.mxu0 0.0
  %1006 = vmatpush1.msra.mxu0 0.0
  %1007 = vmatprep.subr.mxu0 0.0
  %1008 = vmatpush1.msra.mxu0 0.0
  %1009 = vmatprep.subr.mxu0 0.0
  %1010 = vmatpush1.msra.mxu0 0.0
  %1011 = vmatprep.mubr.f32.mxu0 0.0
  %1012 = vmatmul.mubr.f32.gmra.mrb[0].mxu0 %v945
  %v1013 = vpop.f32.mrb[0].mxu0
  %v1014 = vadd.f32 0.0, %v1013
  %v1015 = vpop.f32.mrb[0].mxu0
  %v1016 = vadd.f32 0.0, %v1015
  %1017 = vdwg.mxu0
  %1018 = vmatprep.subr.mxu0 0.0
  %1019 = vmatpush1.msra.mxu0 %v47
  %1020 = vmatprep.subr.mxu0 0.0
  %1021 = vmatpush1.msra.mxu0 %v50
  %1022 = vmatprep.subr.mxu0 0.0
  %1023 = vmatpush1.msra.mxu0 %v53
  %1024 = vmatprep.subr.mxu0 0.0
  %1025 = vmatpush1.msra.mxu0 %v56
  %1026 = vmatprep.subr.mxu0 0.0
  %1027 = vmatpush1.msra.mxu0 %v59
  %1028 = vmatprep.subr.mxu0 0.0
  %1029 = vmatpush1.msra.mxu0 %v62
  %1030 = vmatprep.subr.mxu0 0.0
  %1031 = vmatpush1.msra.mxu0 %v65
  %1032 = vmatprep.subr.mxu0 0.0
  %1033 = vmatpush1.msra.mxu0 %v68
  %1034 = vmatprep.subr.mxu0 0.0
  %1035 = vmatpush1.msra.mxu0 %v71
  %1036 = vmatprep.subr.mxu0 0.0
  %1037 = vmatpush1.msra.mxu0 %v74
  %1038 = vmatprep.subr.mxu0 0.0
  %1039 = vmatpush1.msra.mxu0 %v77
  %1040 = vmatprep.subr.mxu0 0.0
  %1041 = vmatpush1.msra.mxu0 %v80
  %1042 = vmatprep.subr.mxu0 0.0
  %1043 = vmatpush1.msra.mxu0 %v83
  %1044 = vmatprep.subr.mxu0 0.0
  %1045 = vmatpush1.msra.mxu0 %v86
  %1046 = vmatprep.subr.mxu0 0.0
  %1047 = vmatpush1.msra.mxu0 %v89
  %1048 = vmatprep.subr.mxu0 0.0
  %1049 = vmatpush1.msra.mxu0 %v92
  %1050 = vmatprep.subr.mxu0 0.0
  %1051 = vmatpush1.msra.mxu0 0.0
  %1052 = vmatprep.subr.mxu0 0.0
  %1053 = vmatpush1.msra.mxu0 0.0
  %1054 = vmatprep.subr.mxu0 0.0
  %1055 = vmatpush1.msra.mxu0 0.0
  %1056 = vmatprep.subr.mxu0 0.0
  %1057 = vmatpush1.msra.mxu0 0.0
  %1058 = vmatprep.subr.mxu0 0.0
  %1059 = vmatpush1.msra.mxu0 0.0
  %1060 = vmatprep.subr.mxu0 0.0
  %1061 = vmatpush1.msra.mxu0 0.0
  %1062 = vmatprep.subr.mxu0 0.0
  %1063 = vmatpush1.msra.mxu0 0.0
  %1064 = vmatprep.subr.mxu0 0.0
  %1065 = vmatpush1.msra.mxu0 0.0
  %1066 = vmatprep.subr.mxu0 0.0
  %1067 = vmatpush1.msra.mxu0 0.0
  %1068 = vmatprep.subr.mxu0 0.0
  %1069 = vmatpush1.msra.mxu0 0.0
  %1070 = vmatprep.subr.mxu0 0.0
  %1071 = vmatpush1.msra.mxu0 0.0
  %1072 = vmatprep.subr.mxu0 0.0
  %1073 = vmatpush1.msra.mxu0 0.0
  %1074 = vmatprep.subr.mxu0 0.0
  %1075 = vmatpush1.msra.mxu0 0.0
  %1076 = vmatprep.subr.mxu0 0.0
  %1077 = vmatpush1.msra.mxu0 0.0
  %1078 = vmatprep.subr.mxu0 0.0
  %1079 = vmatpush1.msra.mxu0 0.0
  %1080 = vmatprep.subr.mxu0 0.0
  %1081 = vmatpush1.msra.mxu0 0.0
  %1082 = vmatprep.mubr.f32.mxu0 0.0
  %1083 = vmatmul.mubr.f32.gmra.mrb[0].mxu0 %v945
  %v1084 = vpop.f32.mrb[0].mxu0
  %v1085 = vadd.f32 0.0, %v1084
  %v1086 = vpop.f32.mrb[0].mxu0
  %1087 = vdwg.mxu0
  %v1088 = vadd.f32 %v173, %v1014
  %v1089 = vxor.u32 %v1088, 2147483648
  %v1090 = vmul.f32 %v1089, 1.442695
  %v1091 = vpow.pop %v1090
  %v1092 = vadd.f32 %v1091, 1.0
  %v1093 = vrcp.pop %v1092
  %v1094 = vmul.f32 1.0, %v1093
  %v1095 = vadd.f32 %v175, %v1016
  %v1096 = vxor.u32 %v1095, 2147483648
  %v1097 = vmul.f32 %v1096, 1.442695
  %v1098 = vpow.pop %v1097
  %v1099 = vadd.f32 %v1098, 1.0
  %v1100 = vrcp.pop %v1099
  %v1101 = vmul.f32 1.0, %v1100
  %v1102 = vmul.f32 %v1094, %v1085
  %v1103 = vadd.f32 %v249, %v1102
  %v1104 = vtanh.pop %v1103
  %v1105 = vsub.f32 1.0, %v1101
  %v1106 = vmul.f32 %v1105, %v1104
  %v1107 = vmul.f32 %v1101, %v945
  %v1108 = vadd.f32 %v1106, %v1107
  %1109 = vst [vmem:[#allocation2 + $0x8] sm:$0x3] %v1108
  %1110 = vmatprep.subr.mxu0 %v46
  %1111 = vmatpush1.msra.mxu0 %v45
  %1112 = vmatprep.subr.mxu0 %v49
  %1113 = vmatpush1.msra.mxu0 %v48
  %1114 = vmatprep.subr.mxu0 %v52
  %1115 = vmatpush1.msra.mxu0 %v51
  %1116 = vmatprep.subr.mxu0 %v55
  %1117 = vmatpush1.msra.mxu0 %v54
  %1118 = vmatprep.subr.mxu0 %v58
  %1119 = vmatpush1.msra.mxu0 %v57
  %1120 = vmatprep.subr.mxu0 %v61
  %1121 = vmatpush1.msra.mxu0 %v60
  %1122 = vmatprep.subr.mxu0 %v64
  %1123 = vmatpush1.msra.mxu0 %v63
  %1124 = vmatprep.subr.mxu0 %v67
  %1125 = vmatpush1.msra.mxu0 %v66
  %1126 = vmatprep.subr.mxu0 %v70
  %1127 = vmatpush1.msra.mxu0 %v69
  %1128 = vmatprep.subr.mxu0 %v73
  %1129 = vmatpush1.msra.mxu0 %v72
  %1130 = vmatprep.subr.mxu0 %v76
  %1131 = vmatpush1.msra.mxu0 %v75
  %1132 = vmatprep.subr.mxu0 %v79
  %1133 = vmatpush1.msra.mxu0 %v78
  %1134 = vmatprep.subr.mxu0 %v82
  %1135 = vmatpush1.msra.mxu0 %v81
  %1136 = vmatprep.subr.mxu0 %v85
  %1137 = vmatpush1.msra.mxu0 %v84
  %1138 = vmatprep.subr.mxu0 %v88
  %1139 = vmatpush1.msra.mxu0 %v87
  %1140 = vmatprep.subr.mxu0 %v91
  %1141 = vmatpush1.msra.mxu0 %v90
  %1142 = vmatprep.subr.mxu0 0.0
  %1143 = vmatpush1.msra.mxu0 0.0
  %1144 = vmatprep.subr.mxu0 0.0
  %1145 = vmatpush1.msra.mxu0 0.0
  %1146 = vmatprep.subr.mxu0 0.0
  %1147 = vmatpush1.msra.mxu0 0.0
  %1148 = vmatprep.subr.mxu0 0.0
  %1149 = vmatpush1.msra.mxu0 0.0
  %1150 = vmatprep.subr.mxu0 0.0
  %1151 = vmatpush1.msra.mxu0 0.0
  %1152 = vmatprep.subr.mxu0 0.0
  %1153 = vmatpush1.msra.mxu0 0.0
  %1154 = vmatprep.subr.mxu0 0.0
  %1155 = vmatpush1.msra.mxu0 0.0
  %1156 = vmatprep.subr.mxu0 0.0
  %1157 = vmatpush1.msra.mxu0 0.0
  %1158 = vmatprep.subr.mxu0 0.0
  %1159 = vmatpush1.msra.mxu0 0.0
  %1160 = vmatprep.subr.mxu0 0.0
  %1161 = vmatpush1.msra.mxu0 0.0
  %1162 = vmatprep.subr.mxu0 0.0
  %1163 = vmatpush1.msra.mxu0 0.0
  %1164 = vmatprep.subr.mxu0 0.0
  %1165 = vmatpush1.msra.mxu0 0.0
  %1166 = vmatprep.subr.mxu0 0.0
  %1167 = vmatpush1.msra.mxu0 0.0
  %1168 = vmatprep.subr.mxu0 0.0
  %1169 = vmatpush1.msra.mxu0 0.0
  %1170 = vmatprep.subr.mxu0 0.0
  %1171 = vmatpush1.msra.mxu0 0.0
  %1172 = vmatprep.subr.mxu0 0.0
  %1173 = vmatpush1.msra.mxu0 0.0
  %1174 = vmatprep.mubr.f32.mxu0 0.0
  %1175 = vmatmul.mubr.f32.gmra.mrb[0].mxu0 %v1108
  %v1176 = vpop.f32.mrb[0].mxu0
  %v1177 = vadd.f32 0.0, %v1176
  %v1178 = vpop.f32.mrb[0].mxu0
  %v1179 = vadd.f32 0.0, %v1178
  %1180 = vdwg.mxu0
  %1181 = vmatprep.subr.mxu0 0.0
  %1182 = vmatpush1.msra.mxu0 %v47
  %1183 = vmatprep.subr.mxu0 0.0
  %1184 = vmatpush1.msra.mxu0 %v50
  %1185 = vmatprep.subr.mxu0 0.0
  %1186 = vmatpush1.msra.mxu0 %v53
  %1187 = vmatprep.subr.mxu0 0.0
  %1188 = vmatpush1.msra.mxu0 %v56
  %1189 = vmatprep.subr.mxu0 0.0
  %1190 = vmatpush1.msra.mxu0 %v59
  %1191 = vmatprep.subr.mxu0 0.0
  %1192 = vmatpush1.msra.mxu0 %v62
  %1193 = vmatprep.subr.mxu0 0.0
  %1194 = vmatpush1.msra.mxu0 %v65
  %1195 = vmatprep.subr.mxu0 0.0
  %1196 = vmatpush1.msra.mxu0 %v68
  %1197 = vmatprep.subr.mxu0 0.0
  %1198 = vmatpush1.msra.mxu0 %v71
  %1199 = vmatprep.subr.mxu0 0.0
  %1200 = vmatpush1.msra.mxu0 %v74
  %1201 = vmatprep.subr.mxu0 0.0
  %1202 = vmatpush1.msra.mxu0 %v77
  %1203 = vmatprep.subr.mxu0 0.0
  %1204 = vmatpush1.msra.mxu0 %v80
  %1205 = vmatprep.subr.mxu0 0.0
  %1206 = vmatpush1.msra.mxu0 %v83
  %1207 = vmatprep.subr.mxu0 0.0
  %1208 = vmatpush1.msra.mxu0 %v86
  %1209 = vmatprep.subr.mxu0 0.0
  %1210 = vmatpush1.msra.mxu0 %v89
  %1211 = vmatprep.subr.mxu0 0.0
  %1212 = vmatpush1.msra.mxu0 %v92
  %1213 = vmatprep.subr.mxu0 0.0
  %1214 = vmatpush1.msra.mxu0 0.0
  %1215 = vmatprep.subr.mxu0 0.0
  %1216 = vmatpush1.msra.mxu0 0.0
  %1217 = vmatprep.subr.mxu0 0.0
  %1218 = vmatpush1.msra.mxu0 0.0
  %1219 = vmatprep.subr.mxu0 0.0
  %1220 = vmatpush1.msra.mxu0 0.0
  %1221 = vmatprep.subr.mxu0 0.0
  %1222 = vmatpush1.msra.mxu0 0.0
  %1223 = vmatprep.subr.mxu0 0.0
  %1224 = vmatpush1.msra.mxu0 0.0
  %1225 = vmatprep.subr.mxu0 0.0
  %1226 = vmatpush1.msra.mxu0 0.0
  %1227 = vmatprep.subr.mxu0 0.0
  %1228 = vmatpush1.msra.mxu0 0.0
  %1229 = vmatprep.subr.mxu0 0.0
  %1230 = vmatpush1.msra.mxu0 0.0
  %1231 = vmatprep.subr.mxu0 0.0
  %1232 = vmatpush1.msra.mxu0 0.0
  %1233 = vmatprep.subr.mxu0 0.0
  %1234 = vmatpush1.msra.mxu0 0.0
  %1235 = vmatprep.subr.mxu0 0.0
  %1236 = vmatpush1.msra.mxu0 0.0
  %1237 = vmatprep.subr.mxu0 0.0
  %1238 = vmatpush1.msra.mxu0 0.0
  %1239 = vmatprep.subr.mxu0 0.0
  %1240 = vmatpush1.msra.mxu0 0.0
  %1241 = vmatprep.subr.mxu0 0.0
  %1242 = vmatpush1.msra.mxu0 0.0
  %1243 = vmatprep.subr.mxu0 0.0
  %1244 = vmatpush1.msra.mxu0 0.0
  %1245 = vmatprep.mubr.f32.mxu0 0.0
  %1246 = vmatmul.mubr.f32.gmra.mrb[0].mxu0 %v1108
  %v1247 = vpop.f32.mrb[0].mxu0
  %v1248 = vadd.f32 0.0, %v1247
  %v1249 = vpop.f32.mrb[0].mxu0
  %1250 = vdwg.mxu0
  %v1252 = vrot.slane %v1177, 6
  %v1254 = vadd.f32 %v173, %v1252
  %v1255 = vxor.u32 %v1254, 2147483648
  %v1256 = vmul.f32 %v1255, 1.442695
  %v1257 = vpow.pop %v1256
  %v1258 = vadd.f32 %v1257, 1.0
  %v1259 = vrcp.pop %v1258
  %v1260 = vmul.f32 1.0, %v1259
  %v1262 = vrot.slane %v1179, 6
  %v1264 = vadd.f32 %v175, %v1262
  %v1265 = vxor.u32 %v1264, 2147483648
  %v1266 = vmul.f32 %v1265, 1.442695
  %v1267 = vpow.pop %v1266
  %v1268 = vadd.f32 %v1267, 1.0
  %v1269 = vrcp.pop %v1268
  %v1270 = vmul.f32 1.0, %v1269
  %v1272 = vrot.slane %v1248, 6
  %v1274 = vmul.f32 %v1260, %v1272
  %v1275 = vadd.f32 %v249, %v1274
  %v1276 = vtanh.pop %v1275
  %v1277 = vsub.f32 1.0, %v1270
  %v1278 = vmul.f32 %v1277, %v1276
  %v1280 = vrot.slane %v1108, 6
  %v1282 = vmul.f32 %v1270, %v1280
  %v1283 = vadd.f32 %v1278, %v1282
  %1284 = vst [vmem:[#allocation2 + $0x8] sm:$0xc] %v1283
  %v1286 = vrot.slane %v1283, 2
  %1288 = vmatprep.subr.mxu0 %v46
  %1289 = vmatpush1.msra.mxu0 %v45
  %1290 = vmatprep.subr.mxu0 %v49
  %1291 = vmatpush1.msra.mxu0 %v48
  %1292 = vmatprep.subr.mxu0 %v52
  %1293 = vmatpush1.msra.mxu0 %v51
  %1294 = vmatprep.subr.mxu0 %v55
  %1295 = vmatpush1.msra.mxu0 %v54
  %1296 = vmatprep.subr.mxu0 %v58
  %1297 = vmatpush1.msra.mxu0 %v57
  %1298 = vmatprep.subr.mxu0 %v61
  %1299 = vmatpush1.msra.mxu0 %v60
  %1300 = vmatprep.subr.mxu0 %v64
  %1301 = vmatpush1.msra.mxu0 %v63
  %1302 = vmatprep.subr.mxu0 %v67
  %1303 = vmatpush1.msra.mxu0 %v66
  %1304 = vmatprep.subr.mxu0 %v70
  %1305 = vmatpush1.msra.mxu0 %v69
  %1306 = vmatprep.subr.mxu0 %v73
  %1307 = vmatpush1.msra.mxu0 %v72
  %1308 = vmatprep.subr.mxu0 %v76
  %1309 = vmatpush1.msra.mxu0 %v75
  %1310 = vmatprep.subr.mxu0 %v79
  %1311 = vmatpush1.msra.mxu0 %v78
  %1312 = vmatprep.subr.mxu0 %v82
  %1313 = vmatpush1.msra.mxu0 %v81
  %1314 = vmatprep.subr.mxu0 %v85
  %1315 = vmatpush1.msra.mxu0 %v84
  %1316 = vmatprep.subr.mxu0 %v88
  %1317 = vmatpush1.msra.mxu0 %v87
  %1318 = vmatprep.subr.mxu0 %v91
  %1319 = vmatpush1.msra.mxu0 %v90
  %1320 = vmatprep.subr.mxu0 0.0
  %1321 = vmatpush1.msra.mxu0 0.0
  %1322 = vmatprep.subr.mxu0 0.0
  %1323 = vmatpush1.msra.mxu0 0.0
  %1324 = vmatprep.subr.mxu0 0.0
  %1325 = vmatpush1.msra.mxu0 0.0
  %1326 = vmatprep.subr.mxu0 0.0
  %1327 = vmatpush1.msra.mxu0 0.0
  %1328 = vmatprep.subr.mxu0 0.0
  %1329 = vmatpush1.msra.mxu0 0.0
  %1330 = vmatprep.subr.mxu0 0.0
  %1331 = vmatpush1.msra.mxu0 0.0
  %1332 = vmatprep.subr.mxu0 0.0
  %1333 = vmatpush1.msra.mxu0 0.0
  %1334 = vmatprep.subr.mxu0 0.0
  %1335 = vmatpush1.msra.mxu0 0.0
  %1336 = vmatprep.subr.mxu0 0.0
  %1337 = vmatpush1.msra.mxu0 0.0
  %1338 = vmatprep.subr.mxu0 0.0
  %1339 = vmatpush1.msra.mxu0 0.0
  %1340 = vmatprep.subr.mxu0 0.0
  %1341 = vmatpush1.msra.mxu0 0.0
  %1342 = vmatprep.subr.mxu0 0.0
  %1343 = vmatpush1.msra.mxu0 0.0
  %1344 = vmatprep.subr.mxu0 0.0
  %1345 = vmatpush1.msra.mxu0 0.0
  %1346 = vmatprep.subr.mxu0 0.0
  %1347 = vmatpush1.msra.mxu0 0.0
  %1348 = vmatprep.subr.mxu0 0.0
  %1349 = vmatpush1.msra.mxu0 0.0
  %1350 = vmatprep.subr.mxu0 0.0
  %1351 = vmatpush1.msra.mxu0 0.0
  %1352 = vmatprep.mubr.f32.mxu0 0.0
  %1353 = vmatmul.mubr.f32.gmra.mrb[0].mxu0 %v1286
  %v1354 = vpop.f32.mrb[0].mxu0
  %v1355 = vadd.f32 0.0, %v1354
  %v1356 = vpop.f32.mrb[0].mxu0
  %v1357 = vadd.f32 0.0, %v1356
  %1358 = vdwg.mxu0
  %1359 = vmatprep.subr.mxu0 0.0
  %1360 = vmatpush1.msra.mxu0 %v47
  %1361 = vmatprep.subr.mxu0 0.0
  %1362 = vmatpush1.msra.mxu0 %v50
  %1363 = vmatprep.subr.mxu0 0.0
  %1364 = vmatpush1.msra.mxu0 %v53
  %1365 = vmatprep.subr.mxu0 0.0
  %1366 = vmatpush1.msra.mxu0 %v56
  %1367 = vmatprep.subr.mxu0 0.0
  %1368 = vmatpush1.msra.mxu0 %v59
  %1369 = vmatprep.subr.mxu0 0.0
  %1370 = vmatpush1.msra.mxu0 %v62
  %1371 = vmatprep.subr.mxu0 0.0
  %1372 = vmatpush1.msra.mxu0 %v65
  %1373 = vmatprep.subr.mxu0 0.0
  %1374 = vmatpush1.msra.mxu0 %v68
  %1375 = vmatprep.subr.mxu0 0.0
  %1376 = vmatpush1.msra.mxu0 %v71
  %1377 = vmatprep.subr.mxu0 0.0
  %1378 = vmatpush1.msra.mxu0 %v74
  %1379 = vmatprep.subr.mxu0 0.0
  %1380 = vmatpush1.msra.mxu0 %v77
  %1381 = vmatprep.subr.mxu0 0.0
  %1382 = vmatpush1.msra.mxu0 %v80
  %1383 = vmatprep.subr.mxu0 0.0
  %1384 = vmatpush1.msra.mxu0 %v83
  %1385 = vmatprep.subr.mxu0 0.0
  %1386 = vmatpush1.msra.mxu0 %v86
  %1387 = vmatprep.subr.mxu0 0.0
  %1388 = vmatpush1.msra.mxu0 %v89
  %1389 = vmatprep.subr.mxu0 0.0
  %1390 = vmatpush1.msra.mxu0 %v92
  %1391 = vmatprep.subr.mxu0 0.0
  %1392 = vmatpush1.msra.mxu0 0.0
  %1393 = vmatprep.subr.mxu0 0.0
  %1394 = vmatpush1.msra.mxu0 0.0
  %1395 = vmatprep.subr.mxu0 0.0
  %1396 = vmatpush1.msra.mxu0 0.0
  %1397 = vmatprep.subr.mxu0 0.0
  %1398 = vmatpush1.msra.mxu0 0.0
  %1399 = vmatprep.subr.mxu0 0.0
  %1400 = vmatpush1.msra.mxu0 0.0
  %1401 = vmatprep.subr.mxu0 0.0
  %1402 = vmatpush1.msra.mxu0 0.0
  %1403 = vmatprep.subr.mxu0 0.0
  %1404 = vmatpush1.msra.mxu0 0.0
  %1405 = vmatprep.subr.mxu0 0.0
  %1406 = vmatpush1.msra.mxu0 0.0
  %1407 = vmatprep.subr.mxu0 0.0
  %1408 = vmatpush1.msra.mxu0 0.0
  %1409 = vmatprep.subr.mxu0 0.0
  %1410 = vmatpush1.msra.mxu0 0.0
  %1411 = vmatprep.subr.mxu0 0.0
  %1412 = vmatpush1.msra.mxu0 0.0
  %1413 = vmatprep.subr.mxu0 0.0
  %1414 = vmatpush1.msra.mxu0 0.0
  %1415 = vmatprep.subr.mxu0 0.0
  %1416 = vmatpush1.msra.mxu0 0.0
  %1417 = vmatprep.subr.mxu0 0.0
  %1418 = vmatpush1.msra.mxu0 0.0
  %1419 = vmatprep.subr.mxu0 0.0
  %1420 = vmatpush1.msra.mxu0 0.0
  %1421 = vmatprep.subr.mxu0 0.0
  %1422 = vmatpush1.msra.mxu0 0.0
  %1423 = vmatprep.mubr.f32.mxu0 0.0
  %1424 = vmatmul.mubr.f32.gmra.mrb[0].mxu0 %v1286
  %v1425 = vpop.f32.mrb[0].mxu0
  %v1426 = vadd.f32 0.0, %v1425
  %v1427 = vpop.f32.mrb[0].mxu0
  %1428 = vdwg.mxu0
  %v1430 = vrot.slane %v1355, 4
  %v1432 = vadd.f32 %v173, %v1430
  %v1433 = vxor.u32 %v1432, 2147483648
  %v1434 = vmul.f32 %v1433, 1.442695
  %v1435 = vpow.pop %v1434
  %v1436 = vadd.f32 %v1435, 1.0
  %v1437 = vrcp.pop %v1436
  %v1438 = vmul.f32 1.0, %v1437
  %v1440 = vrot.slane %v1357, 4
  %v1442 = vadd.f32 %v175, %v1440
  %v1443 = vxor.u32 %v1442, 2147483648
  %v1444 = vmul.f32 %v1443, 1.442695
  %v1445 = vpow.pop %v1444
  %v1446 = vadd.f32 %v1445, 1.0
  %v1447 = vrcp.pop %v1446
  %v1448 = vmul.f32 1.0, %v1447
  %v1450 = vrot.slane %v1426, 4
  %v1452 = vmul.f32 %v1438, %v1450
  %v1453 = vadd.f32 %v249, %v1452
  %v1454 = vtanh.pop %v1453
  %v1455 = vsub.f32 1.0, %v1448
  %v1456 = vmul.f32 %v1455, %v1454
  %v1457 = vrot.slane %v1283, 6
  %v1459 = vmul.f32 %v1448, %v1457
  %v1460 = vadd.f32 %v1456, %v1459
  %1461 = vst [vmem:[#allocation2 + $0x8] sm:$0x30] %v1460
  %v1463 = vrot.slane %v1460, 4
  %1465 = vmatprep.subr.mxu0 %v46
  %1466 = vmatpush1.msra.mxu0 %v45
  %1467 = vmatprep.subr.mxu0 %v49
  %1468 = vmatpush1.msra.mxu0 %v48
  %1469 = vmatprep.subr.mxu0 %v52
  %1470 = vmatpush1.msra.mxu0 %v51
  %1471 = vmatprep.subr.mxu0 %v55
  %1472 = vmatpush1.msra.mxu0 %v54
  %1473 = vmatprep.subr.mxu0 %v58
  %1474 = vmatpush1.msra.mxu0 %v57
  %1475 = vmatprep.subr.mxu0 %v61
  %1476 = vmatpush1.msra.mxu0 %v60
  %1477 = vmatprep.subr.mxu0 %v64
  %1478 = vmatpush1.msra.mxu0 %v63
  %1479 = vmatprep.subr.mxu0 %v67
  %1480 = vmatpush1.msra.mxu0 %v66
  %1481 = vmatprep.subr.mxu0 %v70
  %1482 = vmatpush1.msra.mxu0 %v69
  %1483 = vmatprep.subr.mxu0 %v73
  %1484 = vmatpush1.msra.mxu0 %v72
  %1485 = vmatprep.subr.mxu0 %v76
  %1486 = vmatpush1.msra.mxu0 %v75
  %1487 = vmatprep.subr.mxu0 %v79
  %1488 = vmatpush1.msra.mxu0 %v78
  %1489 = vmatprep.subr.mxu0 %v82
  %1490 = vmatpush1.msra.mxu0 %v81
  %1491 = vmatprep.subr.mxu0 %v85
  %1492 = vmatpush1.msra.mxu0 %v84
  %1493 = vmatprep.subr.mxu0 %v88
  %1494 = vmatpush1.msra.mxu0 %v87
  %1495 = vmatprep.subr.mxu0 %v91
  %1496 = vmatpush1.msra.mxu0 %v90
  %1497 = vmatprep.subr.mxu0 0.0
  %1498 = vmatpush1.msra.mxu0 0.0
  %1499 = vmatprep.subr.mxu0 0.0
  %1500 = vmatpush1.msra.mxu0 0.0
  %1501 = vmatprep.subr.mxu0 0.0
  %1502 = vmatpush1.msra.mxu0 0.0
  %1503 = vmatprep.subr.mxu0 0.0
  %1504 = vmatpush1.msra.mxu0 0.0
  %1505 = vmatprep.subr.mxu0 0.0
  %1506 = vmatpush1.msra.mxu0 0.0
  %1507 = vmatprep.subr.mxu0 0.0
  %1508 = vmatpush1.msra.mxu0 0.0
  %1509 = vmatprep.subr.mxu0 0.0
  %1510 = vmatpush1.msra.mxu0 0.0
  %1511 = vmatprep.subr.mxu0 0.0
  %1512 = vmatpush1.msra.mxu0 0.0
  %1513 = vmatprep.subr.mxu0 0.0
  %1514 = vmatpush1.msra.mxu0 0.0
  %1515 = vmatprep.subr.mxu0 0.0
  %1516 = vmatpush1.msra.mxu0 0.0
  %1517 = vmatprep.subr.mxu0 0.0
  %1518 = vmatpush1.msra.mxu0 0.0
  %1519 = vmatprep.subr.mxu0 0.0
  %1520 = vmatpush1.msra.mxu0 0.0
  %1521 = vmatprep.subr.mxu0 0.0
  %1522 = vmatpush1.msra.mxu0 0.0
  %1523 = vmatprep.subr.mxu0 0.0
  %1524 = vmatpush1.msra.mxu0 0.0
  %1525 = vmatprep.subr.mxu0 0.0
  %1526 = vmatpush1.msra.mxu0 0.0
  %1527 = vmatprep.subr.mxu0 0.0
  %1528 = vmatpush1.msra.mxu0 0.0
  %1529 = vmatprep.mubr.f32.mxu0 0.0
  %1530 = vmatmul.mubr.f32.gmra.mrb[0].mxu0 %v1463
  %v1531 = vpop.f32.mrb[0].mxu0
  %v1532 = vadd.f32 0.0, %v1531
  %v1533 = vpop.f32.mrb[0].mxu0
  %v1534 = vadd.f32 0.0, %v1533
  %1535 = vdwg.mxu0
  %1536 = vmatprep.subr.mxu0 0.0
  %1537 = vmatpush1.msra.mxu0 %v47
  %1538 = vmatprep.subr.mxu0 0.0
  %1539 = vmatpush1.msra.mxu0 %v50
  %1540 = vmatprep.subr.mxu0 0.0
  %1541 = vmatpush1.msra.mxu0 %v53
  %1542 = vmatprep.subr.mxu0 0.0
  %1543 = vmatpush1.msra.mxu0 %v56
  %1544 = vmatprep.subr.mxu0 0.0
  %1545 = vmatpush1.msra.mxu0 %v59
  %1546 = vmatprep.subr.mxu0 0.0
  %1547 = vmatpush1.msra.mxu0 %v62
  %1548 = vmatprep.subr.mxu0 0.0
  %1549 = vmatpush1.msra.mxu0 %v65
  %1550 = vmatprep.subr.mxu0 0.0
  %1551 = vmatpush1.msra.mxu0 %v68
  %1552 = vmatprep.subr.mxu0 0.0
  %1553 = vmatpush1.msra.mxu0 %v71
  %1554 = vmatprep.subr.mxu0 0.0
  %1555 = vmatpush1.msra.mxu0 %v74
  %1556 = vmatprep.subr.mxu0 0.0
  %1557 = vmatpush1.msra.mxu0 %v77
  %1558 = vmatprep.subr.mxu0 0.0
  %1559 = vmatpush1.msra.mxu0 %v80
  %1560 = vmatprep.subr.mxu0 0.0
  %1561 = vmatpush1.msra.mxu0 %v83
  %1562 = vmatprep.subr.mxu0 0.0
  %1563 = vmatpush1.msra.mxu0 %v86
  %1564 = vmatprep.subr.mxu0 0.0
  %1565 = vmatpush1.msra.mxu0 %v89
  %1566 = vmatprep.subr.mxu0 0.0
  %1567 = vmatpush1.msra.mxu0 %v92
  %1568 = vmatprep.subr.mxu0 0.0
  %1569 = vmatpush1.msra.mxu0 0.0
  %1570 = vmatprep.subr.mxu0 0.0
  %1571 = vmatpush1.msra.mxu0 0.0
  %1572 = vmatprep.subr.mxu0 0.0
  %1573 = vmatpush1.msra.mxu0 0.0
  %1574 = vmatprep.subr.mxu0 0.0
  %1575 = vmatpush1.msra.mxu0 0.0
  %1576 = vmatprep.subr.mxu0 0.0
  %1577 = vmatpush1.msra.mxu0 0.0
  %1578 = vmatprep.subr.mxu0 0.0
  %1579 = vmatpush1.msra.mxu0 0.0
  %1580 = vmatprep.subr.mxu0 0.0
  %1581 = vmatpush1.msra.mxu0 0.0
  %1582 = vmatprep.subr.mxu0 0.0
  %1583 = vmatpush1.msra.mxu0 0.0
  %1584 = vmatprep.subr.mxu0 0.0
  %1585 = vmatpush1.msra.mxu0 0.0
  %1586 = vmatprep.subr.mxu0 0.0
  %1587 = vmatpush1.msra.mxu0 0.0
  %1588 = vmatprep.subr.mxu0 0.0
  %1589 = vmatpush1.msra.mxu0 0.0
  %1590 = vmatprep.subr.mxu0 0.0
  %1591 = vmatpush1.msra.mxu0 0.0
  %1592 = vmatprep.subr.mxu0 0.0
  %1593 = vmatpush1.msra.mxu0 0.0
  %1594 = vmatprep.subr.mxu0 0.0
  %1595 = vmatpush1.msra.mxu0 0.0
  %1596 = vmatprep.subr.mxu0 0.0
  %1597 = vmatpush1.msra.mxu0 0.0
  %1598 = vmatprep.subr.mxu0 0.0
  %1599 = vmatpush1.msra.mxu0 0.0
  %1600 = vmatprep.mubr.f32.mxu0 0.0
  %1601 = vmatmul.mubr.f32.gmra.mrb[0].mxu0 %v1463
  %v1602 = vpop.f32.mrb[0].mxu0
  %v1603 = vadd.f32 0.0, %v1602
  %v1604 = vpop.f32.mrb[0].mxu0
  %1605 = vdwg.mxu0
  %v1607 = vrot.slane %v1532, 2
  %v1609 = vadd.f32 %v173, %v1607
  %v1610 = vxor.u32 %v1609, 2147483648
  %v1611 = vmul.f32 %v1610, 1.442695
  %v1612 = vpow.pop %v1611
  %v1613 = vadd.f32 %v1612, 1.0
  %v1614 = vrcp.pop %v1613
  %v1615 = vmul.f32 1.0, %v1614
  %v1617 = vrot.slane %v1534, 2
  %v1619 = vadd.f32 %v175, %v1617
  %v1620 = vxor.u32 %v1619, 2147483648
  %v1621 = vmul.f32 %v1620, 1.442695
  %v1622 = vpow.pop %v1621
  %v1623 = vadd.f32 %v1622, 1.0
  %v1624 = vrcp.pop %v1623
  %v1625 = vmul.f32 1.0, %v1624
  %v1627 = vrot.slane %v1603, 2
  %v1629 = vmul.f32 %v1615, %v1627
  %v1630 = vadd.f32 %v249, %v1629
  %v1631 = vtanh.pop %v1630
  %v1632 = vsub.f32 1.0, %v1625
  %v1633 = vmul.f32 %v1632, %v1631
  %v1634 = vrot.slane %v1460, 6
  %v1636 = vmul.f32 %v1625, %v1634
  %v1637 = vadd.f32 %v1633, %v1636
  %1638 = vst [vmem:[#allocation2 + $0x8] sm:$0xc0] %v1637
  %v1639 = vld [vmem:[#allocation2] sm:$0xff]
  %v1640 = vld [vmem:[#allocation2 + $0x8] sm:$0xff]
  %1641 = vadd.xlane.f32.xlu0 %v1639
  %v1642 = vpop.xlane.xlu0 %1641
  %1643 = vadd.xlane.f32.xlu0 %v1640
  %v1644 = vpop.xlane.xlu0 %1643
  %v1645 = vmul.f32 %v1642, 0.01
  %v1646 = vmul.f32 %v1644, 0.01
  %v1647 = vsub.f32 %v1639, %v1645
  %v1648 = vsub.f32 %v1640, %v1646
  %v1649 = vmul.f32 %v1647, %v36
  %v1650 = vmul.f32 %v1648, %v36
  %v1651 = vmul.f32 %v1649, %v1649
  %v1652 = vmul.f32 %v1650, %v1650
  %1653 = vadd.xlane.f32.xlu0 %v1651
  %v1654 = vpop.xlane.xlu0 %1653
  %1655 = vadd.xlane.f32.xlu0 %v1652
  %v1656 = vpop.xlane.xlu0 %1655
  %v1657 = vmul.f32 %v1654, 0.01
  %v1658 = vmul.f32 %v1656, 0.01
  %v1659 = vadd.f32 %v1657, 1e-05
  %v1660 = vadd.f32 %v1658, 1e-05
  %v1661 = vrsqrt.pop %v1659
  %v1662 = vrsqrt.pop %v1660
  %v1663 = vmul.f32 %v1649, %v1661
  %v1664 = vmul.f32 %v1650, %v1662
  %v1665 = vld [vmem:[%s3] sm:$0xff]
  %v1666 = vld [vmem:[%s3 + $0x8] sm:$0xff]
  %v1667 = vld [vmem:[%s3 + $0x10] sm:$0xff]
  %v1668 = vld [vmem:[%s3 + $0x18] sm:$0xff]
  %v1669 = vld [vmem:[%s3 + $0x20] sm:$0xff]
  %v1670 = vld [vmem:[%s3 + $0x28] sm:$0xff]
  %v1671 = vld [vmem:[%s3 + $0x30] sm:$0xff]
  %v1672 = vld [vmem:[%s3 + $0x38] sm:$0xff]
  %v1673 = vld [vmem:[%s3 + $0x40] sm:$0xff]
  %v1674 = vld [vmem:[%s3 + $0x48] sm:$0xff]
  %v1675 = vld [vmem:[%s3 + $0x50] sm:$0xff]
  %v1676 = vld [vmem:[%s3 + $0x58] sm:$0xff]
  %v1677 = vld [vmem:[%s3 + $0x60] sm:$0xff]
  %v1678 = vld [vmem:[%s3 + $0x68] sm:$0xff]
  %v1679 = vld [vmem:[%s3 + $0x70] sm:$0xff]
  %v1680 = vld [vmem:[%s3 + $0x78] sm:$0xff]
  %v1681 = vld [vmem:[%s4] sm:$0x1]
  %v1683 = vlaneseq
  %v1684 = vshrl.u32 %v1683, 7
  %v1685 = vsub.s32 0, %v1684
  %v1686 = vrot.slane %v1681, %v1685
  %1688 = vmatprep.subr.mxu0 0.0
  %1689 = vmatpush1.msra.mxu0 %v1665
  %1690 = vmatprep.subr.mxu0 0.0
  %1691 = vmatpush1.msra.mxu0 %v1666
  %1692 = vmatprep.subr.mxu0 0.0
  %1693 = vmatpush1.msra.mxu0 %v1667
  %1694 = vmatprep.subr.mxu0 0.0
  %1695 = vmatpush1.msra.mxu0 %v1668
  %1696 = vmatprep.subr.mxu0 0.0
  %1697 = vmatpush1.msra.mxu0 %v1669
  %1698 = vmatprep.subr.mxu0 0.0
  %1699 = vmatpush1.msra.mxu0 %v1670
  %1700 = vmatprep.subr.mxu0 0.0
  %1701 = vmatpush1.msra.mxu0 %v1671
  %1702 = vmatprep.subr.mxu0 0.0
  %1703 = vmatpush1.msra.mxu0 %v1672
  %1704 = vmatprep.subr.mxu0 0.0
  %1705 = vmatpush1.msra.mxu0 %v1673
  %1706 = vmatprep.subr.mxu0 0.0
  %1707 = vmatpush1.msra.mxu0 %v1674
  %1708 = vmatprep.subr.mxu0 0.0
  %1709 = vmatpush1.msra.mxu0 %v1675
  %1710 = vmatprep.subr.mxu0 0.0
  %1711 = vmatpush1.msra.mxu0 %v1676
  %1712 = vmatprep.subr.mxu0 0.0
  %1713 = vmatpush1.msra.mxu0 %v1677
  %1714 = vmatprep.subr.mxu0 0.0
  %1715 = vmatpush1.msra.mxu0 %v1678
  %1716 = vmatprep.subr.mxu0 0.0
  %1717 = vmatpush1.msra.mxu0 %v1679
  %1718 = vmatprep.subr.mxu0 0.0
  %1719 = vmatpush1.msra.mxu0 %v1680
  %1720 = vmatprep.subr.mxu0 0.0
  %1721 = vmatpush1.msra.mxu0 0.0
  %1722 = vmatprep.subr.mxu0 0.0
  %1723 = vmatpush1.msra.mxu0 0.0
  %1724 = vmatprep.subr.mxu0 0.0
  %1725 = vmatpush1.msra.mxu0 0.0
  %1726 = vmatprep.subr.mxu0 0.0
  %1727 = vmatpush1.msra.mxu0 0.0
  %1728 = vmatprep.subr.mxu0 0.0
  %1729 = vmatpush1.msra.mxu0 0.0
  %1730 = vmatprep.subr.mxu0 0.0
  %1731 = vmatpush1.msra.mxu0 0.0
  %1732 = vmatprep.subr.mxu0 0.0
  %1733 = vmatpush1.msra.mxu0 0.0
  %1734 = vmatprep.subr.mxu0 0.0
  %1735 = vmatpush1.msra.mxu0 0.0
  %1736 = vmatprep.subr.mxu0 0.0
  %1737 = vmatpush1.msra.mxu0 0.0
  %1738 = vmatprep.subr.mxu0 0.0
  %1739 = vmatpush1.msra.mxu0 0.0
  %1740 = vmatprep.subr.mxu0 0.0
  %1741 = vmatpush1.msra.mxu0 0.0
  %1742 = vmatprep.subr.mxu0 0.0
  %1743 = vmatpush1.msra.mxu0 0.0
  %1744 = vmatprep.subr.mxu0 0.0
  %1745 = vmatpush1.msra.mxu0 0.0
  %1746 = vmatprep.subr.mxu0 0.0
  %1747 = vmatpush1.msra.mxu0 0.0
  %1748 = vmatprep.subr.mxu0 0.0
  %1749 = vmatpush1.msra.mxu0 0.0
  %1750 = vmatprep.subr.mxu0 0.0
  %1751 = vmatpush1.msra.mxu0 0.0
  %1752 = vmatprep.mubr.f32.mxu0 0.0
  %1753 = vmatmul.mubr.f32.gmra.mrb[0].mxu0 %v1663
  %v1754 = vpop.f32.mrb[0].mxu0
  %v1755 = vadd.f32 %v1686, %v1754
  %v1756 = vpop.f32.mrb[0].mxu0
  %1757 = vmatprep.mubr.f32.mxu0 0.0
  %1758 = vmatmul.mubr.f32.gmra.mrb[0].mxu0 %v1664
  %v1759 = vpop.f32.mrb[0].mxu0
  %v1760 = vadd.f32 %v1686, %v1759
  %v1761 = vpop.f32.mrb[0].mxu0
  %1762 = vdwg.mxu0
  %v1763 = vld [vmem:[%s5] sm:$0xff]
  %v1764 = vld [vmem:[%s5 + $0x8] sm:$0xff]
  %v1765 = vld [vmem:[%s5 + $0x10] sm:$0xff]
  %v1766 = vld [vmem:[%s6] sm:$0xff]
  %v1767 = vld [vmem:[%s6 + $0x8] sm:$0xff]
  %v1768 = vld [vmem:[%s6 + $0x10] sm:$0xff]
  %v1769 = vld [vmem:[%s6 + $0x18] sm:$0xff]
  %v1770 = vld [vmem:[%s6 + $0x20] sm:$0xff]
  %v1771 = vld [vmem:[%s6 + $0x28] sm:$0xff]
  %v1772 = vld [vmem:[%s6 + $0x30] sm:$0xff]
  %v1773 = vld [vmem:[%s6 + $0x38] sm:$0xff]
  %v1774 = vld [vmem:[%s6 + $0x40] sm:$0xff]
  %v1775 = vld [vmem:[%s6 + $0x48] sm:$0xff]
  %v1776 = vld [vmem:[%s6 + $0x50] sm:$0xff]
  %v1777 = vld [vmem:[%s6 + $0x58] sm:$0xff]
  %v1778 = vld [vmem:[%s6 + $0x60] sm:$0xff]
  %v1779 = vld [vmem:[%s6 + $0x68] sm:$0xff]
  %v1780 = vld [vmem:[%s6 + $0x70] sm:$0xff]
  %v1781 = vld [vmem:[%s6 + $0x78] sm:$0xff]
  %v1782 = vld [vmem:[%s6 + $0x80] sm:$0xff]
  %v1783 = vld [vmem:[%s6 + $0x88] sm:$0xff]
  %v1784 = vld [vmem:[%s6 + $0x90] sm:$0xff]
  %v1785 = vld [vmem:[%s6 + $0x98] sm:$0xff]
  %v1786 = vld [vmem:[%s6 + $0xa0] sm:$0xff]
  %v1787 = vld [vmem:[%s6 + $0xa8] sm:$0xff]
  %v1788 = vld [vmem:[%s6 + $0xb0] sm:$0xff]
  %v1789 = vld [vmem:[%s6 + $0xb8] sm:$0xff]
  %v1790 = vld [vmem:[%s6 + $0xc0] sm:$0xff]
  %v1791 = vld [vmem:[%s6 + $0xc8] sm:$0xff]
  %v1792 = vld [vmem:[%s6 + $0xd0] sm:$0xff]
  %v1793 = vld [vmem:[%s6 + $0xd8] sm:$0xff]
  %v1794 = vld [vmem:[%s6 + $0xe0] sm:$0xff]
  %v1795 = vld [vmem:[%s6 + $0xe8] sm:$0xff]
  %v1796 = vld [vmem:[%s6 + $0xf0] sm:$0xff]
  %v1797 = vld [vmem:[%s6 + $0xf8] sm:$0xff]
  %v1798 = vld [vmem:[%s6 + $0x100] sm:$0xff]
  %v1799 = vld [vmem:[%s6 + $0x108] sm:$0xff]
  %v1800 = vld [vmem:[%s6 + $0x110] sm:$0xff]
  %v1801 = vld [vmem:[%s6 + $0x118] sm:$0xff]
  %v1802 = vld [vmem:[%s6 + $0x120] sm:$0xff]
  %v1803 = vld [vmem:[%s6 + $0x128] sm:$0xff]
  %v1804 = vld [vmem:[%s6 + $0x130] sm:$0xff]
  %v1805 = vld [vmem:[%s6 + $0x138] sm:$0xff]
  %v1806 = vld [vmem:[%s6 + $0x140] sm:$0xff]
  %v1807 = vld [vmem:[%s6 + $0x148] sm:$0xff]
  %v1808 = vld [vmem:[%s6 + $0x150] sm:$0xff]
  %v1809 = vld [vmem:[%s6 + $0x158] sm:$0xff]
  %v1810 = vld [vmem:[%s6 + $0x160] sm:$0xff]
  %v1811 = vld [vmem:[%s6 + $0x168] sm:$0xff]
  %v1812 = vld [vmem:[%s6 + $0x170] sm:$0xff]
  %v1813 = vld [vmem:[%s6 + $0x178] sm:$0xff]
  %vm1814 = vcmask 64512
  %v1816 = vsel %vm1814, %v1755, 0
  %v1819 = vsel %vm1814, %v1760, 0
  %1821 = vmatprep.subr.mxu0 %v1764
  %1822 = vmatpush1.msra.mxu0 %v1763
  %1823 = vmatprep.subr.mxu0 0.0
  %1824 = vmatpush1.msra.mxu0 0.0
  %1825 = vmatprep.subr.mxu0 0.0
  %1826 = vmatpush1.msra.mxu0 0.0
  %1827 = vmatprep.subr.mxu0 0.0
  %1828 = vmatpush1.msra.mxu0 0.0
  %1829 = vmatprep.subr.mxu0 0.0
  %1830 = vmatpush1.msra.mxu0 0.0
  %1831 = vmatprep.subr.mxu0 0.0
  %1832 = vmatpush1.msra.mxu0 0.0
  %1833 = vmatprep.subr.mxu0 0.0
  %1834 = vmatpush1.msra.mxu0 0.0
  %1835 = vmatprep.subr.mxu0 0.0
  %1836 = vmatpush1.msra.mxu0 0.0
  %1837 = vmatprep.subr.mxu0 0.0
  %1838 = vmatpush1.msra.mxu0 0.0
  %1839 = vmatprep.subr.mxu0 0.0
  %1840 = vmatpush1.msra.mxu0 0.0
  %1841 = vmatprep.subr.mxu0 0.0
  %1842 = vmatpush1.msra.mxu0 0.0
  %1843 = vmatprep.subr.mxu0 0.0
  %1844 = vmatpush1.msra.mxu0 0.0
  %1845 = vmatprep.subr.mxu0 0.0
  %1846 = vmatpush1.msra.mxu0 0.0
  %1847 = vmatprep.subr.mxu0 0.0
  %1848 = vmatpush1.msra.mxu0 0.0
  %1849 = vmatprep.subr.mxu0 0.0
  %1850 = vmatpush1.msra.mxu0 0.0
  %1851 = vmatprep.subr.mxu0 0.0
  %1852 = vmatpush1.msra.mxu0 0.0
  %1853 = vmatprep.subr.mxu0 0.0
  %1854 = vmatpush1.msra.mxu0 0.0
  %1855 = vmatprep.subr.mxu0 0.0
  %1856 = vmatpush1.msra.mxu0 0.0
  %1857 = vmatprep.subr.mxu0 0.0
  %1858 = vmatpush1.msra.mxu0 0.0
  %1859 = vmatprep.subr.mxu0 0.0
  %1860 = vmatpush1.msra.mxu0 0.0
  %1861 = vmatprep.subr.mxu0 0.0
  %1862 = vmatpush1.msra.mxu0 0.0
  %1863 = vmatprep.subr.mxu0 0.0
  %1864 = vmatpush1.msra.mxu0 0.0
  %1865 = vmatprep.subr.mxu0 0.0
  %1866 = vmatpush1.msra.mxu0 0.0
  %1867 = vmatprep.subr.mxu0 0.0
  %1868 = vmatpush1.msra.mxu0 0.0
  %1869 = vmatprep.subr.mxu0 0.0
  %1870 = vmatpush1.msra.mxu0 0.0
  %1871 = vmatprep.subr.mxu0 0.0
  %1872 = vmatpush1.msra.mxu0 0.0
  %1873 = vmatprep.subr.mxu0 0.0
  %1874 = vmatpush1.msra.mxu0 0.0
  %1875 = vmatprep.subr.mxu0 0.0
  %1876 = vmatpush1.msra.mxu0 0.0
  %1877 = vmatprep.subr.mxu0 0.0
  %1878 = vmatpush1.msra.mxu0 0.0
  %1879 = vmatprep.subr.mxu0 0.0
  %1880 = vmatpush1.msra.mxu0 0.0
  %1881 = vmatprep.subr.mxu0 0.0
  %1882 = vmatpush1.msra.mxu0 0.0
  %1883 = vmatprep.subr.mxu0 0.0
  %1884 = vmatpush1.msra.mxu0 0.0
  %1885 = vmatprep.mubr.f32.mxu0 0.0
  %1886 = vmatmul.mubr.f32.gmra.mrb[0].mxu0 %v1816
  %v1887 = vpop.f32.mrb[0].mxu0
  %v1888 = vadd.f32 0.0, %v1887
  %v1889 = vpop.f32.mrb[0].mxu0
  %v1890 = vadd.f32 0.0, %v1889
  %1891 = vmatprep.mubr.f32.mxu0 0.0
  %1892 = vmatmul.mubr.f32.gmra.mrb[0].mxu0 %v1819
  %v1893 = vpop.f32.mrb[0].mxu0
  %v1894 = vadd.f32 0.0, %v1893
  %v1895 = vpop.f32.mrb[0].mxu0
  %v1896 = vadd.f32 0.0, %v1895
  %1897 = vdwg.mxu0
  %1898 = vmatprep.subr.mxu0 0.0
  %1899 = vmatpush1.msra.mxu0 %v1765
  %1900 = vmatprep.subr.mxu0 0.0
  %1901 = vmatpush1.msra.mxu0 0.0
  %1902 = vmatprep.subr.mxu0 0.0
  %1903 = vmatpush1.msra.mxu0 0.0
  %1904 = vmatprep.subr.mxu0 0.0
  %1905 = vmatpush1.msra.mxu0 0.0
  %1906 = vmatprep.subr.mxu0 0.0
  %1907 = vmatpush1.msra.mxu0 0.0
  %1908 = vmatprep.subr.mxu0 0.0
  %1909 = vmatpush1.msra.mxu0 0.0
  %1910 = vmatprep.subr.mxu0 0.0
  %1911 = vmatpush1.msra.mxu0 0.0
  %1912 = vmatprep.subr.mxu0 0.0
  %1913 = vmatpush1.msra.mxu0 0.0
  %1914 = vmatprep.subr.mxu0 0.0
  %1915 = vmatpush1.msra.mxu0 0.0
  %1916 = vmatprep.subr.mxu0 0.0
  %1917 = vmatpush1.msra.mxu0 0.0
  %1918 = vmatprep.subr.mxu0 0.0
  %1919 = vmatpush1.msra.mxu0 0.0
  %1920 = vmatprep.subr.mxu0 0.0
  %1921 = vmatpush1.msra.mxu0 0.0
  %1922 = vmatprep.subr.mxu0 0.0
  %1923 = vmatpush1.msra.mxu0 0.0
  %1924 = vmatprep.subr.mxu0 0.0
  %1925 = vmatpush1.msra.mxu0 0.0
  %1926 = vmatprep.subr.mxu0 0.0
  %1927 = vmatpush1.msra.mxu0 0.0
  %1928 = vmatprep.subr.mxu0 0.0
  %1929 = vmatpush1.msra.mxu0 0.0
  %1930 = vmatprep.subr.mxu0 0.0
  %1931 = vmatpush1.msra.mxu0 0.0
  %1932 = vmatprep.subr.mxu0 0.0
  %1933 = vmatpush1.msra.mxu0 0.0
  %1934 = vmatprep.subr.mxu0 0.0
  %1935 = vmatpush1.msra.mxu0 0.0
  %1936 = vmatprep.subr.mxu0 0.0
  %1937 = vmatpush1.msra.mxu0 0.0
  %1938 = vmatprep.subr.mxu0 0.0
  %1939 = vmatpush1.msra.mxu0 0.0
  %1940 = vmatprep.subr.mxu0 0.0
  %1941 = vmatpush1.msra.mxu0 0.0
  %1942 = vmatprep.subr.mxu0 0.0
  %1943 = vmatpush1.msra.mxu0 0.0
  %1944 = vmatprep.subr.mxu0 0.0
  %1945 = vmatpush1.msra.mxu0 0.0
  %1946 = vmatprep.subr.mxu0 0.0
  %1947 = vmatpush1.msra.mxu0 0.0
  %1948 = vmatprep.subr.mxu0 0.0
  %1949 = vmatpush1.msra.mxu0 0.0
  %1950 = vmatprep.subr.mxu0 0.0
  %1951 = vmatpush1.msra.mxu0 0.0
  %1952 = vmatprep.subr.mxu0 0.0
  %1953 = vmatpush1.msra.mxu0 0.0
  %1954 = vmatprep.subr.mxu0 0.0
  %1955 = vmatpush1.msra.mxu0 0.0
  %1956 = vmatprep.subr.mxu0 0.0
  %1957 = vmatpush1.msra.mxu0 0.0
  %1958 = vmatprep.subr.mxu0 0.0
  %1959 = vmatpush1.msra.mxu0 0.0
  %1960 = vmatprep.subr.mxu0 0.0
  %1961 = vmatpush1.msra.mxu0 0.0
  %1962 = vmatprep.mubr.f32.mxu0 0.0
  %1963 = vmatmul.mubr.f32.gmra.mrb[0].mxu0 %v1816
  %v1964 = vpop.f32.mrb[0].mxu0
  %v1965 = vadd.f32 0.0, %v1964
  %v1966 = vpop.f32.mrb[0].mxu0
  %1967 = vmatprep.mubr.f32.mxu0 0.0
  %1968 = vmatmul.mubr.f32.gmra.mrb[0].mxu0 %v1819
  %v1969 = vpop.f32.mrb[0].mxu0
  %v1970 = vadd.f32 0.0, %v1969
  %v1971 = vpop.f32.mrb[0].mxu0
  %1972 = vdwg.mxu0
  %1973 = vmatprep.subr.mxu0 %v1767
  %1974 = vmatpush1.msra.mxu0 %v1766
  %1975 = vmatprep.subr.mxu0 %v1770
  %1976 = vmatpush1.msra.mxu0 %v1769
  %1977 = vmatprep.subr.mxu0 %v1773
  %1978 = vmatpush1.msra.mxu0 %v1772
  %1979 = vmatprep.subr.mxu0 %v1776
  %1980 = vmatpush1.msra.mxu0 %v1775
  %1981 = vmatprep.subr.mxu0 %v1779
  %1982 = vmatpush1.msra.mxu0 %v1778
  %1983 = vmatprep.subr.mxu0 %v1782
  %1984 = vmatpush1.msra.mxu0 %v1781
  %1985 = vmatprep.subr.mxu0 %v1785
  %1986 = vmatpush1.msra.mxu0 %v1784
  %1987 = vmatprep.subr.mxu0 %v1788
  %1988 = vmatpush1.msra.mxu0 %v1787
  %1989 = vmatprep.subr.mxu0 %v1791
  %1990 = vmatpush1.msra.mxu0 %v1790
  %1991 = vmatprep.subr.mxu0 %v1794
  %1992 = vmatpush1.msra.mxu0 %v1793
  %1993 = vmatprep.subr.mxu0 %v1797
  %1994 = vmatpush1.msra.mxu0 %v1796
  %1995 = vmatprep.subr.mxu0 %v1800
  %1996 = vmatpush1.msra.mxu0 %v1799
  %1997 = vmatprep.subr.mxu0 %v1803
  %1998 = vmatpush1.msra.mxu0 %v1802
  %1999 = vmatprep.subr.mxu0 %v1806
  %2000 = vmatpush1.msra.mxu0 %v1805
  %2001 = vmatprep.subr.mxu0 %v1809
  %2002 = vmatpush1.msra.mxu0 %v1808
  %2003 = vmatprep.subr.mxu0 %v1812
  %2004 = vmatpush1.msra.mxu0 %v1811
  %2005 = vmatprep.subr.mxu0 0.0
  %2006 = vmatpush1.msra.mxu0 0.0
  %2007 = vmatprep.subr.mxu0 0.0
  %2008 = vmatpush1.msra.mxu0 0.0
  %2009 = vmatprep.subr.mxu0 0.0
  %2010 = vmatpush1.msra.mxu0 0.0
  %2011 = vmatprep.subr.mxu0 0.0
  %2012 = vmatpush1.msra.mxu0 0.0
  %2013 = vmatprep.subr.mxu0 0.0
  %2014 = vmatpush1.msra.mxu0 0.0
  %2015 = vmatprep.subr.mxu0 0.0
  %2016 = vmatpush1.msra.mxu0 0.0
  %2017 = vmatprep.subr.mxu0 0.0
  %2018 = vmatpush1.msra.mxu0 0.0
  %2019 = vmatprep.subr.mxu0 0.0
  %2020 = vmatpush1.msra.mxu0 0.0
  %2021 = vmatprep.subr.mxu0 0.0
  %2022 = vmatpush1.msra.mxu0 0.0
  %2023 = vmatprep.subr.mxu0 0.0
  %2024 = vmatpush1.msra.mxu0 0.0
  %2025 = vmatprep.subr.mxu0 0.0
  %2026 = vmatpush1.msra.mxu0 0.0
  %2027 = vmatprep.subr.mxu0 0.0
  %2028 = vmatpush1.msra.mxu0 0.0
  %2029 = vmatprep.subr.mxu0 0.0
  %2030 = vmatpush1.msra.mxu0 0.0
  %2031 = vmatprep.subr.mxu0 0.0
  %2032 = vmatpush1.msra.mxu0 0.0
  %2033 = vmatprep.subr.mxu0 0.0
  %2034 = vmatpush1.msra.mxu0 0.0
  %2035 = vmatprep.subr.mxu0 0.0
  %2036 = vmatpush1.msra.mxu0 0.0
  %2037 = vmatprep.mubr.f32.mxu0 0.0
  %2038 = vmatmul.mubr.f32.gmra.mrb[0].mxu0 0.0
  %v2039 = vpop.f32.mrb[0].mxu0
  %v2040 = vadd.f32 0.0, %v2039
  %v2041 = vpop.f32.mrb[0].mxu0
  %v2042 = vadd.f32 0.0, %v2041
  %2043 = vdwg.mxu0
  %2044 = vmatprep.subr.mxu0 0.0
  %2045 = vmatpush1.msra.mxu0 %v1768
  %2046 = vmatprep.subr.mxu0 0.0
  %2047 = vmatpush1.msra.mxu0 %v1771
  %2048 = vmatprep.subr.mxu0 0.0
  %2049 = vmatpush1.msra.mxu0 %v1774
  %2050 = vmatprep.subr.mxu0 0.0
  %2051 = vmatpush1.msra.mxu0 %v1777
  %2052 = vmatprep.subr.mxu0 0.0
  %2053 = vmatpush1.msra.mxu0 %v1780
  %2054 = vmatprep.subr.mxu0 0.0
  %2055 = vmatpush1.msra.mxu0 %v1783
  %2056 = vmatprep.subr.mxu0 0.0
  %2057 = vmatpush1.msra.mxu0 %v1786
  %2058 = vmatprep.subr.mxu0 0.0
  %2059 = vmatpush1.msra.mxu0 %v1789
  %2060 = vmatprep.subr.mxu0 0.0
  %2061 = vmatpush1.msra.mxu0 %v1792
  %2062 = vmatprep.subr.mxu0 0.0
  %2063 = vmatpush1.msra.mxu0 %v1795
  %2064 = vmatprep.subr.mxu0 0.0
  %2065 = vmatpush1.msra.mxu0 %v1798
  %2066 = vmatprep.subr.mxu0 0.0
  %2067 = vmatpush1.msra.mxu0 %v1801
  %2068 = vmatprep.subr.mxu0 0.0
  %2069 = vmatpush1.msra.mxu0 %v1804
  %2070 = vmatprep.subr.mxu0 0.0
  %2071 = vmatpush1.msra.mxu0 %v1807
  %2072 = vmatprep.subr.mxu0 0.0
  %2073 = vmatpush1.msra.mxu0 %v1810
  %2074 = vmatprep.subr.mxu0 0.0
  %2075 = vmatpush1.msra.mxu0 %v1813
  %2076 = vmatprep.subr.mxu0 0.0
  %2077 = vmatpush1.msra.mxu0 0.0
  %2078 = vmatprep.subr.mxu0 0.0
  %2079 = vmatpush1.msra.mxu0 0.0
  %2080 = vmatprep.subr.mxu0 0.0
  %2081 = vmatpush1.msra.mxu0 0.0
  %2082 = vmatprep.subr.mxu0 0.0
  %2083 = vmatpush1.msra.mxu0 0.0
  %2084 = vmatprep.subr.mxu0 0.0
  %2085 = vmatpush1.msra.mxu0 0.0
  %2086 = vmatprep.subr.mxu0 0.0
  %2087 = vmatpush1.msra.mxu0 0.0
  %2088 = vmatprep.subr.mxu0 0.0
  %2089 = vmatpush1.msra.mxu0 0.0
  %2090 = vmatprep.subr.mxu0 0.0
  %2091 = vmatpush1.msra.mxu0 0.0
  %2092 = vmatprep.subr.mxu0 0.0
  %2093 = vmatpush1.msra.mxu0 0.0
  %2094 = vmatprep.subr.mxu0 0.0
  %2095 = vmatpush1.msra.mxu0 0.0
  %2096 = vmatprep.subr.mxu0 0.0
  %2097 = vmatpush1.msra.mxu0 0.0
  %2098 = vmatprep.subr.mxu0 0.0
  %2099 = vmatpush1.msra.mxu0 0.0
  %2100 = vmatprep.subr.mxu0 0.0
  %2101 = vmatpush1.msra.mxu0 0.0
  %2102 = vmatprep.subr.mxu0 0.0
  %2103 = vmatpush1.msra.mxu0 0.0
  %2104 = vmatprep.subr.mxu0 0.0
  %2105 = vmatpush1.msra.mxu0 0.0
  %2106 = vmatprep.subr.mxu0 0.0
  %2107 = vmatpush1.msra.mxu0 0.0
  %2108 = vmatprep.mubr.f32.mxu0 0.0
  %2109 = vmatmul.mubr.f32.gmra.mrb[0].mxu0 0.0
  %v2110 = vpop.f32.mrb[0].mxu0
  %v2111 = vadd.f32 0.0, %v2110
  %v2112 = vpop.f32.mrb[0].mxu0
  %2113 = vdwg.mxu0
  %v2114 = vadd.f32 %v1888, %v2040
  %v2115 = vxor.u32 %v2114, 2147483648
  %v2116 = vmul.f32 %v2115, 1.442695
  %v2117 = vpow.pop %v2116
  %v2118 = vadd.f32 %v2117, 1.0
  %v2119 = vrcp.pop %v2118
  %v2120 = vmul.f32 1.0, %v2119
  %v2121 = vadd.f32 %v1890, %v2042
  %v2122 = vxor.u32 %v2121, 2147483648
  %v2123 = vmul.f32 %v2122, 1.442695
  %v2124 = vpow.pop %v2123
  %v2125 = vadd.f32 %v2124, 1.0
  %v2126 = vrcp.pop %v2125
  %v2127 = vmul.f32 1.0, %v2126
  %v2128 = vmul.f32 %v2120, %v2111
  %v2129 = vadd.f32 %v1965, %v2128
  %v2130 = vtanh.pop %v2129
  %v2131 = vsub.f32 1.0, %v2127
  %v2132 = vmul.f32 %v2131, %v2130
  %v2133 = vmul.f32 %v2127, 0.0
  %v2134 = vadd.f32 %v2132, %v2133
  %2135 = vst [vmem:[#allocation2] sm:$0x3] %v2134
  %2136 = vmatprep.subr.mxu0 %v1767
  %2137 = vmatpush1.msra.mxu0 %v1766
  %2138 = vmatprep.subr.mxu0 %v1770
  %2139 = vmatpush1.msra.mxu0 %v1769
  %2140 = vmatprep.subr.mxu0 %v1773
  %2141 = vmatpush1.msra.mxu0 %v1772
  %2142 = vmatprep.subr.mxu0 %v1776
  %2143 = vmatpush1.msra.mxu0 %v1775
  %2144 = vmatprep.subr.mxu0 %v1779
  %2145 = vmatpush1.msra.mxu0 %v1778
  %2146 = vmatprep.subr.mxu0 %v1782
  %2147 = vmatpush1.msra.mxu0 %v1781
  %2148 = vmatprep.subr.mxu0 %v1785
  %2149 = vmatpush1.msra.mxu0 %v1784
  %2150 = vmatprep.subr.mxu0 %v1788
  %2151 = vmatpush1.msra.mxu0 %v1787
  %2152 = vmatprep.subr.mxu0 %v1791
  %2153 = vmatpush1.msra.mxu0 %v1790
  %2154 = vmatprep.subr.mxu0 %v1794
  %2155 = vmatpush1.msra.mxu0 %v1793
  %2156 = vmatprep.subr.mxu0 %v1797
  %2157 = vmatpush1.msra.mxu0 %v1796
  %2158 = vmatprep.subr.mxu0 %v1800
  %2159 = vmatpush1.msra.mxu0 %v1799
  %2160 = vmatprep.subr.mxu0 %v1803
  %2161 = vmatpush1.msra.mxu0 %v1802
  %2162 = vmatprep.subr.mxu0 %v1806
  %2163 = vmatpush1.msra.mxu0 %v1805
  %2164 = vmatprep.subr.mxu0 %v1809
  %2165 = vmatpush1.msra.mxu0 %v1808
  %2166 = vmatprep.subr.mxu0 %v1812
  %2167 = vmatpush1.msra.mxu0 %v1811
  %2168 = vmatprep.subr.mxu0 0.0
  %2169 = vmatpush1.msra.mxu0 0.0
  %2170 = vmatprep.subr.mxu0 0.0
  %2171 = vmatpush1.msra.mxu0 0.0
  %2172 = vmatprep.subr.mxu0 0.0
  %2173 = vmatpush1.msra.mxu0 0.0
  %2174 = vmatprep.subr.mxu0 0.0
  %2175 = vmatpush1.msra.mxu0 0.0
  %2176 = vmatprep.subr.mxu0 0.0
  %2177 = vmatpush1.msra.mxu0 0.0
  %2178 = vmatprep.subr.mxu0 0.0
  %2179 = vmatpush1.msra.mxu0 0.0
  %2180 = vmatprep.subr.mxu0 0.0
  %2181 = vmatpush1.msra.mxu0 0.0
  %2182 = vmatprep.subr.mxu0 0.0
  %2183 = vmatpush1.msra.mxu0 0.0
  %2184 = vmatprep.subr.mxu0 0.0
  %2185 = vmatpush1.msra.mxu0 0.0
  %2186 = vmatprep.subr.mxu0 0.0
  %2187 = vmatpush1.msra.mxu0 0.0
  %2188 = vmatprep.subr.mxu0 0.0
  %2189 = vmatpush1.msra.mxu0 0.0
  %2190 = vmatprep.subr.mxu0 0.0
  %2191 = vmatpush1.msra.mxu0 0.0
  %2192 = vmatprep.subr.mxu0 0.0
  %2193 = vmatpush1.msra.mxu0 0.0
  %2194 = vmatprep.subr.mxu0 0.0
  %2195 = vmatpush1.msra.mxu0 0.0
  %2196 = vmatprep.subr.mxu0 0.0
  %2197 = vmatpush1.msra.mxu0 0.0
  %2198 = vmatprep.subr.mxu0 0.0
  %2199 = vmatpush1.msra.mxu0 0.0
  %2200 = vmatprep.mubr.f32.mxu0 0.0
  %2201 = vmatmul.mubr.f32.gmra.mrb[0].mxu0 %v2134
  %v2202 = vpop.f32.mrb[0].mxu0
  %v2203 = vadd.f32 0.0, %v2202
  %v2204 = vpop.f32.mrb[0].mxu0
  %v2205 = vadd.f32 0.0, %v2204
  %2206 = vdwg.mxu0
  %2207 = vmatprep.subr.mxu0 0.0
  %2208 = vmatpush1.msra.mxu0 %v1768
  %2209 = vmatprep.subr.mxu0 0.0
  %2210 = vmatpush1.msra.mxu0 %v1771
  %2211 = vmatprep.subr.mxu0 0.0
  %2212 = vmatpush1.msra.mxu0 %v1774
  %2213 = vmatprep.subr.mxu0 0.0
  %2214 = vmatpush1.msra.mxu0 %v1777
  %2215 = vmatprep.subr.mxu0 0.0
  %2216 = vmatpush1.msra.mxu0 %v1780
  %2217 = vmatprep.subr.mxu0 0.0
  %2218 = vmatpush1.msra.mxu0 %v1783
  %2219 = vmatprep.subr.mxu0 0.0
  %2220 = vmatpush1.msra.mxu0 %v1786
  %2221 = vmatprep.subr.mxu0 0.0
  %2222 = vmatpush1.msra.mxu0 %v1789
  %2223 = vmatprep.subr.mxu0 0.0
  %2224 = vmatpush1.msra.mxu0 %v1792
  %2225 = vmatprep.subr.mxu0 0.0
  %2226 = vmatpush1.msra.mxu0 %v1795
  %2227 = vmatprep.subr.mxu0 0.0
  %2228 = vmatpush1.msra.mxu0 %v1798
  %2229 = vmatprep.subr.mxu0 0.0
  %2230 = vmatpush1.msra.mxu0 %v1801
  %2231 = vmatprep.subr.mxu0 0.0
  %2232 = vmatpush1.msra.mxu0 %v1804
  %2233 = vmatprep.subr.mxu0 0.0
  %2234 = vmatpush1.msra.mxu0 %v1807
  %2235 = vmatprep.subr.mxu0 0.0
  %2236 = vmatpush1.msra.mxu0 %v1810
  %2237 = vmatprep.subr.mxu0 0.0
  %2238 = vmatpush1.msra.mxu0 %v1813
  %2239 = vmatprep.subr.mxu0 0.0
  %2240 = vmatpush1.msra.mxu0 0.0
  %2241 = vmatprep.subr.mxu0 0.0
  %2242 = vmatpush1.msra.mxu0 0.0
  %2243 = vmatprep.subr.mxu0 0.0
  %2244 = vmatpush1.msra.mxu0 0.0
  %2245 = vmatprep.subr.mxu0 0.0
  %2246 = vmatpush1.msra.mxu0 0.0
  %2247 = vmatprep.subr.mxu0 0.0
  %2248 = vmatpush1.msra.mxu0 0.0
  %2249 = vmatprep.subr.mxu0 0.0
  %2250 = vmatpush1.msra.mxu0 0.0
  %2251 = vmatprep.subr.mxu0 0.0
  %2252 = vmatpush1.msra.mxu0 0.0
  %2253 = vmatprep.subr.mxu0 0.0
  %2254 = vmatpush1.msra.mxu0 0.0
  %2255 = vmatprep.subr.mxu0 0.0
  %2256 = vmatpush1.msra.mxu0 0.0
  %2257 = vmatprep.subr.mxu0 0.0
  %2258 = vmatpush1.msra.mxu0 0.0
  %2259 = vmatprep.subr.mxu0 0.0
  %2260 = vmatpush1.msra.mxu0 0.0
  %2261 = vmatprep.subr.mxu0 0.0
  %2262 = vmatpush1.msra.mxu0 0.0
  %2263 = vmatprep.subr.mxu0 0.0
  %2264 = vmatpush1.msra.mxu0 0.0
  %2265 = vmatprep.subr.mxu0 0.0
  %2266 = vmatpush1.msra.mxu0 0.0
  %2267 = vmatprep.subr.mxu0 0.0
  %2268 = vmatpush1.msra.mxu0 0.0
  %2269 = vmatprep.subr.mxu0 0.0
  %2270 = vmatpush1.msra.mxu0 0.0
  %2271 = vmatprep.mubr.f32.mxu0 0.0
  %2272 = vmatmul.mubr.f32.gmra.mrb[0].mxu0 %v2134
  %v2273 = vpop.f32.mrb[0].mxu0
  %v2274 = vadd.f32 0.0, %v2273
  %v2275 = vpop.f32.mrb[0].mxu0
  %2276 = vdwg.mxu0
  %v2278 = vrot.slane %v2203, 6
  %v2280 = vadd.f32 %v1888, %v2278
  %v2281 = vxor.u32 %v2280, 2147483648
  %v2282 = vmul.f32 %v2281, 1.442695
  %v2283 = vpow.pop %v2282
  %v2284 = vadd.f32 %v2283, 1.0
  %v2285 = vrcp.pop %v2284
  %v2286 = vmul.f32 1.0, %v2285
  %v2288 = vrot.slane %v2205, 6
  %v2290 = vadd.f32 %v1890, %v2288
  %v2291 = vxor.u32 %v2290, 2147483648
  %v2292 = vmul.f32 %v2291, 1.442695
  %v2293 = vpow.pop %v2292
  %v2294 = vadd.f32 %v2293, 1.0
  %v2295 = vrcp.pop %v2294
  %v2296 = vmul.f32 1.0, %v2295
  %v2298 = vrot.slane %v2274, 6
  %v2300 = vmul.f32 %v2286, %v2298
  %v2301 = vadd.f32 %v1965, %v2300
  %v2302 = vtanh.pop %v2301
  %v2303 = vsub.f32 1.0, %v2296
  %v2304 = vmul.f32 %v2303, %v2302
  %v2306 = vrot.slane %v2134, 6
  %v2308 = vmul.f32 %v2296, %v2306
  %v2309 = vadd.f32 %v2304, %v2308
  %2310 = vst [vmem:[#allocation2] sm:$0xc] %v2309
  %v2312 = vrot.slane %v2309, 2
  %2314 = vmatprep.subr.mxu0 %v1767
  %2315 = vmatpush1.msra.mxu0 %v1766
  %2316 = vmatprep.subr.mxu0 %v1770
  %2317 = vmatpush1.msra.mxu0 %v1769
  %2318 = vmatprep.subr.mxu0 %v1773
  %2319 = vmatpush1.msra.mxu0 %v1772
  %2320 = vmatprep.subr.mxu0 %v1776
  %2321 = vmatpush1.msra.mxu0 %v1775
  %2322 = vmatprep.subr.mxu0 %v1779
  %2323 = vmatpush1.msra.mxu0 %v1778
  %2324 = vmatprep.subr.mxu0 %v1782
  %2325 = vmatpush1.msra.mxu0 %v1781
  %2326 = vmatprep.subr.mxu0 %v1785
  %2327 = vmatpush1.msra.mxu0 %v1784
  %2328 = vmatprep.subr.mxu0 %v1788
  %2329 = vmatpush1.msra.mxu0 %v1787
  %2330 = vmatprep.subr.mxu0 %v1791
  %2331 = vmatpush1.msra.mxu0 %v1790
  %2332 = vmatprep.subr.mxu0 %v1794
  %2333 = vmatpush1.msra.mxu0 %v1793
  %2334 = vmatprep.subr.mxu0 %v1797
  %2335 = vmatpush1.msra.mxu0 %v1796
  %2336 = vmatprep.subr.mxu0 %v1800
  %2337 = vmatpush1.msra.mxu0 %v1799
  %2338 = vmatprep.subr.mxu0 %v1803
  %2339 = vmatpush1.msra.mxu0 %v1802
  %2340 = vmatprep.subr.mxu0 %v1806
  %2341 = vmatpush1.msra.mxu0 %v1805
  %2342 = vmatprep.subr.mxu0 %v1809
  %2343 = vmatpush1.msra.mxu0 %v1808
  %2344 = vmatprep.subr.mxu0 %v1812
  %2345 = vmatpush1.msra.mxu0 %v1811
  %2346 = vmatprep.subr.mxu0 0.0
  %2347 = vmatpush1.msra.mxu0 0.0
  %2348 = vmatprep.subr.mxu0 0.0
  %2349 = vmatpush1.msra.mxu0 0.0
  %2350 = vmatprep.subr.mxu0 0.0
  %2351 = vmatpush1.msra.mxu0 0.0
  %2352 = vmatprep.subr.mxu0 0.0
  %2353 = vmatpush1.msra.mxu0 0.0
  %2354 = vmatprep.subr.mxu0 0.0
  %2355 = vmatpush1.msra.mxu0 0.0
  %2356 = vmatprep.subr.mxu0 0.0
  %2357 = vmatpush1.msra.mxu0 0.0
  %2358 = vmatprep.subr.mxu0 0.0
  %2359 = vmatpush1.msra.mxu0 0.0
  %2360 = vmatprep.subr.mxu0 0.0
  %2361 = vmatpush1.msra.mxu0 0.0
  %2362 = vmatprep.subr.mxu0 0.0
  %2363 = vmatpush1.msra.mxu0 0.0
  %2364 = vmatprep.subr.mxu0 0.0
  %2365 = vmatpush1.msra.mxu0 0.0
  %2366 = vmatprep.subr.mxu0 0.0
  %2367 = vmatpush1.msra.mxu0 0.0
  %2368 = vmatprep.subr.mxu0 0.0
  %2369 = vmatpush1.msra.mxu0 0.0
  %2370 = vmatprep.subr.mxu0 0.0
  %2371 = vmatpush1.msra.mxu0 0.0
  %2372 = vmatprep.subr.mxu0 0.0
  %2373 = vmatpush1.msra.mxu0 0.0
  %2374 = vmatprep.subr.mxu0 0.0
  %2375 = vmatpush1.msra.mxu0 0.0
  %2376 = vmatprep.subr.mxu0 0.0
  %2377 = vmatpush1.msra.mxu0 0.0
  %2378 = vmatprep.mubr.f32.mxu0 0.0
  %2379 = vmatmul.mubr.f32.gmra.mrb[0].mxu0 %v2312
  %v2380 = vpop.f32.mrb[0].mxu0
  %v2381 = vadd.f32 0.0, %v2380
  %v2382 = vpop.f32.mrb[0].mxu0
  %v2383 = vadd.f32 0.0, %v2382
  %2384 = vdwg.mxu0
  %2385 = vmatprep.subr.mxu0 0.0
  %2386 = vmatpush1.msra.mxu0 %v1768
  %2387 = vmatprep.subr.mxu0 0.0
  %2388 = vmatpush1.msra.mxu0 %v1771
  %2389 = vmatprep.subr.mxu0 0.0
  %2390 = vmatpush1.msra.mxu0 %v1774
  %2391 = vmatprep.subr.mxu0 0.0
  %2392 = vmatpush1.msra.mxu0 %v1777
  %2393 = vmatprep.subr.mxu0 0.0
  %2394 = vmatpush1.msra.mxu0 %v1780
  %2395 = vmatprep.subr.mxu0 0.0
  %2396 = vmatpush1.msra.mxu0 %v1783
  %2397 = vmatprep.subr.mxu0 0.0
  %2398 = vmatpush1.msra.mxu0 %v1786
  %2399 = vmatprep.subr.mxu0 0.0
  %2400 = vmatpush1.msra.mxu0 %v1789
  %2401 = vmatprep.subr.mxu0 0.0
  %2402 = vmatpush1.msra.mxu0 %v1792
  %2403 = vmatprep.subr.mxu0 0.0
  %2404 = vmatpush1.msra.mxu0 %v1795
  %2405 = vmatprep.subr.mxu0 0.0
  %2406 = vmatpush1.msra.mxu0 %v1798
  %2407 = vmatprep.subr.mxu0 0.0
  %2408 = vmatpush1.msra.mxu0 %v1801
  %2409 = vmatprep.subr.mxu0 0.0
  %2410 = vmatpush1.msra.mxu0 %v1804
  %2411 = vmatprep.subr.mxu0 0.0
  %2412 = vmatpush1.msra.mxu0 %v1807
  %2413 = vmatprep.subr.mxu0 0.0
  %2414 = vmatpush1.msra.mxu0 %v1810
  %2415 = vmatprep.subr.mxu0 0.0
  %2416 = vmatpush1.msra.mxu0 %v1813
  %2417 = vmatprep.subr.mxu0 0.0
  %2418 = vmatpush1.msra.mxu0 0.0
  %2419 = vmatprep.subr.mxu0 0.0
  %2420 = vmatpush1.msra.mxu0 0.0
  %2421 = vmatprep.subr.mxu0 0.0
  %2422 = vmatpush1.msra.mxu0 0.0
  %2423 = vmatprep.subr.mxu0 0.0
  %2424 = vmatpush1.msra.mxu0 0.0
  %2425 = vmatprep.subr.mxu0 0.0
  %2426 = vmatpush1.msra.mxu0 0.0
  %2427 = vmatprep.subr.mxu0 0.0
  %2428 = vmatpush1.msra.mxu0 0.0
  %2429 = vmatprep.subr.mxu0 0.0
  %2430 = vmatpush1.msra.mxu0 0.0
  %2431 = vmatprep.subr.mxu0 0.0
  %2432 = vmatpush1.msra.mxu0 0.0
  %2433 = vmatprep.subr.mxu0 0.0
  %2434 = vmatpush1.msra.mxu0 0.0
  %2435 = vmatprep.subr.mxu0 0.0
  %2436 = vmatpush1.msra.mxu0 0.0
  %2437 = vmatprep.subr.mxu0 0.0
  %2438 = vmatpush1.msra.mxu0 0.0
  %2439 = vmatprep.subr.mxu0 0.0
  %2440 = vmatpush1.msra.mxu0 0.0
  %2441 = vmatprep.subr.mxu0 0.0
  %2442 = vmatpush1.msra.mxu0 0.0
  %2443 = vmatprep.subr.mxu0 0.0
  %2444 = vmatpush1.msra.mxu0 0.0
  %2445 = vmatprep.subr.mxu0 0.0
  %2446 = vmatpush1.msra.mxu0 0.0
  %2447 = vmatprep.subr.mxu0 0.0
  %2448 = vmatpush1.msra.mxu0 0.0
  %2449 = vmatprep.mubr.f32.mxu0 0.0
  %2450 = vmatmul.mubr.f32.gmra.mrb[0].mxu0 %v2312
  %v2451 = vpop.f32.mrb[0].mxu0
  %v2452 = vadd.f32 0.0, %v2451
  %v2453 = vpop.f32.mrb[0].mxu0
  %2454 = vdwg.mxu0
  %v2456 = vrot.slane %v2381, 4
  %v2458 = vadd.f32 %v1888, %v2456
  %v2459 = vxor.u32 %v2458, 2147483648
  %v2460 = vmul.f32 %v2459, 1.442695
  %v2461 = vpow.pop %v2460
  %v2462 = vadd.f32 %v2461, 1.0
  %v2463 = vrcp.pop %v2462
  %v2464 = vmul.f32 1.0, %v2463
  %v2466 = vrot.slane %v2383, 4
  %v2468 = vadd.f32 %v1890, %v2466
  %v2469 = vxor.u32 %v2468, 2147483648
  %v2470 = vmul.f32 %v2469, 1.442695
  %v2471 = vpow.pop %v2470
  %v2472 = vadd.f32 %v2471, 1.0
  %v2473 = vrcp.pop %v2472
  %v2474 = vmul.f32 1.0, %v2473
  %v2476 = vrot.slane %v2452, 4
  %v2478 = vmul.f32 %v2464, %v2476
  %v2479 = vadd.f32 %v1965, %v2478
  %v2480 = vtanh.pop %v2479
  %v2481 = vsub.f32 1.0, %v2474
  %v2482 = vmul.f32 %v2481, %v2480
  %v2483 = vrot.slane %v2309, 6
  %v2485 = vmul.f32 %v2474, %v2483
  %v2486 = vadd.f32 %v2482, %v2485
  %2487 = vst [vmem:[#allocation2] sm:$0x30] %v2486
  %v2489 = vrot.slane %v2486, 4
  %2491 = vmatprep.subr.mxu0 %v1767
  %2492 = vmatpush1.msra.mxu0 %v1766
  %2493 = vmatprep.subr.mxu0 %v1770
  %2494 = vmatpush1.msra.mxu0 %v1769
  %2495 = vmatprep.subr.mxu0 %v1773
  %2496 = vmatpush1.msra.mxu0 %v1772
  %2497 = vmatprep.subr.mxu0 %v1776
  %2498 = vmatpush1.msra.mxu0 %v1775
  %2499 = vmatprep.subr.mxu0 %v1779
  %2500 = vmatpush1.msra.mxu0 %v1778
  %2501 = vmatprep.subr.mxu0 %v1782
  %2502 = vmatpush1.msra.mxu0 %v1781
  %2503 = vmatprep.subr.mxu0 %v1785
  %2504 = vmatpush1.msra.mxu0 %v1784
  %2505 = vmatprep.subr.mxu0 %v1788
  %2506 = vmatpush1.msra.mxu0 %v1787
  %2507 = vmatprep.subr.mxu0 %v1791
  %2508 = vmatpush1.msra.mxu0 %v1790
  %2509 = vmatprep.subr.mxu0 %v1794
  %2510 = vmatpush1.msra.mxu0 %v1793
  %2511 = vmatprep.subr.mxu0 %v1797
  %2512 = vmatpush1.msra.mxu0 %v1796
  %2513 = vmatprep.subr.mxu0 %v1800
  %2514 = vmatpush1.msra.mxu0 %v1799
  %2515 = vmatprep.subr.mxu0 %v1803
  %2516 = vmatpush1.msra.mxu0 %v1802
  %2517 = vmatprep.subr.mxu0 %v1806
  %2518 = vmatpush1.msra.mxu0 %v1805
  %2519 = vmatprep.subr.mxu0 %v1809
  %2520 = vmatpush1.msra.mxu0 %v1808
  %2521 = vmatprep.subr.mxu0 %v1812
  %2522 = vmatpush1.msra.mxu0 %v1811
  %2523 = vmatprep.subr.mxu0 0.0
  %2524 = vmatpush1.msra.mxu0 0.0
  %2525 = vmatprep.subr.mxu0 0.0
  %2526 = vmatpush1.msra.mxu0 0.0
  %2527 = vmatprep.subr.mxu0 0.0
  %2528 = vmatpush1.msra.mxu0 0.0
  %2529 = vmatprep.subr.mxu0 0.0
  %2530 = vmatpush1.msra.mxu0 0.0
  %2531 = vmatprep.subr.mxu0 0.0
  %2532 = vmatpush1.msra.mxu0 0.0
  %2533 = vmatprep.subr.mxu0 0.0
  %2534 = vmatpush1.msra.mxu0 0.0
  %2535 = vmatprep.subr.mxu0 0.0
  %2536 = vmatpush1.msra.mxu0 0.0
  %2537 = vmatprep.subr.mxu0 0.0
  %2538 = vmatpush1.msra.mxu0 0.0
  %2539 = vmatprep.subr.mxu0 0.0
  %2540 = vmatpush1.msra.mxu0 0.0
  %2541 = vmatprep.subr.mxu0 0.0
  %2542 = vmatpush1.msra.mxu0 0.0
  %2543 = vmatprep.subr.mxu0 0.0
  %2544 = vmatpush1.msra.mxu0 0.0
  %2545 = vmatprep.subr.mxu0 0.0
  %2546 = vmatpush1.msra.mxu0 0.0
  %2547 = vmatprep.subr.mxu0 0.0
  %2548 = vmatpush1.msra.mxu0 0.0
  %2549 = vmatprep.subr.mxu0 0.0
  %2550 = vmatpush1.msra.mxu0 0.0
  %2551 = vmatprep.subr.mxu0 0.0
  %2552 = vmatpush1.msra.mxu0 0.0
  %2553 = vmatprep.subr.mxu0 0.0
  %2554 = vmatpush1.msra.mxu0 0.0
  %2555 = vmatprep.mubr.f32.mxu0 0.0
  %2556 = vmatmul.mubr.f32.gmra.mrb[0].mxu0 %v2489
  %v2557 = vpop.f32.mrb[0].mxu0
  %v2558 = vadd.f32 0.0, %v2557
  %v2559 = vpop.f32.mrb[0].mxu0
  %v2560 = vadd.f32 0.0, %v2559
  %2561 = vdwg.mxu0
  %2562 = vmatprep.subr.mxu0 0.0
  %2563 = vmatpush1.msra.mxu0 %v1768
  %2564 = vmatprep.subr.mxu0 0.0
  %2565 = vmatpush1.msra.mxu0 %v1771
  %2566 = vmatprep.subr.mxu0 0.0
  %2567 = vmatpush1.msra.mxu0 %v1774
  %2568 = vmatprep.subr.mxu0 0.0
  %2569 = vmatpush1.msra.mxu0 %v1777
  %2570 = vmatprep.subr.mxu0 0.0
  %2571 = vmatpush1.msra.mxu0 %v1780
  %2572 = vmatprep.subr.mxu0 0.0
  %2573 = vmatpush1.msra.mxu0 %v1783
  %2574 = vmatprep.subr.mxu0 0.0
  %2575 = vmatpush1.msra.mxu0 %v1786
  %2576 = vmatprep.subr.mxu0 0.0
  %2577 = vmatpush1.msra.mxu0 %v1789
  %2578 = vmatprep.subr.mxu0 0.0
  %2579 = vmatpush1.msra.mxu0 %v1792
  %2580 = vmatprep.subr.mxu0 0.0
  %2581 = vmatpush1.msra.mxu0 %v1795
  %2582 = vmatprep.subr.mxu0 0.0
  %2583 = vmatpush1.msra.mxu0 %v1798
  %2584 = vmatprep.subr.mxu0 0.0
  %2585 = vmatpush1.msra.mxu0 %v1801
  %2586 = vmatprep.subr.mxu0 0.0
  %2587 = vmatpush1.msra.mxu0 %v1804
  %2588 = vmatprep.subr.mxu0 0.0
  %2589 = vmatpush1.msra.mxu0 %v1807
  %2590 = vmatprep.subr.mxu0 0.0
  %2591 = vmatpush1.msra.mxu0 %v1810
  %2592 = vmatprep.subr.mxu0 0.0
  %2593 = vmatpush1.msra.mxu0 %v1813
  %2594 = vmatprep.subr.mxu0 0.0
  %2595 = vmatpush1.msra.mxu0 0.0
  %2596 = vmatprep.subr.mxu0 0.0
  %2597 = vmatpush1.msra.mxu0 0.0
  %2598 = vmatprep.subr.mxu0 0.0
  %2599 = vmatpush1.msra.mxu0 0.0
  %2600 = vmatprep.subr.mxu0 0.0
  %2601 = vmatpush1.msra.mxu0 0.0
  %2602 = vmatprep.subr.mxu0 0.0
  %2603 = vmatpush1.msra.mxu0 0.0
  %2604 = vmatprep.subr.mxu0 0.0
  %2605 = vmatpush1.msra.mxu0 0.0
  %2606 = vmatprep.subr.mxu0 0.0
  %2607 = vmatpush1.msra.mxu0 0.0
  %2608 = vmatprep.subr.mxu0 0.0
  %2609 = vmatpush1.msra.mxu0 0.0
  %2610 = vmatprep.subr.mxu0 0.0
  %2611 = vmatpush1.msra.mxu0 0.0
  %2612 = vmatprep.subr.mxu0 0.0
  %2613 = vmatpush1.msra.mxu0 0.0
  %2614 = vmatprep.subr.mxu0 0.0
  %2615 = vmatpush1.msra.mxu0 0.0
  %2616 = vmatprep.subr.mxu0 0.0
  %2617 = vmatpush1.msra.mxu0 0.0
  %2618 = vmatprep.subr.mxu0 0.0
  %2619 = vmatpush1.msra.mxu0 0.0
  %2620 = vmatprep.subr.mxu0 0.0
  %2621 = vmatpush1.msra.mxu0 0.0
  %2622 = vmatprep.subr.mxu0 0.0
  %2623 = vmatpush1.msra.mxu0 0.0
  %2624 = vmatprep.subr.mxu0 0.0
  %2625 = vmatpush1.msra.mxu0 0.0
  %2626 = vmatprep.mubr.f32.mxu0 0.0
  %2627 = vmatmul.mubr.f32.gmra.mrb[0].mxu0 %v2489
  %v2628 = vpop.f32.mrb[0].mxu0
  %v2629 = vadd.f32 0.0, %v2628
  %v2630 = vpop.f32.mrb[0].mxu0
  %2631 = vdwg.mxu0
  %v2633 = vrot.slane %v2558, 2
  %v2635 = vadd.f32 %v1888, %v2633
  %v2636 = vxor.u32 %v2635, 2147483648
  %v2637 = vmul.f32 %v2636, 1.442695
  %v2638 = vpow.pop %v2637
  %v2639 = vadd.f32 %v2638, 1.0
  %v2640 = vrcp.pop %v2639
  %v2641 = vmul.f32 1.0, %v2640
  %v2643 = vrot.slane %v2560, 2
  %v2645 = vadd.f32 %v1890, %v2643
  %v2646 = vxor.u32 %v2645, 2147483648
  %v2647 = vmul.f32 %v2646, 1.442695
  %v2648 = vpow.pop %v2647
  %v2649 = vadd.f32 %v2648, 1.0
  %v2650 = vrcp.pop %v2649
  %v2651 = vmul.f32 1.0, %v2650
  %v2653 = vrot.slane %v2629, 2
  %v2655 = vmul.f32 %v2641, %v2653
  %v2656 = vadd.f32 %v1965, %v2655
  %v2657 = vtanh.pop %v2656
  %v2658 = vsub.f32 1.0, %v2651
  %v2659 = vmul.f32 %v2658, %v2657
  %v2660 = vrot.slane %v2486, 6
  %v2662 = vmul.f32 %v2651, %v2660
  %v2663 = vadd.f32 %v2659, %v2662
  %2664 = vst [vmem:[#allocation2] sm:$0xc0] %v2663
  %v2666 = vrot.slane %v2663, 6
  %2668 = vmatprep.subr.mxu0 %v1767
  %2669 = vmatpush1.msra.mxu0 %v1766
  %2670 = vmatprep.subr.mxu0 %v1770
  %2671 = vmatpush1.msra.mxu0 %v1769
  %2672 = vmatprep.subr.mxu0 %v1773
  %2673 = vmatpush1.msra.mxu0 %v1772
  %2674 = vmatprep.subr.mxu0 %v1776
  %2675 = vmatpush1.msra.mxu0 %v1775
  %2676 = vmatprep.subr.mxu0 %v1779
  %2677 = vmatpush1.msra.mxu0 %v1778
  %2678 = vmatprep.subr.mxu0 %v1782
  %2679 = vmatpush1.msra.mxu0 %v1781
  %2680 = vmatprep.subr.mxu0 %v1785
  %2681 = vmatpush1.msra.mxu0 %v1784
  %2682 = vmatprep.subr.mxu0 %v1788
  %2683 = vmatpush1.msra.mxu0 %v1787
  %2684 = vmatprep.subr.mxu0 %v1791
  %2685 = vmatpush1.msra.mxu0 %v1790
  %2686 = vmatprep.subr.mxu0 %v1794
  %2687 = vmatpush1.msra.mxu0 %v1793
  %2688 = vmatprep.subr.mxu0 %v1797
  %2689 = vmatpush1.msra.mxu0 %v1796
  %2690 = vmatprep.subr.mxu0 %v1800
  %2691 = vmatpush1.msra.mxu0 %v1799
  %2692 = vmatprep.subr.mxu0 %v1803
  %2693 = vmatpush1.msra.mxu0 %v1802
  %2694 = vmatprep.subr.mxu0 %v1806
  %2695 = vmatpush1.msra.mxu0 %v1805
  %2696 = vmatprep.subr.mxu0 %v1809
  %2697 = vmatpush1.msra.mxu0 %v1808
  %2698 = vmatprep.subr.mxu0 %v1812
  %2699 = vmatpush1.msra.mxu0 %v1811
  %2700 = vmatprep.subr.mxu0 0.0
  %2701 = vmatpush1.msra.mxu0 0.0
  %2702 = vmatprep.subr.mxu0 0.0
  %2703 = vmatpush1.msra.mxu0 0.0
  %2704 = vmatprep.subr.mxu0 0.0
  %2705 = vmatpush1.msra.mxu0 0.0
  %2706 = vmatprep.subr.mxu0 0.0
  %2707 = vmatpush1.msra.mxu0 0.0
  %2708 = vmatprep.subr.mxu0 0.0
  %2709 = vmatpush1.msra.mxu0 0.0
  %2710 = vmatprep.subr.mxu0 0.0
  %2711 = vmatpush1.msra.mxu0 0.0
  %2712 = vmatprep.subr.mxu0 0.0
  %2713 = vmatpush1.msra.mxu0 0.0
  %2714 = vmatprep.subr.mxu0 0.0
  %2715 = vmatpush1.msra.mxu0 0.0
  %2716 = vmatprep.subr.mxu0 0.0
  %2717 = vmatpush1.msra.mxu0 0.0
  %2718 = vmatprep.subr.mxu0 0.0
  %2719 = vmatpush1.msra.mxu0 0.0
  %2720 = vmatprep.subr.mxu0 0.0
  %2721 = vmatpush1.msra.mxu0 0.0
  %2722 = vmatprep.subr.mxu0 0.0
  %2723 = vmatpush1.msra.mxu0 0.0
  %2724 = vmatprep.subr.mxu0 0.0
  %2725 = vmatpush1.msra.mxu0 0.0
  %2726 = vmatprep.subr.mxu0 0.0
  %2727 = vmatpush1.msra.mxu0 0.0
  %2728 = vmatprep.subr.mxu0 0.0
  %2729 = vmatpush1.msra.mxu0 0.0
  %2730 = vmatprep.subr.mxu0 0.0
  %2731 = vmatpush1.msra.mxu0 0.0
  %2732 = vmatprep.mubr.f32.mxu0 0.0
  %2733 = vmatmul.mubr.f32.gmra.mrb[0].mxu0 %v2666
  %v2734 = vpop.f32.mrb[0].mxu0
  %v2735 = vadd.f32 0.0, %v2734
  %v2736 = vpop.f32.mrb[0].mxu0
  %v2737 = vadd.f32 0.0, %v2736
  %2738 = vdwg.mxu0
  %2739 = vmatprep.subr.mxu0 0.0
  %2740 = vmatpush1.msra.mxu0 %v1768
  %2741 = vmatprep.subr.mxu0 0.0
  %2742 = vmatpush1.msra.mxu0 %v1771
  %2743 = vmatprep.subr.mxu0 0.0
  %2744 = vmatpush1.msra.mxu0 %v1774
  %2745 = vmatprep.subr.mxu0 0.0
  %2746 = vmatpush1.msra.mxu0 %v1777
  %2747 = vmatprep.subr.mxu0 0.0
  %2748 = vmatpush1.msra.mxu0 %v1780
  %2749 = vmatprep.subr.mxu0 0.0
  %2750 = vmatpush1.msra.mxu0 %v1783
  %2751 = vmatprep.subr.mxu0 0.0
  %2752 = vmatpush1.msra.mxu0 %v1786
  %2753 = vmatprep.subr.mxu0 0.0
  %2754 = vmatpush1.msra.mxu0 %v1789
  %2755 = vmatprep.subr.mxu0 0.0
  %2756 = vmatpush1.msra.mxu0 %v1792
  %2757 = vmatprep.subr.mxu0 0.0
  %2758 = vmatpush1.msra.mxu0 %v1795
  %2759 = vmatprep.subr.mxu0 0.0
  %2760 = vmatpush1.msra.mxu0 %v1798
  %2761 = vmatprep.subr.mxu0 0.0
  %2762 = vmatpush1.msra.mxu0 %v1801
  %2763 = vmatprep.subr.mxu0 0.0
  %2764 = vmatpush1.msra.mxu0 %v1804
  %2765 = vmatprep.subr.mxu0 0.0
  %2766 = vmatpush1.msra.mxu0 %v1807
  %2767 = vmatprep.subr.mxu0 0.0
  %2768 = vmatpush1.msra.mxu0 %v1810
  %2769 = vmatprep.subr.mxu0 0.0
  %2770 = vmatpush1.msra.mxu0 %v1813
  %2771 = vmatprep.subr.mxu0 0.0
  %2772 = vmatpush1.msra.mxu0 0.0
  %2773 = vmatprep.subr.mxu0 0.0
  %2774 = vmatpush1.msra.mxu0 0.0
  %2775 = vmatprep.subr.mxu0 0.0
  %2776 = vmatpush1.msra.mxu0 0.0
  %2777 = vmatprep.subr.mxu0 0.0
  %2778 = vmatpush1.msra.mxu0 0.0
  %2779 = vmatprep.subr.mxu0 0.0
  %2780 = vmatpush1.msra.mxu0 0.0
  %2781 = vmatprep.subr.mxu0 0.0
  %2782 = vmatpush1.msra.mxu0 0.0
  %2783 = vmatprep.subr.mxu0 0.0
  %2784 = vmatpush1.msra.mxu0 0.0
  %2785 = vmatprep.subr.mxu0 0.0
  %2786 = vmatpush1.msra.mxu0 0.0
  %2787 = vmatprep.subr.mxu0 0.0
  %2788 = vmatpush1.msra.mxu0 0.0
  %2789 = vmatprep.subr.mxu0 0.0
  %2790 = vmatpush1.msra.mxu0 0.0
  %2791 = vmatprep.subr.mxu0 0.0
  %2792 = vmatpush1.msra.mxu0 0.0
  %2793 = vmatprep.subr.mxu0 0.0
  %2794 = vmatpush1.msra.mxu0 0.0
  %2795 = vmatprep.subr.mxu0 0.0
  %2796 = vmatpush1.msra.mxu0 0.0
  %2797 = vmatprep.subr.mxu0 0.0
  %2798 = vmatpush1.msra.mxu0 0.0
  %2799 = vmatprep.subr.mxu0 0.0
  %2800 = vmatpush1.msra.mxu0 0.0
  %2801 = vmatprep.subr.mxu0 0.0
  %2802 = vmatpush1.msra.mxu0 0.0
  %2803 = vmatprep.mubr.f32.mxu0 0.0
  %2804 = vmatmul.mubr.f32.gmra.mrb[0].mxu0 %v2666
  %v2805 = vpop.f32.mrb[0].mxu0
  %v2806 = vadd.f32 0.0, %v2805
  %v2807 = vpop.f32.mrb[0].mxu0
  %2808 = vdwg.mxu0
  %v2809 = vadd.f32 %v1894, %v2735
  %v2810 = vxor.u32 %v2809, 2147483648
  %v2811 = vmul.f32 %v2810, 1.442695
  %v2812 = vpow.pop %v2811
  %v2813 = vadd.f32 %v2812, 1.0
  %v2814 = vrcp.pop %v2813
  %v2815 = vmul.f32 1.0, %v2814
  %v2816 = vadd.f32 %v1896, %v2737
  %v2817 = vxor.u32 %v2816, 2147483648
  %v2818 = vmul.f32 %v2817, 1.442695
  %v2819 = vpow.pop %v2818
  %v2820 = vadd.f32 %v2819, 1.0
  %v2821 = vrcp.pop %v2820
  %v2822 = vmul.f32 1.0, %v2821
  %v2823 = vmul.f32 %v2815, %v2806
  %v2824 = vadd.f32 %v1970, %v2823
  %v2825 = vtanh.pop %v2824
  %v2826 = vsub.f32 1.0, %v2822
  %v2827 = vmul.f32 %v2826, %v2825
  %v2828 = vmul.f32 %v2822, %v2666
  %v2829 = vadd.f32 %v2827, %v2828
  %2830 = vst [vmem:[#allocation2 + $0x8] sm:$0x3] %v2829
  %2831 = vmatprep.subr.mxu0 %v1767
  %2832 = vmatpush1.msra.mxu0 %v1766
  %2833 = vmatprep.subr.mxu0 %v1770
  %2834 = vmatpush1.msra.mxu0 %v1769
  %2835 = vmatprep.subr.mxu0 %v1773
  %2836 = vmatpush1.msra.mxu0 %v1772
  %2837 = vmatprep.subr.mxu0 %v1776
  %2838 = vmatpush1.msra.mxu0 %v1775
  %2839 = vmatprep.subr.mxu0 %v1779
  %2840 = vmatpush1.msra.mxu0 %v1778
  %2841 = vmatprep.subr.mxu0 %v1782
  %2842 = vmatpush1.msra.mxu0 %v1781
  %2843 = vmatprep.subr.mxu0 %v1785
  %2844 = vmatpush1.msra.mxu0 %v1784
  %2845 = vmatprep.subr.mxu0 %v1788
  %2846 = vmatpush1.msra.mxu0 %v1787
  %2847 = vmatprep.subr.mxu0 %v1791
  %2848 = vmatpush1.msra.mxu0 %v1790
  %2849 = vmatprep.subr.mxu0 %v1794
  %2850 = vmatpush1.msra.mxu0 %v1793
  %2851 = vmatprep.subr.mxu0 %v1797
  %2852 = vmatpush1.msra.mxu0 %v1796
  %2853 = vmatprep.subr.mxu0 %v1800
  %2854 = vmatpush1.msra.mxu0 %v1799
  %2855 = vmatprep.subr.mxu0 %v1803
  %2856 = vmatpush1.msra.mxu0 %v1802
  %2857 = vmatprep.subr.mxu0 %v1806
  %2858 = vmatpush1.msra.mxu0 %v1805
  %2859 = vmatprep.subr.mxu0 %v1809
  %2860 = vmatpush1.msra.mxu0 %v1808
  %2861 = vmatprep.subr.mxu0 %v1812
  %2862 = vmatpush1.msra.mxu0 %v1811
  %2863 = vmatprep.subr.mxu0 0.0
  %2864 = vmatpush1.msra.mxu0 0.0
  %2865 = vmatprep.subr.mxu0 0.0
  %2866 = vmatpush1.msra.mxu0 0.0
  %2867 = vmatprep.subr.mxu0 0.0
  %2868 = vmatpush1.msra.mxu0 0.0
  %2869 = vmatprep.subr.mxu0 0.0
  %2870 = vmatpush1.msra.mxu0 0.0
  %2871 = vmatprep.subr.mxu0 0.0
  %2872 = vmatpush1.msra.mxu0 0.0
  %2873 = vmatprep.subr.mxu0 0.0
  %2874 = vmatpush1.msra.mxu0 0.0
  %2875 = vmatprep.subr.mxu0 0.0
  %2876 = vmatpush1.msra.mxu0 0.0
  %2877 = vmatprep.subr.mxu0 0.0
  %2878 = vmatpush1.msra.mxu0 0.0
  %2879 = vmatprep.subr.mxu0 0.0
  %2880 = vmatpush1.msra.mxu0 0.0
  %2881 = vmatprep.subr.mxu0 0.0
  %2882 = vmatpush1.msra.mxu0 0.0
  %2883 = vmatprep.subr.mxu0 0.0
  %2884 = vmatpush1.msra.mxu0 0.0
  %2885 = vmatprep.subr.mxu0 0.0
  %2886 = vmatpush1.msra.mxu0 0.0
  %2887 = vmatprep.subr.mxu0 0.0
  %2888 = vmatpush1.msra.mxu0 0.0
  %2889 = vmatprep.subr.mxu0 0.0
  %2890 = vmatpush1.msra.mxu0 0.0
  %2891 = vmatprep.subr.mxu0 0.0
  %2892 = vmatpush1.msra.mxu0 0.0
  %2893 = vmatprep.subr.mxu0 0.0
  %2894 = vmatpush1.msra.mxu0 0.0
  %2895 = vmatprep.mubr.f32.mxu0 0.0
  %2896 = vmatmul.mubr.f32.gmra.mrb[0].mxu0 %v2829
  %v2897 = vpop.f32.mrb[0].mxu0
  %v2898 = vadd.f32 0.0, %v2897
  %v2899 = vpop.f32.mrb[0].mxu0
  %v2900 = vadd.f32 0.0, %v2899
  %2901 = vdwg.mxu0
  %2902 = vmatprep.subr.mxu0 0.0
  %2903 = vmatpush1.msra.mxu0 %v1768
  %2904 = vmatprep.subr.mxu0 0.0
  %2905 = vmatpush1.msra.mxu0 %v1771
  %2906 = vmatprep.subr.mxu0 0.0
  %2907 = vmatpush1.msra.mxu0 %v1774
  %2908 = vmatprep.subr.mxu0 0.0
  %2909 = vmatpush1.msra.mxu0 %v1777
  %2910 = vmatprep.subr.mxu0 0.0
  %2911 = vmatpush1.msra.mxu0 %v1780
  %2912 = vmatprep.subr.mxu0 0.0
  %2913 = vmatpush1.msra.mxu0 %v1783
  %2914 = vmatprep.subr.mxu0 0.0
  %2915 = vmatpush1.msra.mxu0 %v1786
  %2916 = vmatprep.subr.mxu0 0.0
  %2917 = vmatpush1.msra.mxu0 %v1789
  %2918 = vmatprep.subr.mxu0 0.0
  %2919 = vmatpush1.msra.mxu0 %v1792
  %2920 = vmatprep.subr.mxu0 0.0
  %2921 = vmatpush1.msra.mxu0 %v1795
  %2922 = vmatprep.subr.mxu0 0.0
  %2923 = vmatpush1.msra.mxu0 %v1798
  %2924 = vmatprep.subr.mxu0 0.0
  %2925 = vmatpush1.msra.mxu0 %v1801
  %2926 = vmatprep.subr.mxu0 0.0
  %2927 = vmatpush1.msra.mxu0 %v1804
  %2928 = vmatprep.subr.mxu0 0.0
  %2929 = vmatpush1.msra.mxu0 %v1807
  %2930 = vmatprep.subr.mxu0 0.0
  %2931 = vmatpush1.msra.mxu0 %v1810
  %2932 = vmatprep.subr.mxu0 0.0
  %2933 = vmatpush1.msra.mxu0 %v1813
  %2934 = vmatprep.subr.mxu0 0.0
  %2935 = vmatpush1.msra.mxu0 0.0
  %2936 = vmatprep.subr.mxu0 0.0
  %2937 = vmatpush1.msra.mxu0 0.0
  %2938 = vmatprep.subr.mxu0 0.0
  %2939 = vmatpush1.msra.mxu0 0.0
  %2940 = vmatprep.subr.mxu0 0.0
  %2941 = vmatpush1.msra.mxu0 0.0
  %2942 = vmatprep.subr.mxu0 0.0
  %2943 = vmatpush1.msra.mxu0 0.0
  %2944 = vmatprep.subr.mxu0 0.0
  %2945 = vmatpush1.msra.mxu0 0.0
  %2946 = vmatprep.subr.mxu0 0.0
  %2947 = vmatpush1.msra.mxu0 0.0
  %2948 = vmatprep.subr.mxu0 0.0
  %2949 = vmatpush1.msra.mxu0 0.0
  %2950 = vmatprep.subr.mxu0 0.0
  %2951 = vmatpush1.msra.mxu0 0.0
  %2952 = vmatprep.subr.mxu0 0.0
  %2953 = vmatpush1.msra.mxu0 0.0
  %2954 = vmatprep.subr.mxu0 0.0
  %2955 = vmatpush1.msra.mxu0 0.0
  %2956 = vmatprep.subr.mxu0 0.0
  %2957 = vmatpush1.msra.mxu0 0.0
  %2958 = vmatprep.subr.mxu0 0.0
  %2959 = vmatpush1.msra.mxu0 0.0
  %2960 = vmatprep.subr.mxu0 0.0
  %2961 = vmatpush1.msra.mxu0 0.0
  %2962 = vmatprep.subr.mxu0 0.0
  %2963 = vmatpush1.msra.mxu0 0.0
  %2964 = vmatprep.subr.mxu0 0.0
  %2965 = vmatpush1.msra.mxu0 0.0
  %2966 = vmatprep.mubr.f32.mxu0 0.0
  %2967 = vmatmul.mubr.f32.gmra.mrb[0].mxu0 %v2829
  %v2968 = vpop.f32.mrb[0].mxu0
  %v2969 = vadd.f32 0.0, %v2968
  %v2970 = vpop.f32.mrb[0].mxu0
  %2971 = vdwg.mxu0
  %v2973 = vrot.slane %v2898, 6
  %v2975 = vadd.f32 %v1894, %v2973
  %v2976 = vxor.u32 %v2975, 2147483648
  %v2977 = vmul.f32 %v2976, 1.442695
  %v2978 = vpow.pop %v2977
  %v2979 = vadd.f32 %v2978, 1.0
  %v2980 = vrcp.pop %v2979
  %v2981 = vmul.f32 1.0, %v2980
  %v2983 = vrot.slane %v2900, 6
  %v2985 = vadd.f32 %v1896, %v2983
  %v2986 = vxor.u32 %v2985, 2147483648
  %v2987 = vmul.f32 %v2986, 1.442695
  %v2988 = vpow.pop %v2987
  %v2989 = vadd.f32 %v2988, 1.0
  %v2990 = vrcp.pop %v2989
  %v2991 = vmul.f32 1.0, %v2990
  %v2993 = vrot.slane %v2969, 6
  %v2995 = vmul.f32 %v2981, %v2993
  %v2996 = vadd.f32 %v1970, %v2995
  %v2997 = vtanh.pop %v2996
  %v2998 = vsub.f32 1.0, %v2991
  %v2999 = vmul.f32 %v2998, %v2997
  %v3001 = vrot.slane %v2829, 6
  %v3003 = vmul.f32 %v2991, %v3001
  %v3004 = vadd.f32 %v2999, %v3003
  %3005 = vst [vmem:[#allocation2 + $0x8] sm:$0xc] %v3004
  %v3007 = vrot.slane %v3004, 2
  %3009 = vmatprep.subr.mxu0 %v1767
  %3010 = vmatpush1.msra.mxu0 %v1766
  %3011 = vmatprep.subr.mxu0 %v1770
  %3012 = vmatpush1.msra.mxu0 %v1769
  %3013 = vmatprep.subr.mxu0 %v1773
  %3014 = vmatpush1.msra.mxu0 %v1772
  %3015 = vmatprep.subr.mxu0 %v1776
  %3016 = vmatpush1.msra.mxu0 %v1775
  %3017 = vmatprep.subr.mxu0 %v1779
  %3018 = vmatpush1.msra.mxu0 %v1778
  %3019 = vmatprep.subr.mxu0 %v1782
  %3020 = vmatpush1.msra.mxu0 %v1781
  %3021 = vmatprep.subr.mxu0 %v1785
  %3022 = vmatpush1.msra.mxu0 %v1784
  %3023 = vmatprep.subr.mxu0 %v1788
  %3024 = vmatpush1.msra.mxu0 %v1787
  %3025 = vmatprep.subr.mxu0 %v1791
  %3026 = vmatpush1.msra.mxu0 %v1790
  %3027 = vmatprep.subr.mxu0 %v1794
  %3028 = vmatpush1.msra.mxu0 %v1793
  %3029 = vmatprep.subr.mxu0 %v1797
  %3030 = vmatpush1.msra.mxu0 %v1796
  %3031 = vmatprep.subr.mxu0 %v1800
  %3032 = vmatpush1.msra.mxu0 %v1799
  %3033 = vmatprep.subr.mxu0 %v1803
  %3034 = vmatpush1.msra.mxu0 %v1802
  %3035 = vmatprep.subr.mxu0 %v1806
  %3036 = vmatpush1.msra.mxu0 %v1805
  %3037 = vmatprep.subr.mxu0 %v1809
  %3038 = vmatpush1.msra.mxu0 %v1808
  %3039 = vmatprep.subr.mxu0 %v1812
  %3040 = vmatpush1.msra.mxu0 %v1811
  %3041 = vmatprep.subr.mxu0 0.0
  %3042 = vmatpush1.msra.mxu0 0.0
  %3043 = vmatprep.subr.mxu0 0.0
  %3044 = vmatpush1.msra.mxu0 0.0
  %3045 = vmatprep.subr.mxu0 0.0
  %3046 = vmatpush1.msra.mxu0 0.0
  %3047 = vmatprep.subr.mxu0 0.0
  %3048 = vmatpush1.msra.mxu0 0.0
  %3049 = vmatprep.subr.mxu0 0.0
  %3050 = vmatpush1.msra.mxu0 0.0
  %3051 = vmatprep.subr.mxu0 0.0
  %3052 = vmatpush1.msra.mxu0 0.0
  %3053 = vmatprep.subr.mxu0 0.0
  %3054 = vmatpush1.msra.mxu0 0.0
  %3055 = vmatprep.subr.mxu0 0.0
  %3056 = vmatpush1.msra.mxu0 0.0
  %3057 = vmatprep.subr.mxu0 0.0
  %3058 = vmatpush1.msra.mxu0 0.0
  %3059 = vmatprep.subr.mxu0 0.0
  %3060 = vmatpush1.msra.mxu0 0.0
  %3061 = vmatprep.subr.mxu0 0.0
  %3062 = vmatpush1.msra.mxu0 0.0
  %3063 = vmatprep.subr.mxu0 0.0
  %3064 = vmatpush1.msra.mxu0 0.0
  %3065 = vmatprep.subr.mxu0 0.0
  %3066 = vmatpush1.msra.mxu0 0.0
  %3067 = vmatprep.subr.mxu0 0.0
  %3068 = vmatpush1.msra.mxu0 0.0
  %3069 = vmatprep.subr.mxu0 0.0
  %3070 = vmatpush1.msra.mxu0 0.0
  %3071 = vmatprep.subr.mxu0 0.0
  %3072 = vmatpush1.msra.mxu0 0.0
  %3073 = vmatprep.mubr.f32.mxu0 0.0
  %3074 = vmatmul.mubr.f32.gmra.mrb[0].mxu0 %v3007
  %v3075 = vpop.f32.mrb[0].mxu0
  %v3076 = vadd.f32 0.0, %v3075
  %v3077 = vpop.f32.mrb[0].mxu0
  %v3078 = vadd.f32 0.0, %v3077
  %3079 = vdwg.mxu0
  %3080 = vmatprep.subr.mxu0 0.0
  %3081 = vmatpush1.msra.mxu0 %v1768
  %3082 = vmatprep.subr.mxu0 0.0
  %3083 = vmatpush1.msra.mxu0 %v1771
  %3084 = vmatprep.subr.mxu0 0.0
  %3085 = vmatpush1.msra.mxu0 %v1774
  %3086 = vmatprep.subr.mxu0 0.0
  %3087 = vmatpush1.msra.mxu0 %v1777
  %3088 = vmatprep.subr.mxu0 0.0
  %3089 = vmatpush1.msra.mxu0 %v1780
  %3090 = vmatprep.subr.mxu0 0.0
  %3091 = vmatpush1.msra.mxu0 %v1783
  %3092 = vmatprep.subr.mxu0 0.0
  %3093 = vmatpush1.msra.mxu0 %v1786
  %3094 = vmatprep.subr.mxu0 0.0
  %3095 = vmatpush1.msra.mxu0 %v1789
  %3096 = vmatprep.subr.mxu0 0.0
  %3097 = vmatpush1.msra.mxu0 %v1792
  %3098 = vmatprep.subr.mxu0 0.0
  %3099 = vmatpush1.msra.mxu0 %v1795
  %3100 = vmatprep.subr.mxu0 0.0
  %3101 = vmatpush1.msra.mxu0 %v1798
  %3102 = vmatprep.subr.mxu0 0.0
  %3103 = vmatpush1.msra.mxu0 %v1801
  %3104 = vmatprep.subr.mxu0 0.0
  %3105 = vmatpush1.msra.mxu0 %v1804
  %3106 = vmatprep.subr.mxu0 0.0
  %3107 = vmatpush1.msra.mxu0 %v1807
  %3108 = vmatprep.subr.mxu0 0.0
  %3109 = vmatpush1.msra.mxu0 %v1810
  %3110 = vmatprep.subr.mxu0 0.0
  %3111 = vmatpush1.msra.mxu0 %v1813
  %3112 = vmatprep.subr.mxu0 0.0
  %3113 = vmatpush1.msra.mxu0 0.0
  %3114 = vmatprep.subr.mxu0 0.0
  %3115 = vmatpush1.msra.mxu0 0.0
  %3116 = vmatprep.subr.mxu0 0.0
  %3117 = vmatpush1.msra.mxu0 0.0
  %3118 = vmatprep.subr.mxu0 0.0
  %3119 = vmatpush1.msra.mxu0 0.0
  %3120 = vmatprep.subr.mxu0 0.0
  %3121 = vmatpush1.msra.mxu0 0.0
  %3122 = vmatprep.subr.mxu0 0.0
  %3123 = vmatpush1.msra.mxu0 0.0
  %3124 = vmatprep.subr.mxu0 0.0
  %3125 = vmatpush1.msra.mxu0 0.0
  %3126 = vmatprep.subr.mxu0 0.0
  %3127 = vmatpush1.msra.mxu0 0.0
  %3128 = vmatprep.subr.mxu0 0.0
  %3129 = vmatpush1.msra.mxu0 0.0
  %3130 = vmatprep.subr.mxu0 0.0
  %3131 = vmatpush1.msra.mxu0 0.0
  %3132 = vmatprep.subr.mxu0 0.0
  %3133 = vmatpush1.msra.mxu0 0.0
  %3134 = vmatprep.subr.mxu0 0.0
  %3135 = vmatpush1.msra.mxu0 0.0
  %3136 = vmatprep.subr.mxu0 0.0
  %3137 = vmatpush1.msra.mxu0 0.0
  %3138 = vmatprep.subr.mxu0 0.0
  %3139 = vmatpush1.msra.mxu0 0.0
  %3140 = vmatprep.subr.mxu0 0.0
  %3141 = vmatpush1.msra.mxu0 0.0
  %3142 = vmatprep.subr.mxu0 0.0
  %3143 = vmatpush1.msra.mxu0 0.0
  %3144 = vmatprep.mubr.f32.mxu0 0.0
  %3145 = vmatmul.mubr.f32.gmra.mrb[0].mxu0 %v3007
  %v3146 = vpop.f32.mrb[0].mxu0
  %v3147 = vadd.f32 0.0, %v3146
  %v3148 = vpop.f32.mrb[0].mxu0
  %3149 = vdwg.mxu0
  %v3151 = vrot.slane %v3076, 4
  %v3153 = vadd.f32 %v1894, %v3151
  %v3154 = vxor.u32 %v3153, 2147483648
  %v3155 = vmul.f32 %v3154, 1.442695
  %v3156 = vpow.pop %v3155
  %v3157 = vadd.f32 %v3156, 1.0
  %v3158 = vrcp.pop %v3157
  %v3159 = vmul.f32 1.0, %v3158
  %v3161 = vrot.slane %v3078, 4
  %v3163 = vadd.f32 %v1896, %v3161
  %v3164 = vxor.u32 %v3163, 2147483648
  %v3165 = vmul.f32 %v3164, 1.442695
  %v3166 = vpow.pop %v3165
  %v3167 = vadd.f32 %v3166, 1.0
  %v3168 = vrcp.pop %v3167
  %v3169 = vmul.f32 1.0, %v3168
  %v3171 = vrot.slane %v3147, 4
  %v3173 = vmul.f32 %v3159, %v3171
  %v3174 = vadd.f32 %v1970, %v3173
  %v3175 = vtanh.pop %v3174
  %v3176 = vsub.f32 1.0, %v3169
  %v3177 = vmul.f32 %v3176, %v3175
  %v3178 = vrot.slane %v3004, 6
  %v3180 = vmul.f32 %v3169, %v3178
  %v3181 = vadd.f32 %v3177, %v3180
  %3182 = vst [vmem:[#allocation2 + $0x8] sm:$0x30] %v3181
  %v3184 = vrot.slane %v3181, 4
  %3186 = vmatprep.subr.mxu0 %v1767
  %3187 = vmatpush1.msra.mxu0 %v1766
  %3188 = vmatprep.subr.mxu0 %v1770
  %3189 = vmatpush1.msra.mxu0 %v1769
  %3190 = vmatprep.subr.mxu0 %v1773
  %3191 = vmatpush1.msra.mxu0 %v1772
  %3192 = vmatprep.subr.mxu0 %v1776
  %3193 = vmatpush1.msra.mxu0 %v1775
  %3194 = vmatprep.subr.mxu0 %v1779
  %3195 = vmatpush1.msra.mxu0 %v1778
  %3196 = vmatprep.subr.mxu0 %v1782
  %3197 = vmatpush1.msra.mxu0 %v1781
  %3198 = vmatprep.subr.mxu0 %v1785
  %3199 = vmatpush1.msra.mxu0 %v1784
  %3200 = vmatprep.subr.mxu0 %v1788
  %3201 = vmatpush1.msra.mxu0 %v1787
  %3202 = vmatprep.subr.mxu0 %v1791
  %3203 = vmatpush1.msra.mxu0 %v1790
  %3204 = vmatprep.subr.mxu0 %v1794
  %3205 = vmatpush1.msra.mxu0 %v1793
  %3206 = vmatprep.subr.mxu0 %v1797
  %3207 = vmatpush1.msra.mxu0 %v1796
  %3208 = vmatprep.subr.mxu0 %v1800
  %3209 = vmatpush1.msra.mxu0 %v1799
  %3210 = vmatprep.subr.mxu0 %v1803
  %3211 = vmatpush1.msra.mxu0 %v1802
  %3212 = vmatprep.subr.mxu0 %v1806
  %3213 = vmatpush1.msra.mxu0 %v1805
  %3214 = vmatprep.subr.mxu0 %v1809
  %3215 = vmatpush1.msra.mxu0 %v1808
  %3216 = vmatprep.subr.mxu0 %v1812
  %3217 = vmatpush1.msra.mxu0 %v1811
  %3218 = vmatprep.subr.mxu0 0.0
  %3219 = vmatpush1.msra.mxu0 0.0
  %3220 = vmatprep.subr.mxu0 0.0
  %3221 = vmatpush1.msra.mxu0 0.0
  %3222 = vmatprep.subr.mxu0 0.0
  %3223 = vmatpush1.msra.mxu0 0.0
  %3224 = vmatprep.subr.mxu0 0.0
  %3225 = vmatpush1.msra.mxu0 0.0
  %3226 = vmatprep.subr.mxu0 0.0
  %3227 = vmatpush1.msra.mxu0 0.0
  %3228 = vmatprep.subr.mxu0 0.0
  %3229 = vmatpush1.msra.mxu0 0.0
  %3230 = vmatprep.subr.mxu0 0.0
  %3231 = vmatpush1.msra.mxu0 0.0
  %3232 = vmatprep.subr.mxu0 0.0
  %3233 = vmatpush1.msra.mxu0 0.0
  %3234 = vmatprep.subr.mxu0 0.0
  %3235 = vmatpush1.msra.mxu0 0.0
  %3236 = vmatprep.subr.mxu0 0.0
  %3237 = vmatpush1.msra.mxu0 0.0
  %3238 = vmatprep.subr.mxu0 0.0
  %3239 = vmatpush1.msra.mxu0 0.0
  %3240 = vmatprep.subr.mxu0 0.0
  %3241 = vmatpush1.msra.mxu0 0.0
  %3242 = vmatprep.subr.mxu0 0.0
  %3243 = vmatpush1.msra.mxu0 0.0
  %3244 = vmatprep.subr.mxu0 0.0
  %3245 = vmatpush1.msra.mxu0 0.0
  %3246 = vmatprep.subr.mxu0 0.0
  %3247 = vmatpush1.msra.mxu0 0.0
  %3248 = vmatprep.subr.mxu0 0.0
  %3249 = vmatpush1.msra.mxu0 0.0
  %3250 = vmatprep.mubr.f32.mxu0 0.0
  %3251 = vmatmul.mubr.f32.gmra.mrb[0].mxu0 %v3184
  %v3252 = vpop.f32.mrb[0].mxu0
  %v3253 = vadd.f32 0.0, %v3252
  %v3254 = vpop.f32.mrb[0].mxu0
  %v3255 = vadd.f32 0.0, %v3254
  %3256 = vdwg.mxu0
  %3257 = vmatprep.subr.mxu0 0.0
  %3258 = vmatpush1.msra.mxu0 %v1768
  %3259 = vmatprep.subr.mxu0 0.0
  %3260 = vmatpush1.msra.mxu0 %v1771
  %3261 = vmatprep.subr.mxu0 0.0
  %3262 = vmatpush1.msra.mxu0 %v1774
  %3263 = vmatprep.subr.mxu0 0.0
  %3264 = vmatpush1.msra.mxu0 %v1777
  %3265 = vmatprep.subr.mxu0 0.0
  %3266 = vmatpush1.msra.mxu0 %v1780
  %3267 = vmatprep.subr.mxu0 0.0
  %3268 = vmatpush1.msra.mxu0 %v1783
  %3269 = vmatprep.subr.mxu0 0.0
  %3270 = vmatpush1.msra.mxu0 %v1786
  %3271 = vmatprep.subr.mxu0 0.0
  %3272 = vmatpush1.msra.mxu0 %v1789
  %3273 = vmatprep.subr.mxu0 0.0
  %3274 = vmatpush1.msra.mxu0 %v1792
  %3275 = vmatprep.subr.mxu0 0.0
  %3276 = vmatpush1.msra.mxu0 %v1795
  %3277 = vmatprep.subr.mxu0 0.0
  %3278 = vmatpush1.msra.mxu0 %v1798
  %3279 = vmatprep.subr.mxu0 0.0
  %3280 = vmatpush1.msra.mxu0 %v1801
  %3281 = vmatprep.subr.mxu0 0.0
  %3282 = vmatpush1.msra.mxu0 %v1804
  %3283 = vmatprep.subr.mxu0 0.0
  %3284 = vmatpush1.msra.mxu0 %v1807
  %3285 = vmatprep.subr.mxu0 0.0
  %3286 = vmatpush1.msra.mxu0 %v1810
  %3287 = vmatprep.subr.mxu0 0.0
  %3288 = vmatpush1.msra.mxu0 %v1813
  %3289 = vmatprep.subr.mxu0 0.0
  %3290 = vmatpush1.msra.mxu0 0.0
  %3291 = vmatprep.subr.mxu0 0.0
  %3292 = vmatpush1.msra.mxu0 0.0
  %3293 = vmatprep.subr.mxu0 0.0
  %3294 = vmatpush1.msra.mxu0 0.0
  %3295 = vmatprep.subr.mxu0 0.0
  %3296 = vmatpush1.msra.mxu0 0.0
  %3297 = vmatprep.subr.mxu0 0.0
  %3298 = vmatpush1.msra.mxu0 0.0
  %3299 = vmatprep.subr.mxu0 0.0
  %3300 = vmatpush1.msra.mxu0 0.0
  %3301 = vmatprep.subr.mxu0 0.0
  %3302 = vmatpush1.msra.mxu0 0.0
  %3303 = vmatprep.subr.mxu0 0.0
  %3304 = vmatpush1.msra.mxu0 0.0
  %3305 = vmatprep.subr.mxu0 0.0
  %3306 = vmatpush1.msra.mxu0 0.0
  %3307 = vmatprep.subr.mxu0 0.0
  %3308 = vmatpush1.msra.mxu0 0.0
  %3309 = vmatprep.subr.mxu0 0.0
  %3310 = vmatpush1.msra.mxu0 0.0
  %3311 = vmatprep.subr.mxu0 0.0
  %3312 = vmatpush1.msra.mxu0 0.0
  %3313 = vmatprep.subr.mxu0 0.0
  %3314 = vmatpush1.msra.mxu0 0.0
  %3315 = vmatprep.subr.mxu0 0.0
  %3316 = vmatpush1.msra.mxu0 0.0
  %3317 = vmatprep.subr.mxu0 0.0
  %3318 = vmatpush1.msra.mxu0 0.0
  %3319 = vmatprep.subr.mxu0 0.0
  %3320 = vmatpush1.msra.mxu0 0.0
  %3321 = vmatprep.mubr.f32.mxu0 0.0
  %3322 = vmatmul.mubr.f32.gmra.mrb[0].mxu0 %v3184
  %v3323 = vpop.f32.mrb[0].mxu0
  %v3324 = vadd.f32 0.0, %v3323
  %v3325 = vpop.f32.mrb[0].mxu0
  %3326 = vdwg.mxu0
  %v3328 = vrot.slane %v3253, 2
  %v3330 = vadd.f32 %v1894, %v3328
  %v3331 = vxor.u32 %v3330, 2147483648
  %v3332 = vmul.f32 %v3331, 1.442695
  %v3333 = vpow.pop %v3332
  %v3334 = vadd.f32 %v3333, 1.0
  %v3335 = vrcp.pop %v3334
  %v3336 = vmul.f32 1.0, %v3335
  %v3338 = vrot.slane %v3255, 2
  %v3340 = vadd.f32 %v1896, %v3338
  %v3341 = vxor.u32 %v3340, 2147483648
  %v3342 = vmul.f32 %v3341, 1.442695
  %v3343 = vpow.pop %v3342
  %v3344 = vadd.f32 %v3343, 1.0
  %v3345 = vrcp.pop %v3344
  %v3346 = vmul.f32 1.0, %v3345
  %v3348 = vrot.slane %v3324, 2
  %v3350 = vmul.f32 %v3336, %v3348
  %v3351 = vadd.f32 %v1970, %v3350
  %v3352 = vtanh.pop %v3351
  %v3353 = vsub.f32 1.0, %v3346
  %v3354 = vmul.f32 %v3353, %v3352
  %v3355 = vrot.slane %v3181, 6
  %v3357 = vmul.f32 %v3346, %v3355
  %v3358 = vadd.f32 %v3354, %v3357
  %3359 = vst [vmem:[#allocation2 + $0x8] sm:$0xc0] %v3358
  %v3360 = vld [vmem:[#allocation2] sm:$0xff]
  %v3361 = vld [vmem:[#allocation2 + $0x8] sm:$0xff]
  %3362 = vadd.xlane.f32.xlu0 %v3360
  %v3363 = vpop.xlane.xlu0 %3362
  %3364 = vadd.xlane.f32.xlu0 %v3361
  %v3365 = vpop.xlane.xlu0 %3364
  %v3366 = vmul.f32 %v3363, 0.01
  %v3367 = vmul.f32 %v3365, 0.01
  %v3368 = vsub.f32 %v3360, %v3366
  %v3369 = vsub.f32 %v3361, %v3367
  %v3370 = vmul.f32 %v3368, %v36
  %v3371 = vmul.f32 %v3369, %v36
  %v3372 = vmul.f32 %v3370, %v3370
  %v3373 = vmul.f32 %v3371, %v3371
  %3374 = vadd.xlane.f32.xlu0 %v3372
  %v3375 = vpop.xlane.xlu0 %3374
  %3376 = vadd.xlane.f32.xlu0 %v3373
  %v3377 = vpop.xlane.xlu0 %3376
  %v3378 = vmul.f32 %v3375, 0.01
  %v3379 = vmul.f32 %v3377, 0.01
  %v3380 = vadd.f32 %v3378, 1e-05
  %v3381 = vadd.f32 %v3379, 1e-05
  %v3382 = vrsqrt.pop %v3380
  %v3383 = vrsqrt.pop %v3381
  %v3384 = vmul.f32 %v3370, %v3382
  %v3385 = vmul.f32 %v3371, %v3383
  %v3386 = vld [vmem:[%s7] sm:$0xff]
  %v3387 = vld [vmem:[%s7 + $0x8] sm:$0xff]
  %v3388 = vld [vmem:[%s7 + $0x10] sm:$0xff]
  %v3389 = vld [vmem:[%s7 + $0x18] sm:$0xff]
  %v3390 = vld [vmem:[%s7 + $0x20] sm:$0xff]
  %v3391 = vld [vmem:[%s7 + $0x28] sm:$0xff]
  %v3392 = vld [vmem:[%s7 + $0x30] sm:$0xff]
  %v3393 = vld [vmem:[%s7 + $0x38] sm:$0xff]
  %v3394 = vld [vmem:[%s7 + $0x40] sm:$0xff]
  %v3395 = vld [vmem:[%s7 + $0x48] sm:$0xff]
  %v3396 = vld [vmem:[%s7 + $0x50] sm:$0xff]
  %v3397 = vld [vmem:[%s7 + $0x58] sm:$0xff]
  %v3398 = vld [vmem:[%s7 + $0x60] sm:$0xff]
  %v3399 = vld [vmem:[%s7 + $0x68] sm:$0xff]
  %v3400 = vld [vmem:[%s7 + $0x70] sm:$0xff]
  %v3401 = vld [vmem:[%s7 + $0x78] sm:$0xff]
  %v3402 = vld [vmem:[%s8] sm:$0x1]
  %v3404 = vlaneseq
  %v3405 = vshrl.u32 %v3404, 7
  %v3406 = vsub.s32 0, %v3405
  %v3407 = vrot.slane %v3402, %v3406
  %3409 = vmatprep.subr.mxu0 0.0
  %3410 = vmatpush1.msra.mxu0 %v3386
  %3411 = vmatprep.subr.mxu0 0.0
  %3412 = vmatpush1.msra.mxu0 %v3387
  %3413 = vmatprep.subr.mxu0 0.0
  %3414 = vmatpush1.msra.mxu0 %v3388
  %3415 = vmatprep.subr.mxu0 0.0
  %3416 = vmatpush1.msra.mxu0 %v3389
  %3417 = vmatprep.subr.mxu0 0.0
  %3418 = vmatpush1.msra.mxu0 %v3390
  %3419 = vmatprep.subr.mxu0 0.0
  %3420 = vmatpush1.msra.mxu0 %v3391
  %3421 = vmatprep.subr.mxu0 0.0
  %3422 = vmatpush1.msra.mxu0 %v3392
  %3423 = vmatprep.subr.mxu0 0.0
  %3424 = vmatpush1.msra.mxu0 %v3393
  %3425 = vmatprep.subr.mxu0 0.0
  %3426 = vmatpush1.msra.mxu0 %v3394
  %3427 = vmatprep.subr.mxu0 0.0
  %3428 = vmatpush1.msra.mxu0 %v3395
  %3429 = vmatprep.subr.mxu0 0.0
  %3430 = vmatpush1.msra.mxu0 %v3396
  %3431 = vmatprep.subr.mxu0 0.0
  %3432 = vmatpush1.msra.mxu0 %v3397
  %3433 = vmatprep.subr.mxu0 0.0
  %3434 = vmatpush1.msra.mxu0 %v3398
  %3435 = vmatprep.subr.mxu0 0.0
  %3436 = vmatpush1.msra.mxu0 %v3399
  %3437 = vmatprep.subr.mxu0 0.0
  %3438 = vmatpush1.msra.mxu0 %v3400
  %3439 = vmatprep.subr.mxu0 0.0
  %3440 = vmatpush1.msra.mxu0 %v3401
  %3441 = vmatprep.subr.mxu0 0.0
  %3442 = vmatpush1.msra.mxu0 0.0
  %3443 = vmatprep.subr.mxu0 0.0
  %3444 = vmatpush1.msra.mxu0 0.0
  %3445 = vmatprep.subr.mxu0 0.0
  %3446 = vmatpush1.msra.mxu0 0.0
  %3447 = vmatprep.subr.mxu0 0.0
  %3448 = vmatpush1.msra.mxu0 0.0
  %3449 = vmatprep.subr.mxu0 0.0
  %3450 = vmatpush1.msra.mxu0 0.0
  %3451 = vmatprep.subr.mxu0 0.0
  %3452 = vmatpush1.msra.mxu0 0.0
  %3453 = vmatprep.subr.mxu0 0.0
  %3454 = vmatpush1.msra.mxu0 0.0
  %3455 = vmatprep.subr.mxu0 0.0
  %3456 = vmatpush1.msra.mxu0 0.0
  %3457 = vmatprep.subr.mxu0 0.0
  %3458 = vmatpush1.msra.mxu0 0.0
  %3459 = vmatprep.subr.mxu0 0.0
  %3460 = vmatpush1.msra.mxu0 0.0
  %3461 = vmatprep.subr.mxu0 0.0
  %3462 = vmatpush1.msra.mxu0 0.0
  %3463 = vmatprep.subr.mxu0 0.0
  %3464 = vmatpush1.msra.mxu0 0.0
  %3465 = vmatprep.subr.mxu0 0.0
  %3466 = vmatpush1.msra.mxu0 0.0
  %3467 = vmatprep.subr.mxu0 0.0
  %3468 = vmatpush1.msra.mxu0 0.0
  %3469 = vmatprep.subr.mxu0 0.0
  %3470 = vmatpush1.msra.mxu0 0.0
  %3471 = vmatprep.subr.mxu0 0.0
  %3472 = vmatpush1.msra.mxu0 0.0
  %3473 = vmatprep.mubr.f32.mxu0 0.0
  %3474 = vmatmul.mubr.f32.gmra.mrb[0].mxu0 %v3384
  %v3475 = vpop.f32.mrb[0].mxu0
  %v3476 = vadd.f32 %v3407, %v3475
  %v3477 = vpop.f32.mrb[0].mxu0
  %3478 = vmatprep.mubr.f32.mxu0 0.0
  %3479 = vmatmul.mubr.f32.gmra.mrb[0].mxu0 %v3385
  %v3480 = vpop.f32.mrb[0].mxu0
  %v3481 = vadd.f32 %v3407, %v3480
  %v3482 = vpop.f32.mrb[0].mxu0
  %3483 = vdwg.mxu0
  %3484 = vst [vmem:[%s9] sm:$0xff] %v3476
  %3485 = vst [vmem:[%s9 + $0x8] sm:$0xff] %v3481
  // Predicated region
  $region38: #{predictor_forward.1} parent=0 // pred_check
    _
  $region39: #{predictor_forward.1} parent=0 // pred_check_branch
    %3487 = sbr.rel (0) target = $region41
  $region40: #{predictor_forward.1} parent=0 // pred_region
    _
  $region41: #{predictor_forward.1} parent=0 // pred_fallthru
    _
  // Predicated region
  $region42: #{predictor_forward.1} parent=0 // pred_check
    _
  $region43: #{predictor_forward.1} parent=0 // pred_check_branch
    %3489 = sbr.rel (0) target = $region45
  $region44: #{predictor_forward.1} parent=0 // pred_region
    _
  $region45: #{predictor_forward.1} parent=0 // pred_fallthru
    _

</llo_original>
